<compile_context>
chip_gen: v6e
topology: v6e:2x2x1
jax: 0.10.0
libtpu: 0.0.40
codegen_flags: <defaults>
</compile_context>

<pallas_src>
import numpy as np
import jax
import jax.numpy as jnp
from jax import lax
from jax.experimental import pallas as pl
from jax.experimental.pallas import tpu as pltpu

_VMEM_LIMIT = 32 * 1024 * 1024  # explicit scoped-VMEM budget (safe on v5e/v6e/v7x)

# Tap-weight offsets inside the stacked (37,128,128) weight tensor.
_OFF_B1C1, _OFF_B1C2, _OFF_DS, _OFF_B2C1, _OFF_B2C2 = 0, 9, 18, 19, 28
# Bias rows inside the stacked (8,128) bias tensor.
_BR_STEM, _BR_B1C1, _BR_B1C2, _BR_DS, _BR_B2C1, _BR_B2C2, _BR_FC = 0, 1, 2, 3, 4, 5, 6


# --------------------------- fused Pallas kernel ------------------------------

def _fused_resnet_kernel(patch_ref, w0_ref, wt_ref, b_ref,
                         sp_ref, s1_ref, sd_ref, s2a_ref, s2b_ref, fcw_ref,
                         o_ref):
    """Whole forward pass for one image, entirely VMEM-resident.

    patch_ref : (1, 64, 256) bf16   stem im2col patches (K padded 147->256)
    w0_ref    : (256, 128)   bf16   stem weights, BN scale folded in
    wt_ref    : (37, 128, 128) bf16 stacked 3x3/1x1 tap weights (Cin/Cout pad 128)
    b_ref     : (8, 128)     f32    stacked folded-BN biases (+ fc bias row)
    sp/s1/sd/s2a/s2b_ref     bf16   0/1 shift-selection matrices (exact gathers)
    fcw_ref   : (128, 128)   f32    FC weights (rows/cols zero padded)
    o_ref     : (1, 8, 128)  f32    row 0 holds the logits (cols 0..1 valid)
    """
    f32, bf16 = jnp.float32, jnp.bfloat16

    def shift(s_ref, act):
        # 0/1 row-selection matmul: stacks the tap-shifted (zero padded) copies
        # of `act` into one (T*rows, 128) operand.  Exact for 0/1 weights.
        return jnp.dot(s_ref[...], act, preferred_element_type=f32).astype(bf16)

    def conv3x3(x_stack, w_off, rows, bias_row):
        # 9 unrolled tap matmuls, each with the full K=128 contraction depth.
        acc = jnp.zeros((rows, 128), f32)
        for t in range(9):
            xs = x_stack[t * rows:(t + 1) * rows, :]
            acc = acc + jnp.dot(xs, wt_ref[w_off + t],
                                preferred_element_type=f32)
        return acc + b_ref[bias_row:bias_row + 1, :]

    # --- stem: 7x7/2 conv (+folded BN, ReLU) as a single K=256 matmul ---------
    a0 = jnp.dot(patch_ref[0], w0_ref[...], preferred_element_type=f32)
    a0 = jnp.maximum(a0 + b_ref[_BR_STEM:_BR_STEM + 1, :], 0.0).astype(bf16)  # (64,128)

    # --- max-pool 3x3/2 (post-ReLU input >= 0, so zero padding == -inf padding)
    xs = jnp.dot(sp_ref[...], a0, preferred_element_type=f32)                  # (144,128)
    m = xs[0:16, :]
    for t in range(1, 9):
        m = jnp.maximum(m, xs[t * 16:(t + 1) * 16, :])
    a1 = m.astype(bf16)                                                        # (16,128)

    # --- basic block 1 (identity shortcut) ------------------------------------
    y = conv3x3(shift(s1_ref, a1), _OFF_B1C1, 16, _BR_B1C1)
    y = jnp.maximum(y, 0.0).astype(bf16)
    y = conv3x3(shift(s1_ref, y), _OFF_B1C2, 16, _BR_B1C2) + a1.astype(f32)
    a2 = jnp.maximum(y, 0.0).astype(bf16)                                      # (16,128)

    # --- basic block 2 (stride 2, 1x1 projection shortcut) --------------------
    xd = shift(sd_ref, a2)                                                     # (8,128)
    idn = jnp.dot(xd, wt_ref[_OFF_DS], preferred_element_type=f32) \
        + b_ref[_BR_DS:_BR_DS + 1, :]                                          # (8,128) f32
    y = conv3x3(shift(s2a_ref, a2), _OFF_B2C1, 8, _BR_B2C1)
    y = jnp.maximum(y, 0.0).astype(bf16)                                       # (8,128)
    y = conv3x3(shift(s2b_ref, y), _OFF_B2C2, 8, _BR_B2C2) + idn
    a3 = jnp.maximum(y, 0.0)                                                   # (8,128) f32

    # --- fused global average pool (valid rows 0..3 = 2x2) + FC, all f32 ------
    pooled = jnp.sum(a3[0:4, :], axis=0, keepdims=True) * 0.25                 # (1,128)
    logits = jnp.dot(pooled, fcw_ref[...], preferred_element_type=f32) \
        + b_ref[_BR_FC:_BR_FC + 1, :]
    o_ref[0, :, :] = jnp.broadcast_to(logits, (8, 128))


# --------------------------- one-time parameter prep --------------------------

def _fold_bn(w_oihw, bn, eps=1e-5):
    gamma, beta, mean, var = bn
    scale = gamma / jnp.sqrt(var + eps)
    bias = beta - mean * scale
    w_hwio = jnp.transpose(w_oihw, (2, 3, 1, 0)) * scale[None, None, None, :]
    return np.asarray(w_hwio, np.float32), np.asarray(bias, np.float32)


def _taps_128(w_hwio):
    """(kh,kw,Cin,Cout) -> (kh*kw,128,128) zero-padded tap weights."""
    kh, kw, cin, cout = w_hwio.shape
    out = np.zeros((kh * kw, 128, 128), np.float32)
    out[:, :cin, :cout] = w_hwio.reshape(kh * kw, cin, cout)
    return out


def _shift_select(hi, wi, kh, kw, stride, pad, r_out_pad, r_in_pad):
    """0/1 matrix producing the stacked tap-shifted copies of a compact map."""
    ho = (hi + 2 * pad - kh) // stride + 1
    wo = (wi + 2 * pad - kw) // stride + 1
    s = np.zeros((kh * kw * r_out_pad, r_in_pad), np.float32)
    for t in range(kh * kw):
        ki, kj = t // kw, t % kw
        for oy in range(ho):
            for ox in range(wo):
                iy, ix = oy * stride + ki - pad, ox * stride + kj - pad
                if 0 <= iy < hi and 0 <= ix < wi:
                    s[t * r_out_pad + oy * wo + ox, iy * wi + ix] = 1.0
    return s


def prepare_params(params, eps=1e-5):
    """BN folding, layout/dtype conversion and shift matrices — done ONCE."""
    C1, C2, NCLS = 16, 32, 2

    w0_hwio, b0 = _fold_bn(params['conv1'], params['bn1'], eps)     # (7,7,3,16)
    w0 = np.zeros((256, 128), np.float32)
    w0[:147, :C1] = w0_hwio.reshape(147, C1)                        # (i,j,c)-major

    w11, b11 = _fold_bn(params['b1_conv1'], params['b1_bn1'], eps)
    w12, b12 = _fold_bn(params['b1_conv2'], params['b1_bn2'], eps)
    wd, bd = _fold_bn(params['b2_convd'], params['b2_bnd'], eps)
    w21, b21 = _fold_bn(params['b2_conv1'], params['b2_bn1'], eps)
    w22, b22 = _fold_bn(params['b2_conv2'], params['b2_bn2'], eps)
    w_taps = np.concatenate(
        [_taps_128(w11), _taps_128(w12), _taps_128(wd),
         _taps_128(w21), _taps_128(w22)], axis=0)                    # (37,128,128)

    biases = np.zeros((8, 128), np.float32)
    for row, b in zip((_BR_STEM, _BR_B1C1, _BR_B1C2, _BR_DS, _BR_B2C1, _BR_B2C2),
                      (b0, b11, b12, bd, b21, b22)):
        biases[row, :b.shape[0]] = b
    biases[_BR_FC, :NCLS] = np.asarray(params['fc_b'], np.float32)

    fcw = np.zeros((128, 128), np.float32)
    fcw[:C2, :NCLS] = np.asarray(params['fc_w'], np.float32)

    return {
        'w0': jnp.asarray(w0, jnp.bfloat16),
        'w_taps': jnp.asarray(w_taps, jnp.bfloat16),
        'biases': jnp.asarray(biases, jnp.float32),
        'fc_w': jnp.asarray(fcw, jnp.float32),
        # maxpool 3x3/2 on 8x8 ; block1 3x3/1 on 4x4 ; 1x1/2 on 4x4 ;
        # block2 3x3/2 on 4x4 ; block2 3x3/1 on 2x2
        's_pool': jnp.asarray(_shift_select(8, 8, 3, 3, 2, 1, 16, 64), jnp.bfloat16),
        's_b1':   jnp.asarray(_shift_select(4, 4, 3, 3, 1, 1, 16, 16), jnp.bfloat16),
        's_ds':   jnp.asarray(_shift_select(4, 4, 1, 1, 2, 0, 8, 16), jnp.bfloat16),
        's_b2a':  jnp.asarray(_shift_select(4, 4, 3, 3, 2, 1, 8, 16), jnp.bfloat16),
        's_b2b':  jnp.asarray(_shift_select(2, 2, 3, 3, 1, 1, 8, 8), jnp.bfloat16),
    }


# --------------------------- forward (single pallas_call) ---------------------

def classifier_forward(x_nchw, prep):
    N = x_nchw.shape[0]
    # NCHW -> NHWC bf16, then im2col of the 7x7/2 stem only (tiny: ~19 KiB/img).
    x = jnp.transpose(x_nchw, (0, 2, 3, 1)).astype(jnp.bfloat16)
    xp = jnp.pad(x, ((0, 0), (3, 3), (3, 3), (0, 0)))
    cols = [xp[:, i:i + 15:2, j:j + 15:2, :] for i in range(7) for j in range(7)]
    patches = jnp.concatenate(cols, axis=-1).reshape(N, 64, 147)
    patches = jnp.pad(patches, ((0, 0), (0, 0), (0, 256 - 147)))     # lane-dense K

    shared2 = lambda n: (0, 0)
    shared3 = lambda n: (0, 0, 0)
    out = pl.pallas_call(
        _fused_resnet_kernel,
        out_shape=jax.ShapeDtypeStruct((N, 8, 128), jnp.float32),
        grid=(N,),
        in_specs=[
            pl.BlockSpec((1, 64, 256), lambda n: (n, 0, 0)),   # patches (per image)
            pl.BlockSpec((256, 128), shared2),                 # stem weights
            pl.BlockSpec((37, 128, 128), shared3),             # stacked tap weights
            pl.BlockSpec((8, 128), shared2),                   # stacked biases
            pl.BlockSpec((144, 64), shared2),                  # s_pool
            pl.BlockSpec((144, 16), shared2),                  # s_b1
            pl.BlockSpec((8, 16), shared2),                    # s_ds
            pl.BlockSpec((72, 16), shared2),                   # s_b2a
            pl.BlockSpec((72, 8), shared2),                    # s_b2b
            pl.BlockSpec((128, 128), shared2),                 # fc weights (f32)
        ],
        out_specs=pl.BlockSpec((1, 8, 128), lambda n: (n, 0, 0)),
        compiler_params=pltpu.CompilerParams(
            dimension_semantics=("parallel",),
            vmem_limit_bytes=_VMEM_LIMIT),
    )(patches, prep['w0'], prep['w_taps'], prep['biases'],
      prep['s_pool'], prep['s_b1'], prep['s_ds'], prep['s_b2a'], prep['s_b2b'],
      prep['fc_w'])
    return out[:, 0, :2]                                        # (N, 2) f32 logits


# --------------------------- parameters / reference ---------------------------

def init_params(key):
    ks = iter(jax.random.split(key, 32))

    def conv_w(cout, cin, kh, kw):
        fan_in = cin * kh * kw
        return (jax.random.normal(next(ks), (cout, cin, kh, kw), jnp.float32)
                * (2.0 / fan_in) ** 0.5)

    def bn_p(c):
        gamma = 1.0 + 0.1 * jax.random.normal(next(ks), (c,), jnp.float32)
        beta = 0.1 * jax.random.normal(next(ks), (c,), jnp.float32)
        mean = 0.1 * jax.random.normal(next(ks), (c,), jnp.float32)
        var = jnp.abs(1.0 + 0.1 * jax.random.normal(next(ks), (c,), jnp.float32))
        return (gamma, beta, mean, var)

    C1, C2, NUM_CLASSES = 16, 32, 2
    return {
        'conv1': conv_w(C1, 3, 7, 7), 'bn1': bn_p(C1),
        'b1_conv1': conv_w(C1, C1, 3, 3), 'b1_bn1': bn_p(C1),
        'b1_conv2': conv_w(C1, C1, 3, 3), 'b1_bn2': bn_p(C1),
        'b2_conv1': conv_w(C2, C1, 3, 3), 'b2_bn1': bn_p(C2),
        'b2_conv2': conv_w(C2, C2, 3, 3), 'b2_bn2': bn_p(C2),
        'b2_convd': conv_w(C2, C1, 1, 1), 'b2_bnd': bn_p(C2),
        'fc_w': 0.05 * jax.random.normal(next(ks), (C2, NUM_CLASSES), jnp.float32),
        'fc_b': 0.01 * jax.random.normal(next(ks), (NUM_CLASSES,), jnp.float32),
    }


def _ref_conv(x, w_oihw, bn, stride, pad, relu=True, residual=None, eps=1e-5):
    gamma, beta, mean, var = bn
    y = lax.conv_general_dilated(
        x, jnp.transpose(w_oihw, (2, 3, 1, 0)),
        window_strides=(stride, stride), padding=((pad, pad), (pad, pad)),
        dimension_numbers=('NHWC', 'HWIO', 'NHWC'))
    y = (y - mean) / jnp.sqrt(var + eps) * gamma + beta
    if residual is not None:
        y = y + residual
    if relu:
        y = jnp.maximum(y, 0.0)
    return y


def classifier_forward_ref(x_nchw, params):
    x = jnp.transpose(x_nchw, (0, 2, 3, 1)).astype(jnp.float32)
    x = _ref_conv(x, params['conv1'], params['bn1'], 2, 3)
    x = lax.reduce_window(x, -jnp.inf, lax.max, (1, 3, 3, 1), (1, 2, 2, 1),
                          ((0, 0), (1, 1), (1, 1), (0, 0)))
    idn = x
    y = _ref_conv(x, params['b1_conv1'], params['b1_bn1'], 1, 1)
    x = _ref_conv(y, params['b1_conv2'], params['b1_bn2'], 1, 1, residual=idn)
    idn = _ref_conv(x, params['b2_convd'], params['b2_bnd'], 2, 0, relu=False)
    y = _ref_conv(x, params['b2_conv1'], params['b2_bn1'], 2, 1)
    x = _ref_conv(y, params['b2_conv2'], params['b2_bn2'], 1, 1, residual=idn)
    pooled = jnp.mean(x, axis=(1, 2))
    return pooled @ params['fc_w'] + params['fc_b']


# ------------------------------- main ------------------------------------------

if __name__ == "__main__":
    key = jax.random.PRNGKey(0)
    k_in, k_par = jax.random.split(key)
    x = jax.random.normal(k_in, (2, 3, 16, 16), jnp.float32)   # NCHW input
    params = init_params(k_par)
    prep = prepare_params(params)                              # one-time prep

    fwd = jax.jit(classifier_forward)
    logits = fwd(x, prep)
    jax.block_until_ready(logits)
    assert logits.shape == (2, 2) and logits.dtype == jnp.float32

    # Correctness vs. a pure-JAX f32 reference of the same model; tolerance
    # accounts for the bf16 MXU operands / bf16 inter-layer activations.
    ref = jax.jit(classifier_forward_ref)(x, params)
    jax.block_until_ready(ref)
    assert np.allclose(np.asarray(logits), np.asarray(ref), rtol=1e-1, atol=5e-2), (
        np.asarray(logits), np.asarray(ref))

    print("KERNEL_OK")
</pallas_src>

<mosaic_0001>
module attributes {stable_mosaic.version = 11 : i64} {
  func.func @_fused_resnet_kernel(%arg0: i32, %arg1: memref<1x64x256xbf16, #tpu.memory_space<vmem>>, %arg2: memref<256x128xbf16, #tpu.memory_space<vmem>>, %arg3: memref<37x128x128xbf16, #tpu.memory_space<vmem>>, %arg4: memref<8x128xf32, #tpu.memory_space<vmem>>, %arg5: memref<144x64xbf16, #tpu.memory_space<vmem>>, %arg6: memref<144x16xbf16, #tpu.memory_space<vmem>>, %arg7: memref<8x16xbf16, #tpu.memory_space<vmem>>, %arg8: memref<72x16xbf16, #tpu.memory_space<vmem>>, %arg9: memref<72x8xbf16, #tpu.memory_space<vmem>>, %arg10: memref<128x128xf32, #tpu.memory_space<vmem>>, %arg11: memref<1x8x128xf32, #tpu.memory_space<vmem>>) attributes {dimension_semantics = [#tpu.dimension_semantics<parallel>], iteration_bounds = array<i64: 2>, scalar_prefetch = 0 : i64, scratch_operands = 0 : i64, tpu.core_type = #tpu.core_type<tc>, window_params = [{transform_indices = @transform_0, window_bounds = array<i64: 1, 64, 256>}, {pipeline_mode = #tpu.pipeline_mode<synchronous>, transform_indices = @transform_1, window_bounds = array<i64: 256, 128>}, {pipeline_mode = #tpu.pipeline_mode<synchronous>, transform_indices = @transform_2, window_bounds = array<i64: 37, 128, 128>}, {pipeline_mode = #tpu.pipeline_mode<synchronous>, transform_indices = @transform_3, window_bounds = array<i64: 8, 128>}, {pipeline_mode = #tpu.pipeline_mode<synchronous>, transform_indices = @transform_4, window_bounds = array<i64: 144, 64>}, {pipeline_mode = #tpu.pipeline_mode<synchronous>, transform_indices = @transform_5, window_bounds = array<i64: 144, 16>}, {pipeline_mode = #tpu.pipeline_mode<synchronous>, transform_indices = @transform_6, window_bounds = array<i64: 8, 16>}, {pipeline_mode = #tpu.pipeline_mode<synchronous>, transform_indices = @transform_7, window_bounds = array<i64: 72, 16>}, {pipeline_mode = #tpu.pipeline_mode<synchronous>, transform_indices = @transform_8, window_bounds = array<i64: 72, 8>}, {pipeline_mode = #tpu.pipeline_mode<synchronous>, transform_indices = @transform_9, window_bounds = array<i64: 128, 128>}, {transform_indices = @transform_10, window_bounds = array<i64: 1, 8, 128>}]} {
    %c0 = arith.constant 0 : index
    %c0_0 = arith.constant 0 : index
    %c0_1 = arith.constant 0 : index
    %0 = vector.load %arg1[%c0, %c0_0, %c0_1] : memref<1x64x256xbf16, #tpu.memory_space<vmem>>, vector<1x64x256xbf16>
    %1 = vector.shape_cast %0 : vector<1x64x256xbf16> to vector<64x256xbf16>
    %c0_2 = arith.constant 0 : index
    %c0_3 = arith.constant 0 : index
    %2 = vector.load %arg2[%c0_2, %c0_3] : memref<256x128xbf16, #tpu.memory_space<vmem>>, vector<256x128xbf16>
    %cst = arith.constant dense<0.000000e+00> : vector<64x128xf32>
    %3 = tpu.matmul %1, %2, %cst {dimension_numbers = #tpu.dot_dimension_numbers<[1], [0], [0], [1], [0, 0, 1, 1], [], []>} : vector<64x256xbf16>, vector<256x128xbf16>, vector<64x128xf32> -> vector<64x128xf32>
    %c0_4 = arith.constant 0 : index
    %c0_5 = arith.constant 0 : index
    %4 = vector.load %arg4[%c0_4, %c0_5] : memref<8x128xf32, #tpu.memory_space<vmem>>, vector<1x128xf32>
    %5 = vector.broadcast %4 : vector<1x128xf32> to vector<64x128xf32>
    %6 = arith.addf %3, %5 : vector<64x128xf32>
    %cst_6 = arith.constant 0.000000e+00 : f32
    %7 = vector.broadcast %cst_6 : f32 to vector<64x128xf32>
    %8 = arith.maximumf %6, %7 : vector<64x128xf32>
    %9 = arith.truncf %8 : vector<64x128xf32> to vector<64x128xbf16>
    %c0_7 = arith.constant 0 : index
    %c0_8 = arith.constant 0 : index
    %10 = vector.load %arg5[%c0_7, %c0_8] : memref<144x64xbf16, #tpu.memory_space<vmem>>, vector<144x64xbf16>
    %cst_9 = arith.constant dense<0.000000e+00> : vector<144x128xf32>
    %11 = tpu.matmul %10, %9, %cst_9 {dimension_numbers = #tpu.dot_dimension_numbers<[1], [0], [0], [1], [0, 0, 1, 1], [], []>} : vector<144x64xbf16>, vector<64x128xbf16>, vector<144x128xf32> -> vector<144x128xf32>
    %12 = vector.extract_strided_slice %11 {offsets = [0, 0], sizes = [16, 128], strides = [1, 1]} : vector<144x128xf32> to vector<16x128xf32>
    %13 = vector.extract_strided_slice %11 {offsets = [16, 0], sizes = [16, 128], strides = [1, 1]} : vector<144x128xf32> to vector<16x128xf32>
    %14 = arith.maximumf %12, %13 : vector<16x128xf32>
    %15 = vector.extract_strided_slice %11 {offsets = [32, 0], sizes = [16, 128], strides = [1, 1]} : vector<144x128xf32> to vector<16x128xf32>
    %16 = arith.maximumf %14, %15 : vector<16x128xf32>
    %17 = vector.extract_strided_slice %11 {offsets = [48, 0], sizes = [16, 128], strides = [1, 1]} : vector<144x128xf32> to vector<16x128xf32>
    %18 = arith.maximumf %16, %17 : vector<16x128xf32>
    %19 = vector.extract_strided_slice %11 {offsets = [64, 0], sizes = [16, 128], strides = [1, 1]} : vector<144x128xf32> to vector<16x128xf32>
    %20 = arith.maximumf %18, %19 : vector<16x128xf32>
    %21 = vector.extract_strided_slice %11 {offsets = [80, 0], sizes = [16, 128], strides = [1, 1]} : vector<144x128xf32> to vector<16x128xf32>
    %22 = arith.maximumf %20, %21 : vector<16x128xf32>
    %23 = vector.extract_strided_slice %11 {offsets = [96, 0], sizes = [16, 128], strides = [1, 1]} : vector<144x128xf32> to vector<16x128xf32>
    %24 = arith.maximumf %22, %23 : vector<16x128xf32>
    %25 = vector.extract_strided_slice %11 {offsets = [112, 0], sizes = [16, 128], strides = [1, 1]} : vector<144x128xf32> to vector<16x128xf32>
    %26 = arith.maximumf %24, %25 : vector<16x128xf32>
    %27 = vector.extract_strided_slice %11 {offsets = [128, 0], sizes = [16, 128], strides = [1, 1]} : vector<144x128xf32> to vector<16x128xf32>
    %28 = arith.maximumf %26, %27 : vector<16x128xf32>
    %29 = arith.truncf %28 : vector<16x128xf32> to vector<16x128xbf16>
    %c0_10 = arith.constant 0 : index
    %c0_11 = arith.constant 0 : index
    %30 = vector.load %arg6[%c0_10, %c0_11] : memref<144x16xbf16, #tpu.memory_space<vmem>>, vector<144x16xbf16>
    %cst_12 = arith.constant dense<0.000000e+00> : vector<144x128xf32>
    %31 = tpu.matmul %30, %29, %cst_12 {dimension_numbers = #tpu.dot_dimension_numbers<[1], [0], [0], [1], [0, 0, 1, 1], [], []>} : vector<144x16xbf16>, vector<16x128xbf16>, vector<144x128xf32> -> vector<144x128xf32>
    %32 = arith.truncf %31 : vector<144x128xf32> to vector<144x128xbf16>
    %cst_13 = arith.constant 0.000000e+00 : f32
    %33 = vector.broadcast %cst_13 : f32 to vector<16x128xf32>
    %34 = vector.extract_strided_slice %32 {offsets = [0, 0], sizes = [16, 128], strides = [1, 1]} : vector<144x128xbf16> to vector<16x128xbf16>
    %c0_14 = arith.constant 0 : index
    %c0_15 = arith.constant 0 : index
    %c0_16 = arith.constant 0 : index
    %35 = vector.load %arg3[%c0_14, %c0_15, %c0_16] : memref<37x128x128xbf16, #tpu.memory_space<vmem>>, vector<1x128x128xbf16>
    %36 = vector.shape_cast %35 : vector<1x128x128xbf16> to vector<128x128xbf16>
    %cst_17 = arith.constant dense<0.000000e+00> : vector<16x128xf32>
    %37 = tpu.matmul %34, %36, %cst_17 {dimension_numbers = #tpu.dot_dimension_numbers<[1], [0], [0], [1], [0, 0, 1, 1], [], []>} : vector<16x128xbf16>, vector<128x128xbf16>, vector<16x128xf32> -> vector<16x128xf32>
    %38 = arith.addf %33, %37 : vector<16x128xf32>
    %39 = vector.extract_strided_slice %32 {offsets = [16, 0], sizes = [16, 128], strides = [1, 1]} : vector<144x128xbf16> to vector<16x128xbf16>
    %c1 = arith.constant 1 : index
    %c0_18 = arith.constant 0 : index
    %c0_19 = arith.constant 0 : index
    %40 = vector.load %arg3[%c1, %c0_18, %c0_19] : memref<37x128x128xbf16, #tpu.memory_space<vmem>>, vector<1x128x128xbf16>
    %41 = vector.shape_cast %40 : vector<1x128x128xbf16> to vector<128x128xbf16>
    %cst_20 = arith.constant dense<0.000000e+00> : vector<16x128xf32>
    %42 = tpu.matmul %39, %41, %cst_20 {dimension_numbers = #tpu.dot_dimension_numbers<[1], [0], [0], [1], [0, 0, 1, 1], [], []>} : vector<16x128xbf16>, vector<128x128xbf16>, vector<16x128xf32> -> vector<16x128xf32>
    %43 = arith.addf %38, %42 : vector<16x128xf32>
    %44 = vector.extract_strided_slice %32 {offsets = [32, 0], sizes = [16, 128], strides = [1, 1]} : vector<144x128xbf16> to vector<16x128xbf16>
    %c2 = arith.constant 2 : index
    %c0_21 = arith.constant 0 : index
    %c0_22 = arith.constant 0 : index
    %45 = vector.load %arg3[%c2, %c0_21, %c0_22] : memref<37x128x128xbf16, #tpu.memory_space<vmem>>, vector<1x128x128xbf16>
    %46 = vector.shape_cast %45 : vector<1x128x128xbf16> to vector<128x128xbf16>
    %cst_23 = arith.constant dense<0.000000e+00> : vector<16x128xf32>
    %47 = tpu.matmul %44, %46, %cst_23 {dimension_numbers = #tpu.dot_dimension_numbers<[1], [0], [0], [1], [0, 0, 1, 1], [], []>} : vector<16x128xbf16>, vector<128x128xbf16>, vector<16x128xf32> -> vector<16x128xf32>
    %48 = arith.addf %43, %47 : vector<16x128xf32>
    %49 = vector.extract_strided_slice %32 {offsets = [48, 0], sizes = [16, 128], strides = [1, 1]} : vector<144x128xbf16> to vector<16x128xbf16>
    %c3 = arith.constant 3 : index
    %c0_24 = arith.constant 0 : index
    %c0_25 = arith.constant 0 : index
    %50 = vector.load %arg3[%c3, %c0_24, %c0_25] : memref<37x128x128xbf16, #tpu.memory_space<vmem>>, vector<1x128x128xbf16>
    %51 = vector.shape_cast %50 : vector<1x128x128xbf16> to vector<128x128xbf16>
    %cst_26 = arith.constant dense<0.000000e+00> : vector<16x128xf32>
    %52 = tpu.matmul %49, %51, %cst_26 {dimension_numbers = #tpu.dot_dimension_numbers<[1], [0], [0], [1], [0, 0, 1, 1], [], []>} : vector<16x128xbf16>, vector<128x128xbf16>, vector<16x128xf32> -> vector<16x128xf32>
    %53 = arith.addf %48, %52 : vector<16x128xf32>
    %54 = vector.extract_strided_slice %32 {offsets = [64, 0], sizes = [16, 128], strides = [1, 1]} : vector<144x128xbf16> to vector<16x128xbf16>
    %c4 = arith.constant 4 : index
    %c0_27 = arith.constant 0 : index
    %c0_28 = arith.constant 0 : index
    %55 = vector.load %arg3[%c4, %c0_27, %c0_28] : memref<37x128x128xbf16, #tpu.memory_space<vmem>>, vector<1x128x128xbf16>
    %56 = vector.shape_cast %55 : vector<1x128x128xbf16> to vector<128x128xbf16>
    %cst_29 = arith.constant dense<0.000000e+00> : vector<16x128xf32>
    %57 = tpu.matmul %54, %56, %cst_29 {dimension_numbers = #tpu.dot_dimension_numbers<[1], [0], [0], [1], [0, 0, 1, 1], [], []>} : vector<16x128xbf16>, vector<128x128xbf16>, vector<16x128xf32> -> vector<16x128xf32>
    %58 = arith.addf %53, %57 : vector<16x128xf32>
    %59 = vector.extract_strided_slice %32 {offsets = [80, 0], sizes = [16, 128], strides = [1, 1]} : vector<144x128xbf16> to vector<16x128xbf16>
    %c5 = arith.constant 5 : index
    %c0_30 = arith.constant 0 : index
    %c0_31 = arith.constant 0 : index
    %60 = vector.load %arg3[%c5, %c0_30, %c0_31] : memref<37x128x128xbf16, #tpu.memory_space<vmem>>, vector<1x128x128xbf16>
    %61 = vector.shape_cast %60 : vector<1x128x128xbf16> to vector<128x128xbf16>
    %cst_32 = arith.constant dense<0.000000e+00> : vector<16x128xf32>
    %62 = tpu.matmul %59, %61, %cst_32 {dimension_numbers = #tpu.dot_dimension_numbers<[1], [0], [0], [1], [0, 0, 1, 1], [], []>} : vector<16x128xbf16>, vector<128x128xbf16>, vector<16x128xf32> -> vector<16x128xf32>
    %63 = arith.addf %58, %62 : vector<16x128xf32>
    %64 = vector.extract_strided_slice %32 {offsets = [96, 0], sizes = [16, 128], strides = [1, 1]} : vector<144x128xbf16> to vector<16x128xbf16>
    %c6 = arith.constant 6 : index
    %c0_33 = arith.constant 0 : index
    %c0_34 = arith.constant 0 : index
    %65 = vector.load %arg3[%c6, %c0_33, %c0_34] : memref<37x128x128xbf16, #tpu.memory_space<vmem>>, vector<1x128x128xbf16>
    %66 = vector.shape_cast %65 : vector<1x128x128xbf16> to vector<128x128xbf16>
    %cst_35 = arith.constant dense<0.000000e+00> : vector<16x128xf32>
    %67 = tpu.matmul %64, %66, %cst_35 {dimension_numbers = #tpu.dot_dimension_numbers<[1], [0], [0], [1], [0, 0, 1, 1], [], []>} : vector<16x128xbf16>, vector<128x128xbf16>, vector<16x128xf32> -> vector<16x128xf32>
    %68 = arith.addf %63, %67 : vector<16x128xf32>
    %69 = vector.extract_strided_slice %32 {offsets = [112, 0], sizes = [16, 128], strides = [1, 1]} : vector<144x128xbf16> to vector<16x128xbf16>
    %c7 = arith.constant 7 : index
    %c0_36 = arith.constant 0 : index
    %c0_37 = arith.constant 0 : index
    %70 = vector.load %arg3[%c7, %c0_36, %c0_37] : memref<37x128x128xbf16, #tpu.memory_space<vmem>>, vector<1x128x128xbf16>
    %71 = vector.shape_cast %70 : vector<1x128x128xbf16> to vector<128x128xbf16>
    %cst_38 = arith.constant dense<0.000000e+00> : vector<16x128xf32>
    %72 = tpu.matmul %69, %71, %cst_38 {dimension_numbers = #tpu.dot_dimension_numbers<[1], [0], [0], [1], [0, 0, 1, 1], [], []>} : vector<16x128xbf16>, vector<128x128xbf16>, vector<16x128xf32> -> vector<16x128xf32>
    %73 = arith.addf %68, %72 : vector<16x128xf32>
    %74 = vector.extract_strided_slice %32 {offsets = [128, 0], sizes = [16, 128], strides = [1, 1]} : vector<144x128xbf16> to vector<16x128xbf16>
    %c8 = arith.constant 8 : index
    %c0_39 = arith.constant 0 : index
    %c0_40 = arith.constant 0 : index
    %75 = vector.load %arg3[%c8, %c0_39, %c0_40] : memref<37x128x128xbf16, #tpu.memory_space<vmem>>, vector<1x128x128xbf16>
    %76 = vector.shape_cast %75 : vector<1x128x128xbf16> to vector<128x128xbf16>
    %cst_41 = arith.constant dense<0.000000e+00> : vector<16x128xf32>
    %77 = tpu.matmul %74, %76, %cst_41 {dimension_numbers = #tpu.dot_dimension_numbers<[1], [0], [0], [1], [0, 0, 1, 1], [], []>} : vector<16x128xbf16>, vector<128x128xbf16>, vector<16x128xf32> -> vector<16x128xf32>
    %78 = arith.addf %73, %77 : vector<16x128xf32>
    %c1_42 = arith.constant 1 : index
    %c0_43 = arith.constant 0 : index
    %79 = vector.load %arg4[%c1_42, %c0_43] : memref<8x128xf32, #tpu.memory_space<vmem>>, vector<1x128xf32>
    %80 = vector.broadcast %79 : vector<1x128xf32> to vector<16x128xf32>
    %81 = arith.addf %78, %80 : vector<16x128xf32>
    %cst_44 = arith.constant 0.000000e+00 : f32
    %82 = vector.broadcast %cst_44 : f32 to vector<16x128xf32>
    %83 = arith.maximumf %81, %82 : vector<16x128xf32>
    %84 = arith.truncf %83 : vector<16x128xf32> to vector<16x128xbf16>
    %c0_45 = arith.constant 0 : index
    %c0_46 = arith.constant 0 : index
    %85 = vector.load %arg6[%c0_45, %c0_46] : memref<144x16xbf16, #tpu.memory_space<vmem>>, vector<144x16xbf16>
    %cst_47 = arith.constant dense<0.000000e+00> : vector<144x128xf32>
    %86 = tpu.matmul %85, %84, %cst_47 {dimension_numbers = #tpu.dot_dimension_numbers<[1], [0], [0], [1], [0, 0, 1, 1], [], []>} : vector<144x16xbf16>, vector<16x128xbf16>, vector<144x128xf32> -> vector<144x128xf32>
    %87 = arith.truncf %86 : vector<144x128xf32> to vector<144x128xbf16>
    %cst_48 = arith.constant 0.000000e+00 : f32
    %88 = vector.broadcast %cst_48 : f32 to vector<16x128xf32>
    %89 = vector.extract_strided_slice %87 {offsets = [0, 0], sizes = [16, 128], strides = [1, 1]} : vector<144x128xbf16> to vector<16x128xbf16>
    %c9 = arith.constant 9 : index
    %c0_49 = arith.constant 0 : index
    %c0_50 = arith.constant 0 : index
    %90 = vector.load %arg3[%c9, %c0_49, %c0_50] : memref<37x128x128xbf16, #tpu.memory_space<vmem>>, vector<1x128x128xbf16>
    %91 = vector.shape_cast %90 : vector<1x128x128xbf16> to vector<128x128xbf16>
    %cst_51 = arith.constant dense<0.000000e+00> : vector<16x128xf32>
    %92 = tpu.matmul %89, %91, %cst_51 {dimension_numbers = #tpu.dot_dimension_numbers<[1], [0], [0], [1], [0, 0, 1, 1], [], []>} : vector<16x128xbf16>, vector<128x128xbf16>, vector<16x128xf32> -> vector<16x128xf32>
    %93 = arith.addf %88, %92 : vector<16x128xf32>
    %94 = vector.extract_strided_slice %87 {offsets = [16, 0], sizes = [16, 128], strides = [1, 1]} : vector<144x128xbf16> to vector<16x128xbf16>
    %c10 = arith.constant 10 : index
    %c0_52 = arith.constant 0 : index
    %c0_53 = arith.constant 0 : index
    %95 = vector.load %arg3[%c10, %c0_52, %c0_53] : memref<37x128x128xbf16, #tpu.memory_space<vmem>>, vector<1x128x128xbf16>
    %96 = vector.shape_cast %95 : vector<1x128x128xbf16> to vector<128x128xbf16>
    %cst_54 = arith.constant dense<0.000000e+00> : vector<16x128xf32>
    %97 = tpu.matmul %94, %96, %cst_54 {dimension_numbers = #tpu.dot_dimension_numbers<[1], [0], [0], [1], [0, 0, 1, 1], [], []>} : vector<16x128xbf16>, vector<128x128xbf16>, vector<16x128xf32> -> vector<16x128xf32>
    %98 = arith.addf %93, %97 : vector<16x128xf32>
    %99 = vector.extract_strided_slice %87 {offsets = [32, 0], sizes = [16, 128], strides = [1, 1]} : vector<144x128xbf16> to vector<16x128xbf16>
    %c11 = arith.constant 11 : index
    %c0_55 = arith.constant 0 : index
    %c0_56 = arith.constant 0 : index
    %100 = vector.load %arg3[%c11, %c0_55, %c0_56] : memref<37x128x128xbf16, #tpu.memory_space<vmem>>, vector<1x128x128xbf16>
    %101 = vector.shape_cast %100 : vector<1x128x128xbf16> to vector<128x128xbf16>
    %cst_57 = arith.constant dense<0.000000e+00> : vector<16x128xf32>
    %102 = tpu.matmul %99, %101, %cst_57 {dimension_numbers = #tpu.dot_dimension_numbers<[1], [0], [0], [1], [0, 0, 1, 1], [], []>} : vector<16x128xbf16>, vector<128x128xbf16>, vector<16x128xf32> -> vector<16x128xf32>
    %103 = arith.addf %98, %102 : vector<16x128xf32>
    %104 = vector.extract_strided_slice %87 {offsets = [48, 0], sizes = [16, 128], strides = [1, 1]} : vector<144x128xbf16> to vector<16x128xbf16>
    %c12 = arith.constant 12 : index
    %c0_58 = arith.constant 0 : index
    %c0_59 = arith.constant 0 : index
    %105 = vector.load %arg3[%c12, %c0_58, %c0_59] : memref<37x128x128xbf16, #tpu.memory_space<vmem>>, vector<1x128x128xbf16>
    %106 = vector.shape_cast %105 : vector<1x128x128xbf16> to vector<128x128xbf16>
    %cst_60 = arith.constant dense<0.000000e+00> : vector<16x128xf32>
    %107 = tpu.matmul %104, %106, %cst_60 {dimension_numbers = #tpu.dot_dimension_numbers<[1], [0], [0], [1], [0, 0, 1, 1], [], []>} : vector<16x128xbf16>, vector<128x128xbf16>, vector<16x128xf32> -> vector<16x128xf32>
    %108 = arith.addf %103, %107 : vector<16x128xf32>
    %109 = vector.extract_strided_slice %87 {offsets = [64, 0], sizes = [16, 128], strides = [1, 1]} : vector<144x128xbf16> to vector<16x128xbf16>
    %c13 = arith.constant 13 : index
    %c0_61 = arith.constant 0 : index
    %c0_62 = arith.constant 0 : index
    %110 = vector.load %arg3[%c13, %c0_61, %c0_62] : memref<37x128x128xbf16, #tpu.memory_space<vmem>>, vector<1x128x128xbf16>
    %111 = vector.shape_cast %110 : vector<1x128x128xbf16> to vector<128x128xbf16>
    %cst_63 = arith.constant dense<0.000000e+00> : vector<16x128xf32>
    %112 = tpu.matmul %109, %111, %cst_63 {dimension_numbers = #tpu.dot_dimension_numbers<[1], [0], [0], [1], [0, 0, 1, 1], [], []>} : vector<16x128xbf16>, vector<128x128xbf16>, vector<16x128xf32> -> vector<16x128xf32>
    %113 = arith.addf %108, %112 : vector<16x128xf32>
    %114 = vector.extract_strided_slice %87 {offsets = [80, 0], sizes = [16, 128], strides = [1, 1]} : vector<144x128xbf16> to vector<16x128xbf16>
    %c14 = arith.constant 14 : index
    %c0_64 = arith.constant 0 : index
    %c0_65 = arith.constant 0 : index
    %115 = vector.load %arg3[%c14, %c0_64, %c0_65] : memref<37x128x128xbf16, #tpu.memory_space<vmem>>, vector<1x128x128xbf16>
    %116 = vector.shape_cast %115 : vector<1x128x128xbf16> to vector<128x128xbf16>
    %cst_66 = arith.constant dense<0.000000e+00> : vector<16x128xf32>
    %117 = tpu.matmul %114, %116, %cst_66 {dimension_numbers = #tpu.dot_dimension_numbers<[1], [0], [0], [1], [0, 0, 1, 1], [], []>} : vector<16x128xbf16>, vector<128x128xbf16>, vector<16x128xf32> -> vector<16x128xf32>
    %118 = arith.addf %113, %117 : vector<16x128xf32>
    %119 = vector.extract_strided_slice %87 {offsets = [96, 0], sizes = [16, 128], strides = [1, 1]} : vector<144x128xbf16> to vector<16x128xbf16>
    %c15 = arith.constant 15 : index
    %c0_67 = arith.constant 0 : index
    %c0_68 = arith.constant 0 : index
    %120 = vector.load %arg3[%c15, %c0_67, %c0_68] : memref<37x128x128xbf16, #tpu.memory_space<vmem>>, vector<1x128x128xbf16>
    %121 = vector.shape_cast %120 : vector<1x128x128xbf16> to vector<128x128xbf16>
    %cst_69 = arith.constant dense<0.000000e+00> : vector<16x128xf32>
    %122 = tpu.matmul %119, %121, %cst_69 {dimension_numbers = #tpu.dot_dimension_numbers<[1], [0], [0], [1], [0, 0, 1, 1], [], []>} : vector<16x128xbf16>, vector<128x128xbf16>, vector<16x128xf32> -> vector<16x128xf32>
    %123 = arith.addf %118, %122 : vector<16x128xf32>
    %124 = vector.extract_strided_slice %87 {offsets = [112, 0], sizes = [16, 128], strides = [1, 1]} : vector<144x128xbf16> to vector<16x128xbf16>
    %c16 = arith.constant 16 : index
    %c0_70 = arith.constant 0 : index
    %c0_71 = arith.constant 0 : index
    %125 = vector.load %arg3[%c16, %c0_70, %c0_71] : memref<37x128x128xbf16, #tpu.memory_space<vmem>>, vector<1x128x128xbf16>
    %126 = vector.shape_cast %125 : vector<1x128x128xbf16> to vector<128x128xbf16>
    %cst_72 = arith.constant dense<0.000000e+00> : vector<16x128xf32>
    %127 = tpu.matmul %124, %126, %cst_72 {dimension_numbers = #tpu.dot_dimension_numbers<[1], [0], [0], [1], [0, 0, 1, 1], [], []>} : vector<16x128xbf16>, vector<128x128xbf16>, vector<16x128xf32> -> vector<16x128xf32>
    %128 = arith.addf %123, %127 : vector<16x128xf32>
    %129 = vector.extract_strided_slice %87 {offsets = [128, 0], sizes = [16, 128], strides = [1, 1]} : vector<144x128xbf16> to vector<16x128xbf16>
    %c17 = arith.constant 17 : index
    %c0_73 = arith.constant 0 : index
    %c0_74 = arith.constant 0 : index
    %130 = vector.load %arg3[%c17, %c0_73, %c0_74] : memref<37x128x128xbf16, #tpu.memory_space<vmem>>, vector<1x128x128xbf16>
    %131 = vector.shape_cast %130 : vector<1x128x128xbf16> to vector<128x128xbf16>
    %cst_75 = arith.constant dense<0.000000e+00> : vector<16x128xf32>
    %132 = tpu.matmul %129, %131, %cst_75 {dimension_numbers = #tpu.dot_dimension_numbers<[1], [0], [0], [1], [0, 0, 1, 1], [], []>} : vector<16x128xbf16>, vector<128x128xbf16>, vector<16x128xf32> -> vector<16x128xf32>
    %133 = arith.addf %128, %132 : vector<16x128xf32>
    %c2_76 = arith.constant 2 : index
    %c0_77 = arith.constant 0 : index
    %134 = vector.load %arg4[%c2_76, %c0_77] : memref<8x128xf32, #tpu.memory_space<vmem>>, vector<1x128xf32>
    %135 = vector.broadcast %134 : vector<1x128xf32> to vector<16x128xf32>
    %136 = arith.addf %133, %135 : vector<16x128xf32>
    %137 = arith.extf %29 : vector<16x128xbf16> to vector<16x128xf32>
    %138 = arith.addf %136, %137 : vector<16x128xf32>
    %cst_78 = arith.constant 0.000000e+00 : f32
    %139 = vector.broadcast %cst_78 : f32 to vector<16x128xf32>
    %140 = arith.maximumf %138, %139 : vector<16x128xf32>
    %141 = arith.truncf %140 : vector<16x128xf32> to vector<16x128xbf16>
    %c0_79 = arith.constant 0 : index
    %c0_80 = arith.constant 0 : index
    %142 = vector.load %arg7[%c0_79, %c0_80] : memref<8x16xbf16, #tpu.memory_space<vmem>>, vector<8x16xbf16>
    %cst_81 = arith.constant dense<0.000000e+00> : vector<8x128xf32>
    %143 = tpu.matmul %142, %141, %cst_81 {dimension_numbers = #tpu.dot_dimension_numbers<[1], [0], [0], [1], [0, 0, 1, 1], [], []>} : vector<8x16xbf16>, vector<16x128xbf16>, vector<8x128xf32> -> vector<8x128xf32>
    %144 = arith.truncf %143 : vector<8x128xf32> to vector<8x128xbf16>
    %c18 = arith.constant 18 : index
    %c0_82 = arith.constant 0 : index
    %c0_83 = arith.constant 0 : index
    %145 = vector.load %arg3[%c18, %c0_82, %c0_83] : memref<37x128x128xbf16, #tpu.memory_space<vmem>>, vector<1x128x128xbf16>
    %146 = vector.shape_cast %145 : vector<1x128x128xbf16> to vector<128x128xbf16>
    %cst_84 = arith.constant dense<0.000000e+00> : vector<8x128xf32>
    %147 = tpu.matmul %144, %146, %cst_84 {dimension_numbers = #tpu.dot_dimension_numbers<[1], [0], [0], [1], [0, 0, 1, 1], [], []>} : vector<8x128xbf16>, vector<128x128xbf16>, vector<8x128xf32> -> vector<8x128xf32>
    %c3_85 = arith.constant 3 : index
    %c0_86 = arith.constant 0 : index
    %148 = vector.load %arg4[%c3_85, %c0_86] : memref<8x128xf32, #tpu.memory_space<vmem>>, vector<1x128xf32>
    %149 = vector.broadcast %148 : vector<1x128xf32> to vector<8x128xf32>
    %150 = arith.addf %147, %149 : vector<8x128xf32>
    %c0_87 = arith.constant 0 : index
    %c0_88 = arith.constant 0 : index
    %151 = vector.load %arg8[%c0_87, %c0_88] : memref<72x16xbf16, #tpu.memory_space<vmem>>, vector<72x16xbf16>
    %cst_89 = arith.constant dense<0.000000e+00> : vector<72x128xf32>
    %152 = tpu.matmul %151, %141, %cst_89 {dimension_numbers = #tpu.dot_dimension_numbers<[1], [0], [0], [1], [0, 0, 1, 1], [], []>} : vector<72x16xbf16>, vector<16x128xbf16>, vector<72x128xf32> -> vector<72x128xf32>
    %153 = arith.truncf %152 : vector<72x128xf32> to vector<72x128xbf16>
    %cst_90 = arith.constant 0.000000e+00 : f32
    %154 = vector.broadcast %cst_90 : f32 to vector<8x128xf32>
    %155 = vector.extract_strided_slice %153 {offsets = [0, 0], sizes = [8, 128], strides = [1, 1]} : vector<72x128xbf16> to vector<8x128xbf16>
    %c19 = arith.constant 19 : index
    %c0_91 = arith.constant 0 : index
    %c0_92 = arith.constant 0 : index
    %156 = vector.load %arg3[%c19, %c0_91, %c0_92] : memref<37x128x128xbf16, #tpu.memory_space<vmem>>, vector<1x128x128xbf16>
    %157 = vector.shape_cast %156 : vector<1x128x128xbf16> to vector<128x128xbf16>
    %cst_93 = arith.constant dense<0.000000e+00> : vector<8x128xf32>
    %158 = tpu.matmul %155, %157, %cst_93 {dimension_numbers = #tpu.dot_dimension_numbers<[1], [0], [0], [1], [0, 0, 1, 1], [], []>} : vector<8x128xbf16>, vector<128x128xbf16>, vector<8x128xf32> -> vector<8x128xf32>
    %159 = arith.addf %154, %158 : vector<8x128xf32>
    %160 = vector.extract_strided_slice %153 {offsets = [8, 0], sizes = [8, 128], strides = [1, 1]} : vector<72x128xbf16> to vector<8x128xbf16>
    %c20 = arith.constant 20 : index
    %c0_94 = arith.constant 0 : index
    %c0_95 = arith.constant 0 : index
    %161 = vector.load %arg3[%c20, %c0_94, %c0_95] : memref<37x128x128xbf16, #tpu.memory_space<vmem>>, vector<1x128x128xbf16>
    %162 = vector.shape_cast %161 : vector<1x128x128xbf16> to vector<128x128xbf16>
    %cst_96 = arith.constant dense<0.000000e+00> : vector<8x128xf32>
    %163 = tpu.matmul %160, %162, %cst_96 {dimension_numbers = #tpu.dot_dimension_numbers<[1], [0], [0], [1], [0, 0, 1, 1], [], []>} : vector<8x128xbf16>, vector<128x128xbf16>, vector<8x128xf32> -> vector<8x128xf32>
    %164 = arith.addf %159, %163 : vector<8x128xf32>
    %165 = vector.extract_strided_slice %153 {offsets = [16, 0], sizes = [8, 128], strides = [1, 1]} : vector<72x128xbf16> to vector<8x128xbf16>
    %c21 = arith.constant 21 : index
    %c0_97 = arith.constant 0 : index
    %c0_98 = arith.constant 0 : index
    %166 = vector.load %arg3[%c21, %c0_97, %c0_98] : memref<37x128x128xbf16, #tpu.memory_space<vmem>>, vector<1x128x128xbf16>
    %167 = vector.shape_cast %166 : vector<1x128x128xbf16> to vector<128x128xbf16>
    %cst_99 = arith.constant dense<0.000000e+00> : vector<8x128xf32>
    %168 = tpu.matmul %165, %167, %cst_99 {dimension_numbers = #tpu.dot_dimension_numbers<[1], [0], [0], [1], [0, 0, 1, 1], [], []>} : vector<8x128xbf16>, vector<128x128xbf16>, vector<8x128xf32> -> vector<8x128xf32>
    %169 = arith.addf %164, %168 : vector<8x128xf32>
    %170 = vector.extract_strided_slice %153 {offsets = [24, 0], sizes = [8, 128], strides = [1, 1]} : vector<72x128xbf16> to vector<8x128xbf16>
    %c22 = arith.constant 22 : index
    %c0_100 = arith.constant 0 : index
    %c0_101 = arith.constant 0 : index
    %171 = vector.load %arg3[%c22, %c0_100, %c0_101] : memref<37x128x128xbf16, #tpu.memory_space<vmem>>, vector<1x128x128xbf16>
    %172 = vector.shape_cast %171 : vector<1x128x128xbf16> to vector<128x128xbf16>
    %cst_102 = arith.constant dense<0.000000e+00> : vector<8x128xf32>
    %173 = tpu.matmul %170, %172, %cst_102 {dimension_numbers = #tpu.dot_dimension_numbers<[1], [0], [0], [1], [0, 0, 1, 1], [], []>} : vector<8x128xbf16>, vector<128x128xbf16>, vector<8x128xf32> -> vector<8x128xf32>
    %174 = arith.addf %169, %173 : vector<8x128xf32>
    %175 = vector.extract_strided_slice %153 {offsets = [32, 0], sizes = [8, 128], strides = [1, 1]} : vector<72x128xbf16> to vector<8x128xbf16>
    %c23 = arith.constant 23 : index
    %c0_103 = arith.constant 0 : index
    %c0_104 = arith.constant 0 : index
    %176 = vector.load %arg3[%c23, %c0_103, %c0_104] : memref<37x128x128xbf16, #tpu.memory_space<vmem>>, vector<1x128x128xbf16>
    %177 = vector.shape_cast %176 : vector<1x128x128xbf16> to vector<128x128xbf16>
    %cst_105 = arith.constant dense<0.000000e+00> : vector<8x128xf32>
    %178 = tpu.matmul %175, %177, %cst_105 {dimension_numbers = #tpu.dot_dimension_numbers<[1], [0], [0], [1], [0, 0, 1, 1], [], []>} : vector<8x128xbf16>, vector<128x128xbf16>, vector<8x128xf32> -> vector<8x128xf32>
    %179 = arith.addf %174, %178 : vector<8x128xf32>
    %180 = vector.extract_strided_slice %153 {offsets = [40, 0], sizes = [8, 128], strides = [1, 1]} : vector<72x128xbf16> to vector<8x128xbf16>
    %c24 = arith.constant 24 : index
    %c0_106 = arith.constant 0 : index
    %c0_107 = arith.constant 0 : index
    %181 = vector.load %arg3[%c24, %c0_106, %c0_107] : memref<37x128x128xbf16, #tpu.memory_space<vmem>>, vector<1x128x128xbf16>
    %182 = vector.shape_cast %181 : vector<1x128x128xbf16> to vector<128x128xbf16>
    %cst_108 = arith.constant dense<0.000000e+00> : vector<8x128xf32>
    %183 = tpu.matmul %180, %182, %cst_108 {dimension_numbers = #tpu.dot_dimension_numbers<[1], [0], [0], [1], [0, 0, 1, 1], [], []>} : vector<8x128xbf16>, vector<128x128xbf16>, vector<8x128xf32> -> vector<8x128xf32>
    %184 = arith.addf %179, %183 : vector<8x128xf32>
    %185 = vector.extract_strided_slice %153 {offsets = [48, 0], sizes = [8, 128], strides = [1, 1]} : vector<72x128xbf16> to vector<8x128xbf16>
    %c25 = arith.constant 25 : index
    %c0_109 = arith.constant 0 : index
    %c0_110 = arith.constant 0 : index
    %186 = vector.load %arg3[%c25, %c0_109, %c0_110] : memref<37x128x128xbf16, #tpu.memory_space<vmem>>, vector<1x128x128xbf16>
    %187 = vector.shape_cast %186 : vector<1x128x128xbf16> to vector<128x128xbf16>
    %cst_111 = arith.constant dense<0.000000e+00> : vector<8x128xf32>
    %188 = tpu.matmul %185, %187, %cst_111 {dimension_numbers = #tpu.dot_dimension_numbers<[1], [0], [0], [1], [0, 0, 1, 1], [], []>} : vector<8x128xbf16>, vector<128x128xbf16>, vector<8x128xf32> -> vector<8x128xf32>
    %189 = arith.addf %184, %188 : vector<8x128xf32>
    %190 = vector.extract_strided_slice %153 {offsets = [56, 0], sizes = [8, 128], strides = [1, 1]} : vector<72x128xbf16> to vector<8x128xbf16>
    %c26 = arith.constant 26 : index
    %c0_112 = arith.constant 0 : index
    %c0_113 = arith.constant 0 : index
    %191 = vector.load %arg3[%c26, %c0_112, %c0_113] : memref<37x128x128xbf16, #tpu.memory_space<vmem>>, vector<1x128x128xbf16>
    %192 = vector.shape_cast %191 : vector<1x128x128xbf16> to vector<128x128xbf16>
    %cst_114 = arith.constant dense<0.000000e+00> : vector<8x128xf32>
    %193 = tpu.matmul %190, %192, %cst_114 {dimension_numbers = #tpu.dot_dimension_numbers<[1], [0], [0], [1], [0, 0, 1, 1], [], []>} : vector<8x128xbf16>, vector<128x128xbf16>, vector<8x128xf32> -> vector<8x128xf32>
    %194 = arith.addf %189, %193 : vector<8x128xf32>
    %195 = vector.extract_strided_slice %153 {offsets = [64, 0], sizes = [8, 128], strides = [1, 1]} : vector<72x128xbf16> to vector<8x128xbf16>
    %c27 = arith.constant 27 : index
    %c0_115 = arith.constant 0 : index
    %c0_116 = arith.constant 0 : index
    %196 = vector.load %arg3[%c27, %c0_115, %c0_116] : memref<37x128x128xbf16, #tpu.memory_space<vmem>>, vector<1x128x128xbf16>
    %197 = vector.shape_cast %196 : vector<1x128x128xbf16> to vector<128x128xbf16>
    %cst_117 = arith.constant dense<0.000000e+00> : vector<8x128xf32>
    %198 = tpu.matmul %195, %197, %cst_117 {dimension_numbers = #tpu.dot_dimension_numbers<[1], [0], [0], [1], [0, 0, 1, 1], [], []>} : vector<8x128xbf16>, vector<128x128xbf16>, vector<8x128xf32> -> vector<8x128xf32>
    %199 = arith.addf %194, %198 : vector<8x128xf32>
    %c4_118 = arith.constant 4 : index
    %c0_119 = arith.constant 0 : index
    %200 = vector.load %arg4[%c4_118, %c0_119] : memref<8x128xf32, #tpu.memory_space<vmem>>, vector<1x128xf32>
    %201 = vector.broadcast %200 : vector<1x128xf32> to vector<8x128xf32>
    %202 = arith.addf %199, %201 : vector<8x128xf32>
    %cst_120 = arith.constant 0.000000e+00 : f32
    %203 = vector.broadcast %cst_120 : f32 to vector<8x128xf32>
    %204 = arith.maximumf %202, %203 : vector<8x128xf32>
    %205 = arith.truncf %204 : vector<8x128xf32> to vector<8x128xbf16>
    %c0_121 = arith.constant 0 : index
    %c0_122 = arith.constant 0 : index
    %206 = vector.load %arg9[%c0_121, %c0_122] : memref<72x8xbf16, #tpu.memory_space<vmem>>, vector<72x8xbf16>
    %cst_123 = arith.constant dense<0.000000e+00> : vector<72x128xf32>
    %207 = tpu.matmul %206, %205, %cst_123 {dimension_numbers = #tpu.dot_dimension_numbers<[1], [0], [0], [1], [0, 0, 1, 1], [], []>} : vector<72x8xbf16>, vector<8x128xbf16>, vector<72x128xf32> -> vector<72x128xf32>
    %208 = arith.truncf %207 : vector<72x128xf32> to vector<72x128xbf16>
    %cst_124 = arith.constant 0.000000e+00 : f32
    %209 = vector.broadcast %cst_124 : f32 to vector<8x128xf32>
    %210 = vector.extract_strided_slice %208 {offsets = [0, 0], sizes = [8, 128], strides = [1, 1]} : vector<72x128xbf16> to vector<8x128xbf16>
    %c28 = arith.constant 28 : index
    %c0_125 = arith.constant 0 : index
    %c0_126 = arith.constant 0 : index
    %211 = vector.load %arg3[%c28, %c0_125, %c0_126] : memref<37x128x128xbf16, #tpu.memory_space<vmem>>, vector<1x128x128xbf16>
    %212 = vector.shape_cast %211 : vector<1x128x128xbf16> to vector<128x128xbf16>
    %cst_127 = arith.constant dense<0.000000e+00> : vector<8x128xf32>
    %213 = tpu.matmul %210, %212, %cst_127 {dimension_numbers = #tpu.dot_dimension_numbers<[1], [0], [0], [1], [0, 0, 1, 1], [], []>} : vector<8x128xbf16>, vector<128x128xbf16>, vector<8x128xf32> -> vector<8x128xf32>
    %214 = arith.addf %209, %213 : vector<8x128xf32>
    %215 = vector.extract_strided_slice %208 {offsets = [8, 0], sizes = [8, 128], strides = [1, 1]} : vector<72x128xbf16> to vector<8x128xbf16>
    %c29 = arith.constant 29 : index
    %c0_128 = arith.constant 0 : index
    %c0_129 = arith.constant 0 : index
    %216 = vector.load %arg3[%c29, %c0_128, %c0_129] : memref<37x128x128xbf16, #tpu.memory_space<vmem>>, vector<1x128x128xbf16>
    %217 = vector.shape_cast %216 : vector<1x128x128xbf16> to vector<128x128xbf16>
    %cst_130 = arith.constant dense<0.000000e+00> : vector<8x128xf32>
    %218 = tpu.matmul %215, %217, %cst_130 {dimension_numbers = #tpu.dot_dimension_numbers<[1], [0], [0], [1], [0, 0, 1, 1], [], []>} : vector<8x128xbf16>, vector<128x128xbf16>, vector<8x128xf32> -> vector<8x128xf32>
    %219 = arith.addf %214, %218 : vector<8x128xf32>
    %220 = vector.extract_strided_slice %208 {offsets = [16, 0], sizes = [8, 128], strides = [1, 1]} : vector<72x128xbf16> to vector<8x128xbf16>
    %c30 = arith.constant 30 : index
    %c0_131 = arith.constant 0 : index
    %c0_132 = arith.constant 0 : index
    %221 = vector.load %arg3[%c30, %c0_131, %c0_132] : memref<37x128x128xbf16, #tpu.memory_space<vmem>>, vector<1x128x128xbf16>
    %222 = vector.shape_cast %221 : vector<1x128x128xbf16> to vector<128x128xbf16>
    %cst_133 = arith.constant dense<0.000000e+00> : vector<8x128xf32>
    %223 = tpu.matmul %220, %222, %cst_133 {dimension_numbers = #tpu.dot_dimension_numbers<[1], [0], [0], [1], [0, 0, 1, 1], [], []>} : vector<8x128xbf16>, vector<128x128xbf16>, vector<8x128xf32> -> vector<8x128xf32>
    %224 = arith.addf %219, %223 : vector<8x128xf32>
    %225 = vector.extract_strided_slice %208 {offsets = [24, 0], sizes = [8, 128], strides = [1, 1]} : vector<72x128xbf16> to vector<8x128xbf16>
    %c31 = arith.constant 31 : index
    %c0_134 = arith.constant 0 : index
    %c0_135 = arith.constant 0 : index
    %226 = vector.load %arg3[%c31, %c0_134, %c0_135] : memref<37x128x128xbf16, #tpu.memory_space<vmem>>, vector<1x128x128xbf16>
    %227 = vector.shape_cast %226 : vector<1x128x128xbf16> to vector<128x128xbf16>
    %cst_136 = arith.constant dense<0.000000e+00> : vector<8x128xf32>
    %228 = tpu.matmul %225, %227, %cst_136 {dimension_numbers = #tpu.dot_dimension_numbers<[1], [0], [0], [1], [0, 0, 1, 1], [], []>} : vector<8x128xbf16>, vector<128x128xbf16>, vector<8x128xf32> -> vector<8x128xf32>
    %229 = arith.addf %224, %228 : vector<8x128xf32>
    %230 = vector.extract_strided_slice %208 {offsets = [32, 0], sizes = [8, 128], strides = [1, 1]} : vector<72x128xbf16> to vector<8x128xbf16>
    %c32 = arith.constant 32 : index
    %c0_137 = arith.constant 0 : index
    %c0_138 = arith.constant 0 : index
    %231 = vector.load %arg3[%c32, %c0_137, %c0_138] : memref<37x128x128xbf16, #tpu.memory_space<vmem>>, vector<1x128x128xbf16>
    %232 = vector.shape_cast %231 : vector<1x128x128xbf16> to vector<128x128xbf16>
    %cst_139 = arith.constant dense<0.000000e+00> : vector<8x128xf32>
    %233 = tpu.matmul %230, %232, %cst_139 {dimension_numbers = #tpu.dot_dimension_numbers<[1], [0], [0], [1], [0, 0, 1, 1], [], []>} : vector<8x128xbf16>, vector<128x128xbf16>, vector<8x128xf32> -> vector<8x128xf32>
    %234 = arith.addf %229, %233 : vector<8x128xf32>
    %235 = vector.extract_strided_slice %208 {offsets = [40, 0], sizes = [8, 128], strides = [1, 1]} : vector<72x128xbf16> to vector<8x128xbf16>
    %c33 = arith.constant 33 : index
    %c0_140 = arith.constant 0 : index
    %c0_141 = arith.constant 0 : index
    %236 = vector.load %arg3[%c33, %c0_140, %c0_141] : memref<37x128x128xbf16, #tpu.memory_space<vmem>>, vector<1x128x128xbf16>
    %237 = vector.shape_cast %236 : vector<1x128x128xbf16> to vector<128x128xbf16>
    %cst_142 = arith.constant dense<0.000000e+00> : vector<8x128xf32>
    %238 = tpu.matmul %235, %237, %cst_142 {dimension_numbers = #tpu.dot_dimension_numbers<[1], [0], [0], [1], [0, 0, 1, 1], [], []>} : vector<8x128xbf16>, vector<128x128xbf16>, vector<8x128xf32> -> vector<8x128xf32>
    %239 = arith.addf %234, %238 : vector<8x128xf32>
    %240 = vector.extract_strided_slice %208 {offsets = [48, 0], sizes = [8, 128], strides = [1, 1]} : vector<72x128xbf16> to vector<8x128xbf16>
    %c34 = arith.constant 34 : index
    %c0_143 = arith.constant 0 : index
    %c0_144 = arith.constant 0 : index
    %241 = vector.load %arg3[%c34, %c0_143, %c0_144] : memref<37x128x128xbf16, #tpu.memory_space<vmem>>, vector<1x128x128xbf16>
    %242 = vector.shape_cast %241 : vector<1x128x128xbf16> to vector<128x128xbf16>
    %cst_145 = arith.constant dense<0.000000e+00> : vector<8x128xf32>
    %243 = tpu.matmul %240, %242, %cst_145 {dimension_numbers = #tpu.dot_dimension_numbers<[1], [0], [0], [1], [0, 0, 1, 1], [], []>} : vector<8x128xbf16>, vector<128x128xbf16>, vector<8x128xf32> -> vector<8x128xf32>
    %244 = arith.addf %239, %243 : vector<8x128xf32>
    %245 = vector.extract_strided_slice %208 {offsets = [56, 0], sizes = [8, 128], strides = [1, 1]} : vector<72x128xbf16> to vector<8x128xbf16>
    %c35 = arith.constant 35 : index
    %c0_146 = arith.constant 0 : index
    %c0_147 = arith.constant 0 : index
    %246 = vector.load %arg3[%c35, %c0_146, %c0_147] : memref<37x128x128xbf16, #tpu.memory_space<vmem>>, vector<1x128x128xbf16>
    %247 = vector.shape_cast %246 : vector<1x128x128xbf16> to vector<128x128xbf16>
    %cst_148 = arith.constant dense<0.000000e+00> : vector<8x128xf32>
    %248 = tpu.matmul %245, %247, %cst_148 {dimension_numbers = #tpu.dot_dimension_numbers<[1], [0], [0], [1], [0, 0, 1, 1], [], []>} : vector<8x128xbf16>, vector<128x128xbf16>, vector<8x128xf32> -> vector<8x128xf32>
    %249 = arith.addf %244, %248 : vector<8x128xf32>
    %250 = vector.extract_strided_slice %208 {offsets = [64, 0], sizes = [8, 128], strides = [1, 1]} : vector<72x128xbf16> to vector<8x128xbf16>
    %c36 = arith.constant 36 : index
    %c0_149 = arith.constant 0 : index
    %c0_150 = arith.constant 0 : index
    %251 = vector.load %arg3[%c36, %c0_149, %c0_150] : memref<37x128x128xbf16, #tpu.memory_space<vmem>>, vector<1x128x128xbf16>
    %252 = vector.shape_cast %251 : vector<1x128x128xbf16> to vector<128x128xbf16>
    %cst_151 = arith.constant dense<0.000000e+00> : vector<8x128xf32>
    %253 = tpu.matmul %250, %252, %cst_151 {dimension_numbers = #tpu.dot_dimension_numbers<[1], [0], [0], [1], [0, 0, 1, 1], [], []>} : vector<8x128xbf16>, vector<128x128xbf16>, vector<8x128xf32> -> vector<8x128xf32>
    %254 = arith.addf %249, %253 : vector<8x128xf32>
    %c5_152 = arith.constant 5 : index
    %c0_153 = arith.constant 0 : index
    %255 = vector.load %arg4[%c5_152, %c0_153] : memref<8x128xf32, #tpu.memory_space<vmem>>, vector<1x128xf32>
    %256 = vector.broadcast %255 : vector<1x128xf32> to vector<8x128xf32>
    %257 = arith.addf %254, %256 : vector<8x128xf32>
    %258 = arith.addf %257, %150 : vector<8x128xf32>
    %cst_154 = arith.constant 0.000000e+00 : f32
    %259 = vector.broadcast %cst_154 : f32 to vector<8x128xf32>
    %260 = arith.maximumf %258, %259 : vector<8x128xf32>
    %261 = vector.extract_strided_slice %260 {offsets = [0, 0], sizes = [4, 128], strides = [1, 1]} : vector<8x128xf32> to vector<4x128xf32>
    %cst_155 = arith.constant dense<0.000000e+00> : vector<128xf32>
    %262 = vector.multi_reduction <add>, %261, %cst_155 [0] : vector<4x128xf32> to vector<128xf32>
    %263 = vector.shape_cast %262 : vector<128xf32> to vector<1x128xf32>
    %cst_156 = arith.constant 2.500000e-01 : f32
    %264 = vector.broadcast %cst_156 : f32 to vector<1x128xf32>
    %265 = arith.mulf %263, %264 : vector<1x128xf32>
    %c0_157 = arith.constant 0 : index
    %c0_158 = arith.constant 0 : index
    %266 = vector.load %arg10[%c0_157, %c0_158] : memref<128x128xf32, #tpu.memory_space<vmem>>, vector<128x128xf32>
    %cst_159 = arith.constant dense<0.000000e+00> : vector<1x128xf32>
    %267 = tpu.matmul %265, %266, %cst_159 {dimension_numbers = #tpu.dot_dimension_numbers<[1], [0], [0], [1], [0, 0, 1, 1], [], []>} : vector<1x128xf32>, vector<128x128xf32>, vector<1x128xf32> -> vector<1x128xf32>
    %c6_160 = arith.constant 6 : index
    %c0_161 = arith.constant 0 : index
    %268 = vector.load %arg4[%c6_160, %c0_161] : memref<8x128xf32, #tpu.memory_space<vmem>>, vector<1x128xf32>
    %269 = arith.addf %267, %268 : vector<1x128xf32>
    %270 = vector.shape_cast %269 : vector<1x128xf32> to vector<1x128xf32>
    %271 = vector.broadcast %270 : vector<1x128xf32> to vector<8x128xf32>
    %c0_162 = arith.constant 0 : index
    %c0_163 = arith.constant 0 : index
    %c0_164 = arith.constant 0 : index
    %272 = vector.load %arg11[%c0_162, %c0_163, %c0_164] : memref<1x8x128xf32, #tpu.memory_space<vmem>>, vector<1x8x128xf32>
    %273 = vector.shape_cast %272 : vector<1x8x128xf32> to vector<8x128xf32>
    %274 = vector.shape_cast %271 : vector<8x128xf32> to vector<1x8x128xf32>
    tpu.vector_store %arg11[%c0_162, %c0_163, %c0_164], %274 {strides = array<i32>} : memref<1x8x128xf32, #tpu.memory_space<vmem>>, vector<1x8x128xf32>,
    return
  }
  func.func @transform_0(%arg0: i32) -> (i32, i32, i32) {
    %c0_i32 = arith.constant 0 : i32
    %c0_i32_0 = arith.constant 0 : i32
    %c0_i32_1 = arith.constant 0 : i32
    return %arg0, %c0_i32, %c0_i32_0 : i32, i32, i32
  }
  func.func @transform_1(%arg0: i32) -> (i32, i32) {
    %c0_i32 = arith.constant 0 : i32
    %c0_i32_0 = arith.constant 0 : i32
    %c0_i32_1 = arith.constant 0 : i32
    return %c0_i32, %c0_i32_0 : i32, i32
  }
  func.func @transform_2(%arg0: i32) -> (i32, i32, i32) {
    %c0_i32 = arith.constant 0 : i32
    %c0_i32_0 = arith.constant 0 : i32
    %c0_i32_1 = arith.constant 0 : i32
    %c0_i32_2 = arith.constant 0 : i32
    return %c0_i32, %c0_i32_0, %c0_i32_1 : i32, i32, i32
  }
  func.func @transform_3(%arg0: i32) -> (i32, i32) {
    %c0_i32 = arith.constant 0 : i32
    %c0_i32_0 = arith.constant 0 : i32
    %c0_i32_1 = arith.constant 0 : i32
    return %c0_i32, %c0_i32_0 : i32, i32
  }
  func.func @transform_4(%arg0: i32) -> (i32, i32) {
    %c0_i32 = arith.constant 0 : i32
    %c0_i32_0 = arith.constant 0 : i32
    %c0_i32_1 = arith.constant 0 : i32
    return %c0_i32, %c0_i32_0 : i32, i32
  }
  func.func @transform_5(%arg0: i32) -> (i32, i32) {
    %c0_i32 = arith.constant 0 : i32
    %c0_i32_0 = arith.constant 0 : i32
    %c0_i32_1 = arith.constant 0 : i32
    return %c0_i32, %c0_i32_0 : i32, i32
  }
  func.func @transform_6(%arg0: i32) -> (i32, i32) {
    %c0_i32 = arith.constant 0 : i32
    %c0_i32_0 = arith.constant 0 : i32
    %c0_i32_1 = arith.constant 0 : i32
    return %c0_i32, %c0_i32_0 : i32, i32
  }
  func.func @transform_7(%arg0: i32) -> (i32, i32) {
    %c0_i32 = arith.constant 0 : i32
    %c0_i32_0 = arith.constant 0 : i32
    %c0_i32_1 = arith.constant 0 : i32
    return %c0_i32, %c0_i32_0 : i32, i32
  }
  func.func @transform_8(%arg0: i32) -> (i32, i32) {
    %c0_i32 = arith.constant 0 : i32
    %c0_i32_0 = arith.constant 0 : i32
    %c0_i32_1 = arith.constant 0 : i32
    return %c0_i32, %c0_i32_0 : i32, i32
  }
  func.func @transform_9(%arg0: i32) -> (i32, i32) {
    %c0_i32 = arith.constant 0 : i32
    %c0_i32_0 = arith.constant 0 : i32
    %c0_i32_1 = arith.constant 0 : i32
    return %c0_i32, %c0_i32_0 : i32, i32
  }
  func.func @transform_10(%arg0: i32) -> (i32, i32, i32) {
    %c0_i32 = arith.constant 0 : i32
    %c0_i32_0 = arith.constant 0 : i32
    %c0_i32_1 = arith.constant 0 : i32
    return %arg0, %c0_i32, %c0_i32_0 : i32, i32, i32
  }
}

</mosaic_0001>

<llo_original>
// kernel: classifier_forward.1
$region0: #{classifier_forward.1}
  #allocation0 [shape = 'u32[]', space=smem, size = 0x4, offset = 0x4, fixed_abs, tag = 'smem constant byte address 0x4 - core index']
  #allocation1 [shape = 'u32[144,128]{1,0:T(1,128)}', space=vmem, size = 0x12000, scoped, tag = 'internal scratch']
  %s0 = inlined_call_operand.vmem [shape: bf16[2,64,256], index: 0, kind: input, shape index: {}]
  %s1 = inlined_call_operand.vmem [shape: bf16[256,128], index: 1, kind: input, shape index: {}]
  %s2 = inlined_call_operand.vmem [shape: bf16[37,128,128], index: 2, kind: input, shape index: {}]
  %s3 = inlined_call_operand.vmem [shape: f32[8,128], index: 3, kind: input, shape index: {}]
  %s4 = inlined_call_operand.vmem [shape: bf16[144,64], index: 4, kind: input, shape index: {}]
  %s5 = inlined_call_operand.vmem [shape: bf16[144,16], index: 5, kind: input, shape index: {}]
  %s6 = inlined_call_operand.vmem [shape: bf16[8,16], index: 6, kind: input, shape index: {}]
  %s7 = inlined_call_operand.vmem [shape: bf16[72,16], index: 7, kind: input, shape index: {}]
  %s8 = inlined_call_operand.vmem [shape: bf16[72,8], index: 8, kind: input, shape index: {}]
  %s9 = inlined_call_operand.vmem [shape: f32[128,128], index: 9, kind: input, shape index: {}]
  %s10 = inlined_call_operand.vmem [shape: f32[2,8,128], index: 10, kind: output, shape index: {}]
  %s11 = sld [smem:[#allocation0]]
  $region73: #{classifier_forward.1} parent=0
    _
  %s13 = ssub.s32 1, %s11
  %s14 = scalar_select 0, %s13, %s11
  loop: start=0, step=1, limit=4
  $region2: #{classifier_forward.1} parent=0 // loop_pre_header
    _
  $region3: #{classifier_forward.1} parent=0 // loop_header
    %s16 = sphi 0, %s20
    %p17 = scmp.ge.s32.totalorder %s16, 4
    %s26 = sphi 0, %s28
    %s29 = sphi 0, %s26
    %s30 = sphi 0, %s29
    %s46 = sphi 0, %s30
    %s50 = sphi 0, %s50
    %s52 = sphi 0, %s50
    %s53 = sphi 0, %s52
    %s67 = sphi 0, %s53
    %s71 = sphi 0, %s71
    %s73 = sphi 0, %s71
    %s74 = sphi 0, %s73
    %s88 = sphi 0, %s74
    %s92 = sphi 0, %s92
    %s94 = sphi 0, %s92
    %s95 = sphi 0, %s94
    %s109 = sphi 0, %s95
    %s113 = sphi 0, %s113
    %s115 = sphi 0, %s113
    %s116 = sphi 0, %s115
    %s130 = sphi 0, %s116
    %s134 = sphi 0, %s134
    %s136 = sphi 0, %s134
    %s137 = sphi 0, %s136
    %s151 = sphi 0, %s137
    %s155 = sphi 0, %s155
    %s157 = sphi 0, %s155
    %s158 = sphi 0, %s157
    %s172 = sphi 0, %s158
    %s176 = sphi 0, %s176
    %s178 = sphi 0, %s176
    %s179 = sphi 0, %s178
    %s193 = sphi 0, %s179
    %s197 = sphi 0, %s197
    %s199 = sphi 0, %s197
    %s200 = sphi 0, %s199
    %s214 = sphi 0, %s200
    %s218 = sphi 0, %s218
    %s220 = sphi 0, %s218
    %s221 = sphi 0, %s220
    %s235 = sphi 0, %s221
    %s241 = sphi 0, %s243
    %s244 = sphi 0, %s241
    %s245 = sphi 0, %s244
    %s261 = sphi 0, %s245
  $region4: #{classifier_forward.1} parent=0 // loop_header_branch
    %19 = sbr.rel (%p17) target = $region8
  $region5: #{classifier_forward.1} parent=0 // loop_body
    %s21 = ssub.s32 %s16, 1
    %s22 = ssub.s32 %s16, 2
    %s23 = sadd.s32 %s16, 1
    %s24 = ssub.s32 %s16, %s23
    %p25 = scmp.eq.s32.totalorder %s24, 0
    %s27 = sadd.s32 %s26, 1
    %s28 = scalar_select %p25, %s26, %s27
    %p31 = pneg %p25
    %p32 = scmp.eq.s32.totalorder %s16, 1
    %p33 = por %p31, %p32
    %p34 = scmp.ne.s32.totalorder %s26, %s29
    %p35 = scmp.eq.s32.totalorder %s16, 0
    %p36 = por %p34, %p35
    %p37 = scmp.ne.s32.totalorder %s26, %s29
    %p38 = scmp.eq.s32.totalorder %s21, 1
    %p39 = por %p37, %p38
    %p40 = scmp.ne.s32.totalorder %s29, %s30
    %p41 = scmp.eq.s32.totalorder %s21, 0
    %p42 = por %p40, %p41
    %p43 = scmp.ne.s32.totalorder %s29, %s30
    %p44 = scmp.eq.s32.totalorder %s22, 1
    %p45 = por %p43, %p44
    %p47 = scmp.ne.s32.totalorder %s30, %s46
    %p48 = scmp.eq.s32.totalorder %s22, 0
    %p49 = por %p47, %p48
    %s51 = sadd.s32 %s50, 1
    %p54 = scmp.eq.s32.totalorder %s16, 1
    %p55 = scmp.ne.s32.totalorder %s50, %s52
    %p56 = scmp.eq.s32.totalorder %s16, 0
    %p57 = por %p55, %p56
    %p58 = scmp.ne.s32.totalorder %s50, %s52
    %p59 = scmp.eq.s32.totalorder %s21, 1
    %p60 = por %p58, %p59
    %p61 = scmp.ne.s32.totalorder %s52, %s53
    %p62 = scmp.eq.s32.totalorder %s21, 0
    %p63 = por %p61, %p62
    %p64 = scmp.ne.s32.totalorder %s52, %s53
    %p65 = scmp.eq.s32.totalorder %s22, 1
    %p66 = por %p64, %p65
    %p68 = scmp.ne.s32.totalorder %s53, %s67
    %p69 = scmp.eq.s32.totalorder %s22, 0
    %p70 = por %p68, %p69
    %s72 = sadd.s32 %s71, 1
    %p75 = scmp.eq.s32.totalorder %s16, 1
    %p76 = scmp.ne.s32.totalorder %s71, %s73
    %p77 = scmp.eq.s32.totalorder %s16, 0
    %p78 = por %p76, %p77
    %p79 = scmp.ne.s32.totalorder %s71, %s73
    %p80 = scmp.eq.s32.totalorder %s21, 1
    %p81 = por %p79, %p80
    %p82 = scmp.ne.s32.totalorder %s73, %s74
    %p83 = scmp.eq.s32.totalorder %s21, 0
    %p84 = por %p82, %p83
    %p85 = scmp.ne.s32.totalorder %s73, %s74
    %p86 = scmp.eq.s32.totalorder %s22, 1
    %p87 = por %p85, %p86
    %p89 = scmp.ne.s32.totalorder %s74, %s88
    %p90 = scmp.eq.s32.totalorder %s22, 0
    %p91 = por %p89, %p90
    %s93 = sadd.s32 %s92, 1
    %p96 = scmp.eq.s32.totalorder %s16, 1
    %p97 = scmp.ne.s32.totalorder %s92, %s94
    %p98 = scmp.eq.s32.totalorder %s16, 0
    %p99 = por %p97, %p98
    %p100 = scmp.ne.s32.totalorder %s92, %s94
    %p101 = scmp.eq.s32.totalorder %s21, 1
    %p102 = por %p100, %p101
    %p103 = scmp.ne.s32.totalorder %s94, %s95
    %p104 = scmp.eq.s32.totalorder %s21, 0
    %p105 = por %p103, %p104
    %p106 = scmp.ne.s32.totalorder %s94, %s95
    %p107 = scmp.eq.s32.totalorder %s22, 1
    %p108 = por %p106, %p107
    %p110 = scmp.ne.s32.totalorder %s95, %s109
    %p111 = scmp.eq.s32.totalorder %s22, 0
    %p112 = por %p110, %p111
    %s114 = sadd.s32 %s113, 1
    %p117 = scmp.eq.s32.totalorder %s16, 1
    %p118 = scmp.ne.s32.totalorder %s113, %s115
    %p119 = scmp.eq.s32.totalorder %s16, 0
    %p120 = por %p118, %p119
    %p121 = scmp.ne.s32.totalorder %s113, %s115
    %p122 = scmp.eq.s32.totalorder %s21, 1
    %p123 = por %p121, %p122
    %p124 = scmp.ne.s32.totalorder %s115, %s116
    %p125 = scmp.eq.s32.totalorder %s21, 0
    %p126 = por %p124, %p125
    %p127 = scmp.ne.s32.totalorder %s115, %s116
    %p128 = scmp.eq.s32.totalorder %s22, 1
    %p129 = por %p127, %p128
    %p131 = scmp.ne.s32.totalorder %s116, %s130
    %p132 = scmp.eq.s32.totalorder %s22, 0
    %p133 = por %p131, %p132
    %s135 = sadd.s32 %s134, 1
    %p138 = scmp.eq.s32.totalorder %s16, 1
    %p139 = scmp.ne.s32.totalorder %s134, %s136
    %p140 = scmp.eq.s32.totalorder %s16, 0
    %p141 = por %p139, %p140
    %p142 = scmp.ne.s32.totalorder %s134, %s136
    %p143 = scmp.eq.s32.totalorder %s21, 1
    %p144 = por %p142, %p143
    %p145 = scmp.ne.s32.totalorder %s136, %s137
    %p146 = scmp.eq.s32.totalorder %s21, 0
    %p147 = por %p145, %p146
    %p148 = scmp.ne.s32.totalorder %s136, %s137
    %p149 = scmp.eq.s32.totalorder %s22, 1
    %p150 = por %p148, %p149
    %p152 = scmp.ne.s32.totalorder %s137, %s151
    %p153 = scmp.eq.s32.totalorder %s22, 0
    %p154 = por %p152, %p153
    %s156 = sadd.s32 %s155, 1
    %p159 = scmp.eq.s32.totalorder %s16, 1
    %p160 = scmp.ne.s32.totalorder %s155, %s157
    %p161 = scmp.eq.s32.totalorder %s16, 0
    %p162 = por %p160, %p161
    %p163 = scmp.ne.s32.totalorder %s155, %s157
    %p164 = scmp.eq.s32.totalorder %s21, 1
    %p165 = por %p163, %p164
    %p166 = scmp.ne.s32.totalorder %s157, %s158
    %p167 = scmp.eq.s32.totalorder %s21, 0
    %p168 = por %p166, %p167
    %p169 = scmp.ne.s32.totalorder %s157, %s158
    %p170 = scmp.eq.s32.totalorder %s22, 1
    %p171 = por %p169, %p170
    %p173 = scmp.ne.s32.totalorder %s158, %s172
    %p174 = scmp.eq.s32.totalorder %s22, 0
    %p175 = por %p173, %p174
    %s177 = sadd.s32 %s176, 1
    %p180 = scmp.eq.s32.totalorder %s16, 1
    %p181 = scmp.ne.s32.totalorder %s176, %s178
    %p182 = scmp.eq.s32.totalorder %s16, 0
    %p183 = por %p181, %p182
    %p184 = scmp.ne.s32.totalorder %s176, %s178
    %p185 = scmp.eq.s32.totalorder %s21, 1
    %p186 = por %p184, %p185
    %p187 = scmp.ne.s32.totalorder %s178, %s179
    %p188 = scmp.eq.s32.totalorder %s21, 0
    %p189 = por %p187, %p188
    %p190 = scmp.ne.s32.totalorder %s178, %s179
    %p191 = scmp.eq.s32.totalorder %s22, 1
    %p192 = por %p190, %p191
    %p194 = scmp.ne.s32.totalorder %s179, %s193
    %p195 = scmp.eq.s32.totalorder %s22, 0
    %p196 = por %p194, %p195
    %s198 = sadd.s32 %s197, 1
    %p201 = scmp.eq.s32.totalorder %s16, 1
    %p202 = scmp.ne.s32.totalorder %s197, %s199
    %p203 = scmp.eq.s32.totalorder %s16, 0
    %p204 = por %p202, %p203
    %p205 = scmp.ne.s32.totalorder %s197, %s199
    %p206 = scmp.eq.s32.totalorder %s21, 1
    %p207 = por %p205, %p206
    %p208 = scmp.ne.s32.totalorder %s199, %s200
    %p209 = scmp.eq.s32.totalorder %s21, 0
    %p210 = por %p208, %p209
    %p211 = scmp.ne.s32.totalorder %s199, %s200
    %p212 = scmp.eq.s32.totalorder %s22, 1
    %p213 = por %p211, %p212
    %p215 = scmp.ne.s32.totalorder %s200, %s214
    %p216 = scmp.eq.s32.totalorder %s22, 0
    %p217 = por %p215, %p216
    %s219 = sadd.s32 %s218, 1
    %p222 = scmp.eq.s32.totalorder %s16, 1
    %p223 = scmp.ne.s32.totalorder %s218, %s220
    %p224 = scmp.eq.s32.totalorder %s16, 0
    %p225 = por %p223, %p224
    %p226 = scmp.ne.s32.totalorder %s218, %s220
    %p227 = scmp.eq.s32.totalorder %s21, 1
    %p228 = por %p226, %p227
    %p229 = scmp.ne.s32.totalorder %s220, %s221
    %p230 = scmp.eq.s32.totalorder %s21, 0
    %p231 = por %p229, %p230
    %p232 = scmp.ne.s32.totalorder %s220, %s221
    %p233 = scmp.eq.s32.totalorder %s22, 1
    %p234 = por %p232, %p233
    %p236 = scmp.ne.s32.totalorder %s221, %s235
    %p237 = scmp.eq.s32.totalorder %s22, 0
    %p238 = por %p236, %p237
    %s239 = ssub.s32 %s16, %s23
    %p240 = scmp.eq.s32.totalorder %s239, 0
    %s242 = sadd.s32 %s241, 1
    %s243 = scalar_select %p240, %s241, %s242
    %p246 = pneg %p240
    %p247 = scmp.eq.s32.totalorder %s16, 1
    %p248 = por %p246, %p247
    %p249 = scmp.ne.s32.totalorder %s241, %s244
    %p250 = scmp.eq.s32.totalorder %s16, 0
    %p251 = por %p249, %p250
    %p252 = scmp.ne.s32.totalorder %s241, %s244
    %p253 = scmp.eq.s32.totalorder %s21, 1
    %p254 = por %p252, %p253
    %p255 = scmp.ne.s32.totalorder %s244, %s245
    %p256 = scmp.eq.s32.totalorder %s21, 0
    %p257 = por %p255, %p256
    %p258 = scmp.ne.s32.totalorder %s244, %s245
    %p259 = scmp.eq.s32.totalorder %s22, 1
    %p260 = por %p258, %p259
    %p262 = scmp.ne.s32.totalorder %s245, %s261
    %p263 = scmp.eq.s32.totalorder %s22, 0
    %p264 = por %p262, %p263
    %p265 = scmp.le.s32.totalorder 1, %s16
    %p266 = scmp.lt.s32.totalorder %s16, 3
    %p267 = pnand %p265, %p266
    %p268 = pneg %p267
    // Predicated region
    $region9: #{classifier_forward.1} parent=5 // pred_check
      _
    $region10: #{classifier_forward.1} parent=5 // pred_check_branch
      %270 = sbr.rel (%p267) target = $region12
    $region11: #{classifier_forward.1} parent=5 // pred_region
      %s271 = ssub.s32 %s16, 1
      // Predicated region
      $region13: #{classifier_forward.1} parent=11 // pred_check
        %p272 = pneg %p63
      $region14: #{classifier_forward.1} parent=11 // pred_check_branch
        %274 = sbr.rel (%p272) target = $region16
      $region15: #{classifier_forward.1} parent=11 // pred_region
        _
      $region16: #{classifier_forward.1} parent=11 // pred_fallthru
        _
      // Predicated region
      $region17: #{classifier_forward.1} parent=11 // pred_check
        %p275 = pneg %p84
      $region18: #{classifier_forward.1} parent=11 // pred_check_branch
        %277 = sbr.rel (%p275) target = $region20
      $region19: #{classifier_forward.1} parent=11 // pred_region
        _
      $region20: #{classifier_forward.1} parent=11 // pred_fallthru
        _
      // Predicated region
      $region21: #{classifier_forward.1} parent=11 // pred_check
        %p278 = pneg %p105
      $region22: #{classifier_forward.1} parent=11 // pred_check_branch
        %280 = sbr.rel (%p278) target = $region24
      $region23: #{classifier_forward.1} parent=11 // pred_region
        _
      $region24: #{classifier_forward.1} parent=11 // pred_fallthru
        _
      // Predicated region
      $region25: #{classifier_forward.1} parent=11 // pred_check
        %p281 = pneg %p126
      $region26: #{classifier_forward.1} parent=11 // pred_check_branch
        %283 = sbr.rel (%p281) target = $region28
      $region27: #{classifier_forward.1} parent=11 // pred_region
        _
      $region28: #{classifier_forward.1} parent=11 // pred_fallthru
        _
      // Predicated region
      $region29: #{classifier_forward.1} parent=11 // pred_check
        %p284 = pneg %p147
      $region30: #{classifier_forward.1} parent=11 // pred_check_branch
        %286 = sbr.rel (%p284) target = $region32
      $region31: #{classifier_forward.1} parent=11 // pred_region
        _
      $region32: #{classifier_forward.1} parent=11 // pred_fallthru
        _
      // Predicated region
      $region33: #{classifier_forward.1} parent=11 // pred_check
        %p287 = pneg %p168
      $region34: #{classifier_forward.1} parent=11 // pred_check_branch
        %289 = sbr.rel (%p287) target = $region36
      $region35: #{classifier_forward.1} parent=11 // pred_region
        _
      $region36: #{classifier_forward.1} parent=11 // pred_fallthru
        _
      // Predicated region
      $region37: #{classifier_forward.1} parent=11 // pred_check
        %p290 = pneg %p189
      $region38: #{classifier_forward.1} parent=11 // pred_check_branch
        %292 = sbr.rel (%p290) target = $region40
      $region39: #{classifier_forward.1} parent=11 // pred_region
        _
      $region40: #{classifier_forward.1} parent=11 // pred_fallthru
        _
      // Predicated region
      $region41: #{classifier_forward.1} parent=11 // pred_check
        %p293 = pneg %p210
      $region42: #{classifier_forward.1} parent=11 // pred_check_branch
        %295 = sbr.rel (%p293) target = $region44
      $region43: #{classifier_forward.1} parent=11 // pred_region
        _
      $region44: #{classifier_forward.1} parent=11 // pred_fallthru
        _
      // Predicated region
      $region45: #{classifier_forward.1} parent=11 // pred_check
        %p296 = pneg %p231
      $region46: #{classifier_forward.1} parent=11 // pred_check_branch
        %298 = sbr.rel (%p296) target = $region48
      $region47: #{classifier_forward.1} parent=11 // pred_region
        _
      $region48: #{classifier_forward.1} parent=11 // pred_fallthru
        _
    $region12: #{classifier_forward.1} parent=5 // pred_fallthru
      _
    %p299 = scmp.lt.s32.totalorder %s16, 2
    // Predicated region
    $region49: #{classifier_forward.1} parent=5 // pred_check
      %p300 = pneg %p299
    $region50: #{classifier_forward.1} parent=5 // pred_check_branch
      %302 = sbr.rel (%p300) target = $region52
    $region51: #{classifier_forward.1} parent=5 // pred_region
      // Predicated region
      $region53: #{classifier_forward.1} parent=51 // pred_check
        %p303 = pneg %p36
      $region54: #{classifier_forward.1} parent=51 // pred_check_branch
        %305 = sbr.rel (%p303) target = $region56
      $region55: #{classifier_forward.1} parent=51 // pred_region
        %p306 = scmp.lt.s32.totalorder %s16, 1
        %s307 = scalar_select %p306, %s16, 1
        %s308 = smul.addr %s307, 16
        %s309 = smul.addr %s308, 4
        %s310 = scalar_lea.vmem %s0, %s309
      $region56: #{classifier_forward.1} parent=51 // pred_fallthru
        _
    $region52: #{classifier_forward.1} parent=5 // pred_fallthru
      _
    %p311 = scmp.le.s32.totalorder 1, %s16
    %p312 = scmp.lt.s32.totalorder %s16, 3
    %p313 = pnand %p311, %p312
    %p314 = pneg %p313
    // Predicated region
    $region57: #{classifier_forward.1} parent=5 // pred_check
      _
    $region58: #{classifier_forward.1} parent=5 // pred_check_branch
      %316 = sbr.rel (%p313) target = $region60
    $region59: #{classifier_forward.1} parent=5 // pred_region
      %s317 = ssub.s32 %s16, 1
      %p318 = scmp.lt.s32.totalorder %s21, 1
      %s319 = scalar_select %p318, %s21, 1
      %s320 = smul.addr %s319, 16
      %s321 = smul.addr %s320, 4
      %s322 = scalar_lea.vmem %s0, %s321
      %p323 = pneg %p42
      %p324 = pneg %p39
      %p325 = pneg %p63
      %p326 = pneg %p60
      %p327 = pneg %p84
      %p328 = pneg %p81
      %p329 = pneg %p105
      %p330 = pneg %p102
      %p331 = pneg %p126
      %p332 = pneg %p123
      %p333 = pneg %p147
      %p334 = pneg %p144
      %p335 = pneg %p168
      %p336 = pneg %p165
      %p337 = pneg %p189
      %p338 = pneg %p186
      %p339 = pneg %p210
      %p340 = pneg %p207
      %p341 = pneg %p231
      %p342 = pneg %p228
      %p343 = pneg %p257
      %p344 = pneg %p254
      %p345 = scmp.lt.s32.totalorder %s21, 1
      %s346 = scalar_select %p345, %s21, 1
      %s347 = smul.addr %s346, 8
      %s348 = scalar_lea.vmem %s10, %s347
      %p349 = scmp.lt.s32.totalorder %s21, 1
      %s350 = scalar_select %p349, %s21, 1
      %s351 = smul.addr %s350, 16
      %s352 = smul.addr %s351, 4
      %s353 = scalar_lea.vmem %s0, %s352
      %p354 = scmp.lt.s32.totalorder %s21, 1
      %s355 = scalar_select %p354, %s21, 1
      %s356 = smul.addr %s355, 8
      %s357 = scalar_lea.vmem %s10, %s356
      %v359 = vld [vmem:[%s353] sm:$0xff]
      %v360 = vld [vmem:[%s353 + $0x8] sm:$0xff]
      %v361 = vld [vmem:[%s353 + $0x10] sm:$0xff]
      %v362 = vld [vmem:[%s353 + $0x18] sm:$0xff]
      %v363 = vld [vmem:[%s353 + $0x20] sm:$0xff]
      %v364 = vld [vmem:[%s353 + $0x28] sm:$0xff]
      %v365 = vld [vmem:[%s353 + $0x30] sm:$0xff]
      %v366 = vld [vmem:[%s353 + $0x38] sm:$0xff]
      %v367 = vld [vmem:[%s1] sm:$0xf]
      %v368 = vld [vmem:[%s1 + $0x4] sm:$0xf]
      %v369 = vld [vmem:[%s1 + $0x8] sm:$0xf]
      %v370 = vld [vmem:[%s1 + $0xc] sm:$0xf]
      %v371 = vld [vmem:[%s1 + $0x10] sm:$0xf]
      %v372 = vld [vmem:[%s1 + $0x14] sm:$0xf]
      %v373 = vld [vmem:[%s1 + $0x18] sm:$0xf]
      %v374 = vld [vmem:[%s1 + $0x1c] sm:$0xf]
      %v375 = vld [vmem:[%s1 + $0x20] sm:$0xf]
      %v376 = vld [vmem:[%s1 + $0x24] sm:$0xf]
      %v377 = vld [vmem:[%s1 + $0x28] sm:$0xf]
      %v378 = vld [vmem:[%s1 + $0x2c] sm:$0xf]
      %v379 = vld [vmem:[%s1 + $0x30] sm:$0xf]
      %v380 = vld [vmem:[%s1 + $0x34] sm:$0xf]
      %v381 = vld [vmem:[%s1 + $0x38] sm:$0xf]
      %v382 = vld [vmem:[%s1 + $0x3c] sm:$0xf]
      %v383 = vld [vmem:[%s1 + $0x40] sm:$0xf]
      %v384 = vld [vmem:[%s1 + $0x44] sm:$0xf]
      %v385 = vld [vmem:[%s1 + $0x48] sm:$0xf]
      %v386 = vld [vmem:[%s1 + $0x4c] sm:$0xf]
      %v387 = vld [vmem:[%s1 + $0x50] sm:$0xf]
      %v388 = vld [vmem:[%s1 + $0x54] sm:$0xf]
      %v389 = vld [vmem:[%s1 + $0x58] sm:$0xf]
      %v390 = vld [vmem:[%s1 + $0x5c] sm:$0xf]
      %v391 = vld [vmem:[%s1 + $0x60] sm:$0xf]
      %v392 = vld [vmem:[%s1 + $0x64] sm:$0xf]
      %v393 = vld [vmem:[%s1 + $0x68] sm:$0xf]
      %v394 = vld [vmem:[%s1 + $0x6c] sm:$0xf]
      %v395 = vld [vmem:[%s1 + $0x70] sm:$0xf]
      %v396 = vld [vmem:[%s1 + $0x74] sm:$0xf]
      %v397 = vld [vmem:[%s1 + $0x78] sm:$0xf]
      %v398 = vld [vmem:[%s1 + $0x7c] sm:$0xf]
      %v399 = vld [vmem:[%s3] sm:$0x1]
      %v400 = vlaneseq
      %v401 = vshrl.u32 %v400, 7
      %v402 = vsub.s32 0, %v401
      %v403 = vrot.slane %v399, %v402
      %v412 = vunpack.c.l.b16 %v359
      %v413 = vunpack.c.h.b16 %v359
      %v414 = vunpack.c.l.b16 %v360
      %v415 = vunpack.c.h.b16 %v360
      %v416 = vunpack.c.l.b16 %v361
      %v417 = vunpack.c.h.b16 %v361
      %v418 = vunpack.c.l.b16 %v362
      %v419 = vunpack.c.h.b16 %v362
      %v420 = vunpack.c.l.b16 %v363
      %v421 = vunpack.c.h.b16 %v363
      %v422 = vunpack.c.l.b16 %v364
      %v423 = vunpack.c.h.b16 %v364
      %v424 = vunpack.c.l.b16 %v365
      %v425 = vunpack.c.h.b16 %v365
      %v426 = vunpack.c.l.b16 %v366
      %v427 = vunpack.c.h.b16 %v366
      %v428 = vpack.c.b16 %v414, %v412
      %v429 = vpack.c.b16 %v415, %v413
      %v430 = vpack.c.b16 %v418, %v416
      %v431 = vpack.c.b16 %v419, %v417
      %v432 = vpack.c.b16 %v422, %v420
      %v433 = vpack.c.b16 %v423, %v421
      %v434 = vpack.c.b16 %v426, %v424
      %v435 = vpack.c.b16 %v427, %v425
      %v476 = vunpack.c.l.b16 %v367
      %v477 = vunpack.c.l.b16 %v368
      %v478 = vunpack.c.l.b16 %v369
      %v479 = vunpack.c.l.b16 %v370
      %v480 = vunpack.c.l.b16 %v371
      %v481 = vunpack.c.l.b16 %v372
      %v482 = vunpack.c.l.b16 %v373
      %v483 = vunpack.c.l.b16 %v374
      %v484 = vunpack.c.l.b16 %v375
      %v485 = vunpack.c.l.b16 %v376
      %v486 = vunpack.c.l.b16 %v377
      %v487 = vunpack.c.l.b16 %v378
      %v488 = vunpack.c.l.b16 %v379
      %v489 = vunpack.c.l.b16 %v380
      %v490 = vunpack.c.l.b16 %v381
      %v491 = vunpack.c.l.b16 %v382
      %v492 = vunpack.c.l.b16 %v383
      %v493 = vunpack.c.l.b16 %v384
      %v494 = vunpack.c.l.b16 %v385
      %v495 = vunpack.c.l.b16 %v386
      %v496 = vunpack.c.l.b16 %v387
      %v497 = vunpack.c.l.b16 %v388
      %v498 = vunpack.c.l.b16 %v389
      %v499 = vunpack.c.l.b16 %v390
      %v500 = vunpack.c.l.b16 %v391
      %v501 = vunpack.c.l.b16 %v392
      %v502 = vunpack.c.l.b16 %v393
      %v503 = vunpack.c.l.b16 %v394
      %v504 = vunpack.c.l.b16 %v395
      %v505 = vunpack.c.l.b16 %v396
      %v506 = vunpack.c.l.b16 %v397
      %v507 = vunpack.c.l.b16 %v398
      %v508 = vpack.c.b16 %v477, %v476
      %v509 = vpack.c.b16 %v479, %v478
      %v510 = vpack.c.b16 %v481, %v480
      %v511 = vpack.c.b16 %v483, %v482
      %v512 = vpack.c.b16 %v485, %v484
      %v513 = vpack.c.b16 %v487, %v486
      %v514 = vpack.c.b16 %v489, %v488
      %v515 = vpack.c.b16 %v491, %v490
      %v516 = vpack.c.b16 %v493, %v492
      %v517 = vpack.c.b16 %v495, %v494
      %v518 = vpack.c.b16 %v497, %v496
      %v519 = vpack.c.b16 %v499, %v498
      %v520 = vpack.c.b16 %v501, %v500
      %v521 = vpack.c.b16 %v503, %v502
      %v522 = vpack.c.b16 %v505, %v504
      %v523 = vpack.c.b16 %v507, %v506
      %540 = vmatprep.subr.bf16.mxu0 0
      %541 = vmatpush1.bf16.msra.mxu0 %v515
      %542 = vmatprep.subr.bf16.mxu0 0
      %543 = vmatpush1.bf16.msra.mxu0 %v514
      %544 = vmatprep.subr.bf16.mxu0 0
      %545 = vmatpush1.bf16.msra.mxu0 %v513
      %546 = vmatprep.subr.bf16.mxu0 0
      %547 = vmatpush1.bf16.msra.mxu0 %v512
      %548 = vmatprep.subr.bf16.mxu0 0
      %549 = vmatpush1.bf16.msra.mxu0 %v511
      %550 = vmatprep.subr.bf16.mxu0 0
      %551 = vmatpush1.bf16.msra.mxu0 %v510
      %552 = vmatprep.subr.bf16.mxu0 0
      %553 = vmatpush1.bf16.msra.mxu0 %v509
      %554 = vmatprep.subr.bf16.mxu0 0
      %555 = vmatpush1.bf16.msra.mxu0 %v508
      %556 = vmatprep.subr.bf16.mxu0 0
      %557 = vmatpush2.bf16.msra.mxu0 %v523
      %558 = vmatprep.subr.bf16.mxu0 0
      %559 = vmatpush2.bf16.msra.mxu0 %v522
      %560 = vmatprep.subr.bf16.mxu0 0
      %561 = vmatpush2.bf16.msra.mxu0 %v521
      %562 = vmatprep.subr.bf16.mxu0 0
      %563 = vmatpush2.bf16.msra.mxu0 %v520
      %564 = vmatprep.subr.bf16.mxu0 0
      %565 = vmatpush2.bf16.msra.mxu0 %v519
      %566 = vmatprep.subr.bf16.mxu0 0
      %567 = vmatpush2.bf16.msra.mxu0 %v518
      %568 = vmatprep.subr.bf16.mxu0 0
      %569 = vmatpush2.bf16.msra.mxu0 %v517
      %570 = vmatprep.subr.bf16.mxu0 0
      %571 = vmatpush2.bf16.msra.mxu0 %v516
      %572 = vmatprep.mubr.bf16.mxu0 %v429
      %573 = vmatmul.mubr.bf16.gmra.mxu0 %v428
      %v574 = vpop.f32.mrf.mxu0
      %v575 = vadd.f32 %v403, %v574
      %v576 = vpop.f32.mrf.mxu0
      %v577 = vpop.f32.mrf.mxu0
      %v578 = vadd.f32 %v403, %v577
      %v579 = vpop.f32.mrf.mxu0
      %580 = vmatprep.mubr.bf16.mxu0 %v431
      %581 = vmatmul.mubr.bf16.gmra.mxu0 %v430
      %v582 = vpop.f32.mrf.mxu0
      %v583 = vadd.f32 %v403, %v582
      %v584 = vpop.f32.mrf.mxu0
      %v585 = vpop.f32.mrf.mxu0
      %v586 = vadd.f32 %v403, %v585
      %v587 = vpop.f32.mrf.mxu0
      %588 = vmatprep.mubr.bf16.mxu0 %v433
      %589 = vmatmul.mubr.bf16.gmra.mxu0 %v432
      %v590 = vpop.f32.mrf.mxu0
      %v591 = vadd.f32 %v403, %v590
      %v592 = vpop.f32.mrf.mxu0
      %v593 = vpop.f32.mrf.mxu0
      %v594 = vadd.f32 %v403, %v593
      %v595 = vpop.f32.mrf.mxu0
      %596 = vmatprep.mubr.bf16.mxu0 %v435
      %597 = vmatmul.mubr.bf16.gmra.mxu0 %v434
      %v598 = vpop.f32.mrf.mxu0
      %v599 = vadd.f32 %v403, %v598
      %v600 = vpop.f32.mrf.mxu0
      %v601 = vpop.f32.mrf.mxu0
      %v602 = vadd.f32 %v403, %v601
      %v603 = vpop.f32.mrf.mxu0
      %604 = vdwg.mxu0
      %v605 = vmax.f32 %v575, 0.0
      %v606 = vmax.f32 %v578, 0.0
      %v607 = vmax.f32 %v583, 0.0
      %v608 = vmax.f32 %v586, 0.0
      %v609 = vmax.f32 %v591, 0.0
      %v610 = vmax.f32 %v594, 0.0
      %v611 = vmax.f32 %v599, 0.0
      %v612 = vmax.f32 %v602, 0.0
      %v613 = vpack.c.bf16 %v606, %v605
      %v614 = vpack.c.bf16 %v608, %v607
      %v615 = vpack.c.bf16 %v610, %v609
      %v616 = vpack.c.bf16 %v612, %v611
      %v617 = vld [vmem:[%s4] sm:$0xf]
      %v618 = vld [vmem:[%s4 + $0x4] sm:$0xf]
      %v619 = vld [vmem:[%s4 + $0x8] sm:$0xf]
      %v620 = vld [vmem:[%s4 + $0xc] sm:$0xf]
      %v621 = vld [vmem:[%s4 + $0x10] sm:$0xf]
      %v622 = vld [vmem:[%s4 + $0x14] sm:$0xf]
      %v623 = vld [vmem:[%s4 + $0x18] sm:$0xf]
      %v624 = vld [vmem:[%s4 + $0x1c] sm:$0xf]
      %v625 = vld [vmem:[%s4 + $0x20] sm:$0xf]
      %v626 = vld [vmem:[%s4 + $0x24] sm:$0xf]
      %v627 = vld [vmem:[%s4 + $0x28] sm:$0xf]
      %v628 = vld [vmem:[%s4 + $0x2c] sm:$0xf]
      %v629 = vld [vmem:[%s4 + $0x30] sm:$0xf]
      %v630 = vld [vmem:[%s4 + $0x34] sm:$0xf]
      %v631 = vld [vmem:[%s4 + $0x38] sm:$0xf]
      %v632 = vld [vmem:[%s4 + $0x3c] sm:$0xf]
      %v633 = vld [vmem:[%s4 + $0x40] sm:$0xf]
      %v634 = vld [vmem:[%s4 + $0x44] sm:$0xf]
      %v653 = vunpack.c.l.b16 %v617
      %v654 = vunpack.c.l.b16 %v618
      %v655 = vunpack.c.l.b16 %v619
      %v656 = vunpack.c.l.b16 %v620
      %v657 = vunpack.c.l.b16 %v621
      %v658 = vunpack.c.l.b16 %v622
      %v659 = vunpack.c.l.b16 %v623
      %v660 = vunpack.c.l.b16 %v624
      %v661 = vunpack.c.l.b16 %v625
      %v662 = vunpack.c.l.b16 %v626
      %v663 = vunpack.c.l.b16 %v627
      %v664 = vunpack.c.l.b16 %v628
      %v665 = vunpack.c.l.b16 %v629
      %v666 = vunpack.c.l.b16 %v630
      %v667 = vunpack.c.l.b16 %v631
      %v668 = vunpack.c.l.b16 %v632
      %v669 = vunpack.c.l.b16 %v633
      %v670 = vunpack.c.l.b16 %v634
      %v671 = vpack.c.b16 %v654, %v653
      %v672 = vpack.c.b16 %v656, %v655
      %v673 = vpack.c.b16 %v658, %v657
      %v674 = vpack.c.b16 %v660, %v659
      %v675 = vpack.c.b16 %v662, %v661
      %v676 = vpack.c.b16 %v664, %v663
      %v677 = vpack.c.b16 %v666, %v665
      %v678 = vpack.c.b16 %v668, %v667
      %v679 = vpack.c.b16 %v670, %v669
      %vm680 = vcmask 523264
      %v682 = vsel %vm680, %v671, 0
      %v685 = vsel %vm680, %v672, 0
      %v688 = vsel %vm680, %v673, 0
      %v691 = vsel %vm680, %v674, 0
      %v694 = vsel %vm680, %v675, 0
      %v697 = vsel %vm680, %v676, 0
      %v700 = vsel %vm680, %v677, 0
      %v703 = vsel %vm680, %v678, 0
      %v706 = vsel %vm680, %v679, 0
      %708 = vmatprep.subr.bf16.mxu0 0
      %709 = vmatpush1.bf16.msra.mxu0 0
      %710 = vmatprep.subr.bf16.mxu0 0
      %711 = vmatpush1.bf16.msra.mxu0 0
      %712 = vmatprep.subr.bf16.mxu0 0
      %713 = vmatpush1.bf16.msra.mxu0 0
      %714 = vmatprep.subr.bf16.mxu0 0
      %715 = vmatpush1.bf16.msra.mxu0 0
      %716 = vmatprep.subr.bf16.mxu0 0
      %717 = vmatpush1.bf16.msra.mxu0 %v616
      %718 = vmatprep.subr.bf16.mxu0 0
      %719 = vmatpush1.bf16.msra.mxu0 %v615
      %720 = vmatprep.subr.bf16.mxu0 0
      %721 = vmatpush1.bf16.msra.mxu0 %v614
      %722 = vmatprep.subr.bf16.mxu0 0
      %723 = vmatpush1.bf16.msra.mxu0 %v613
      %724 = vmatprep.subr.bf16.mxu0 0
      %725 = vmatpush2.bf16.msra.mxu0 0
      %726 = vmatprep.subr.bf16.mxu0 0
      %727 = vmatpush2.bf16.msra.mxu0 0
      %728 = vmatprep.subr.bf16.mxu0 0
      %729 = vmatpush2.bf16.msra.mxu0 0
      %730 = vmatprep.subr.bf16.mxu0 0
      %731 = vmatpush2.bf16.msra.mxu0 0
      %732 = vmatprep.subr.bf16.mxu0 0
      %733 = vmatpush2.bf16.msra.mxu0 0
      %734 = vmatprep.subr.bf16.mxu0 0
      %735 = vmatpush2.bf16.msra.mxu0 0
      %736 = vmatprep.subr.bf16.mxu0 0
      %737 = vmatpush2.bf16.msra.mxu0 0
      %738 = vmatprep.subr.bf16.mxu0 0
      %739 = vmatpush2.bf16.msra.mxu0 0
      %740 = vmatprep.mubr.bf16.mxu0 0
      %741 = vmatmul.mubr.bf16.gmra.mxu0 %v682
      %v742 = vpop.f32.mrf.mxu0
      %v743 = vadd.f32 0.0, %v742
      %v744 = vpop.f32.mrf.mxu0
      %v745 = vpop.f32.mrf.mxu0
      %v746 = vadd.f32 0.0, %v745
      %v747 = vpop.f32.mrf.mxu0
      %748 = vmatprep.mubr.bf16.mxu0 0
      %749 = vmatmul.mubr.bf16.gmra.mxu0 %v685
      %v750 = vpop.f32.mrf.mxu0
      %v751 = vadd.f32 0.0, %v750
      %v752 = vpop.f32.mrf.mxu0
      %v753 = vpop.f32.mrf.mxu0
      %v754 = vadd.f32 0.0, %v753
      %v755 = vpop.f32.mrf.mxu0
      %756 = vmatprep.mubr.bf16.mxu0 0
      %757 = vmatmul.mubr.bf16.gmra.mxu0 %v688
      %v758 = vpop.f32.mrf.mxu0
      %v759 = vadd.f32 0.0, %v758
      %v760 = vpop.f32.mrf.mxu0
      %v761 = vpop.f32.mrf.mxu0
      %v762 = vadd.f32 0.0, %v761
      %v763 = vpop.f32.mrf.mxu0
      %764 = vmatprep.mubr.bf16.mxu0 0
      %765 = vmatmul.mubr.bf16.gmra.mxu0 %v691
      %v766 = vpop.f32.mrf.mxu0
      %v767 = vadd.f32 0.0, %v766
      %v768 = vpop.f32.mrf.mxu0
      %v769 = vpop.f32.mrf.mxu0
      %v770 = vadd.f32 0.0, %v769
      %v771 = vpop.f32.mrf.mxu0
      %772 = vmatprep.mubr.bf16.mxu0 0
      %773 = vmatmul.mubr.bf16.gmra.mxu0 %v694
      %v774 = vpop.f32.mrf.mxu0
      %v775 = vadd.f32 0.0, %v774
      %v776 = vpop.f32.mrf.mxu0
      %v777 = vpop.f32.mrf.mxu0
      %v778 = vadd.f32 0.0, %v777
      %v779 = vpop.f32.mrf.mxu0
      %780 = vmatprep.mubr.bf16.mxu0 0
      %781 = vmatmul.mubr.bf16.gmra.mxu0 %v697
      %v782 = vpop.f32.mrf.mxu0
      %v783 = vadd.f32 0.0, %v782
      %v784 = vpop.f32.mrf.mxu0
      %v785 = vpop.f32.mrf.mxu0
      %v786 = vadd.f32 0.0, %v785
      %v787 = vpop.f32.mrf.mxu0
      %788 = vmatprep.mubr.bf16.mxu0 0
      %789 = vmatmul.mubr.bf16.gmra.mxu0 %v700
      %v790 = vpop.f32.mrf.mxu0
      %v791 = vadd.f32 0.0, %v790
      %v792 = vpop.f32.mrf.mxu0
      %v793 = vpop.f32.mrf.mxu0
      %v794 = vadd.f32 0.0, %v793
      %v795 = vpop.f32.mrf.mxu0
      %796 = vmatprep.mubr.bf16.mxu0 0
      %797 = vmatmul.mubr.bf16.gmra.mxu0 %v703
      %v798 = vpop.f32.mrf.mxu0
      %v799 = vadd.f32 0.0, %v798
      %v800 = vpop.f32.mrf.mxu0
      %v801 = vpop.f32.mrf.mxu0
      %v802 = vadd.f32 0.0, %v801
      %v803 = vpop.f32.mrf.mxu0
      %804 = vmatprep.mubr.bf16.mxu0 0
      %805 = vmatmul.mubr.bf16.gmra.mxu0 %v706
      %v806 = vpop.f32.mrf.mxu0
      %v807 = vadd.f32 0.0, %v806
      %v808 = vpop.f32.mrf.mxu0
      %v809 = vpop.f32.mrf.mxu0
      %v810 = vadd.f32 0.0, %v809
      %v811 = vpop.f32.mrf.mxu0
      %812 = vdwg.mxu0
      %v813 = vmax.f32 %v743, %v751
      %v814 = vmax.f32 %v746, %v754
      %v815 = vmax.f32 %v813, %v759
      %v816 = vmax.f32 %v814, %v762
      %v817 = vmax.f32 %v815, %v767
      %v818 = vmax.f32 %v816, %v770
      %v819 = vmax.f32 %v817, %v775
      %v820 = vmax.f32 %v818, %v778
      %v821 = vmax.f32 %v819, %v783
      %v822 = vmax.f32 %v820, %v786
      %v823 = vmax.f32 %v821, %v791
      %v824 = vmax.f32 %v822, %v794
      %v825 = vmax.f32 %v823, %v799
      %v826 = vmax.f32 %v824, %v802
      %v827 = vmax.f32 %v825, %v807
      %v828 = vmax.f32 %v826, %v810
      %v829 = vpack.c.bf16 %v828, %v827
      %v830 = vld [vmem:[%s5] sm:$0xf]
      %v831 = vld [vmem:[%s5 + $0x4] sm:$0xf]
      %v832 = vld [vmem:[%s5 + $0x8] sm:$0xf]
      %v833 = vld [vmem:[%s5 + $0xc] sm:$0xf]
      %v834 = vld [vmem:[%s5 + $0x10] sm:$0xf]
      %v835 = vld [vmem:[%s5 + $0x14] sm:$0xf]
      %v836 = vld [vmem:[%s5 + $0x18] sm:$0xf]
      %v837 = vld [vmem:[%s5 + $0x1c] sm:$0xf]
      %v838 = vld [vmem:[%s5 + $0x20] sm:$0xf]
      %v839 = vld [vmem:[%s5 + $0x24] sm:$0xf]
      %v840 = vld [vmem:[%s5 + $0x28] sm:$0xf]
      %v841 = vld [vmem:[%s5 + $0x2c] sm:$0xf]
      %v842 = vld [vmem:[%s5 + $0x30] sm:$0xf]
      %v843 = vld [vmem:[%s5 + $0x34] sm:$0xf]
      %v844 = vld [vmem:[%s5 + $0x38] sm:$0xf]
      %v845 = vld [vmem:[%s5 + $0x3c] sm:$0xf]
      %v846 = vld [vmem:[%s5 + $0x40] sm:$0xf]
      %v847 = vld [vmem:[%s5 + $0x44] sm:$0xf]
      %v866 = vunpack.c.l.b16 %v830
      %v867 = vunpack.c.l.b16 %v831
      %v868 = vunpack.c.l.b16 %v832
      %v869 = vunpack.c.l.b16 %v833
      %v870 = vunpack.c.l.b16 %v834
      %v871 = vunpack.c.l.b16 %v835
      %v872 = vunpack.c.l.b16 %v836
      %v873 = vunpack.c.l.b16 %v837
      %v874 = vunpack.c.l.b16 %v838
      %v875 = vunpack.c.l.b16 %v839
      %v876 = vunpack.c.l.b16 %v840
      %v877 = vunpack.c.l.b16 %v841
      %v878 = vunpack.c.l.b16 %v842
      %v879 = vunpack.c.l.b16 %v843
      %v880 = vunpack.c.l.b16 %v844
      %v881 = vunpack.c.l.b16 %v845
      %v882 = vunpack.c.l.b16 %v846
      %v883 = vunpack.c.l.b16 %v847
      %v884 = vpack.c.b16 %v867, %v866
      %v885 = vpack.c.b16 %v869, %v868
      %v886 = vpack.c.b16 %v871, %v870
      %v887 = vpack.c.b16 %v873, %v872
      %v888 = vpack.c.b16 %v875, %v874
      %v889 = vpack.c.b16 %v877, %v876
      %v890 = vpack.c.b16 %v879, %v878
      %v891 = vpack.c.b16 %v881, %v880
      %v892 = vpack.c.b16 %v883, %v882
      %vm893 = vcmask 130048
      %v895 = vsel %vm893, %v884, 0
      %v898 = vsel %vm893, %v885, 0
      %v901 = vsel %vm893, %v886, 0
      %v904 = vsel %vm893, %v887, 0
      %v907 = vsel %vm893, %v888, 0
      %v910 = vsel %vm893, %v889, 0
      %v913 = vsel %vm893, %v890, 0
      %v916 = vsel %vm893, %v891, 0
      %v919 = vsel %vm893, %v892, 0
      %921 = vmatprep.subr.bf16.mxu0 0
      %922 = vmatpush1.bf16.msra.mxu0 0
      %923 = vmatprep.subr.bf16.mxu0 0
      %924 = vmatpush1.bf16.msra.mxu0 0
      %925 = vmatprep.subr.bf16.mxu0 0
      %926 = vmatpush1.bf16.msra.mxu0 0
      %927 = vmatprep.subr.bf16.mxu0 0
      %928 = vmatpush1.bf16.msra.mxu0 0
      %929 = vmatprep.subr.bf16.mxu0 0
      %930 = vmatpush1.bf16.msra.mxu0 0
      %931 = vmatprep.subr.bf16.mxu0 0
      %932 = vmatpush1.bf16.msra.mxu0 0
      %933 = vmatprep.subr.bf16.mxu0 0
      %934 = vmatpush1.bf16.msra.mxu0 0
      %935 = vmatprep.subr.bf16.mxu0 0
      %936 = vmatpush1.bf16.msra.mxu0 %v829
      %937 = vmatprep.subr.bf16.mxu0 0
      %938 = vmatpush2.bf16.msra.mxu0 0
      %939 = vmatprep.subr.bf16.mxu0 0
      %940 = vmatpush2.bf16.msra.mxu0 0
      %941 = vmatprep.subr.bf16.mxu0 0
      %942 = vmatpush2.bf16.msra.mxu0 0
      %943 = vmatprep.subr.bf16.mxu0 0
      %944 = vmatpush2.bf16.msra.mxu0 0
      %945 = vmatprep.subr.bf16.mxu0 0
      %946 = vmatpush2.bf16.msra.mxu0 0
      %947 = vmatprep.subr.bf16.mxu0 0
      %948 = vmatpush2.bf16.msra.mxu0 0
      %949 = vmatprep.subr.bf16.mxu0 0
      %950 = vmatpush2.bf16.msra.mxu0 0
      %951 = vmatprep.subr.bf16.mxu0 0
      %952 = vmatpush2.bf16.msra.mxu0 0
      %953 = vmatprep.mubr.bf16.mxu0 0
      %954 = vmatmul.mubr.bf16.gmra.mxu0 %v895
      %v955 = vpop.f32.mrf.mxu0
      %v956 = vadd.f32 0.0, %v955
      %v957 = vpop.f32.mrf.mxu0
      %v958 = vpop.f32.mrf.mxu0
      %v959 = vadd.f32 0.0, %v958
      %v960 = vpop.f32.mrf.mxu0
      %961 = vmatprep.mubr.bf16.mxu0 0
      %962 = vmatmul.mubr.bf16.gmra.mxu0 %v898
      %v963 = vpop.f32.mrf.mxu0
      %v964 = vadd.f32 0.0, %v963
      %v965 = vpop.f32.mrf.mxu0
      %v966 = vpop.f32.mrf.mxu0
      %v967 = vadd.f32 0.0, %v966
      %v968 = vpop.f32.mrf.mxu0
      %969 = vmatprep.mubr.bf16.mxu0 0
      %970 = vmatmul.mubr.bf16.gmra.mxu0 %v901
      %v971 = vpop.f32.mrf.mxu0
      %v972 = vadd.f32 0.0, %v971
      %v973 = vpop.f32.mrf.mxu0
      %v974 = vpop.f32.mrf.mxu0
      %v975 = vadd.f32 0.0, %v974
      %v976 = vpop.f32.mrf.mxu0
      %977 = vmatprep.mubr.bf16.mxu0 0
      %978 = vmatmul.mubr.bf16.gmra.mxu0 %v904
      %v979 = vpop.f32.mrf.mxu0
      %v980 = vadd.f32 0.0, %v979
      %v981 = vpop.f32.mrf.mxu0
      %v982 = vpop.f32.mrf.mxu0
      %v983 = vadd.f32 0.0, %v982
      %v984 = vpop.f32.mrf.mxu0
      %985 = vmatprep.mubr.bf16.mxu0 0
      %986 = vmatmul.mubr.bf16.gmra.mxu0 %v907
      %v987 = vpop.f32.mrf.mxu0
      %v988 = vadd.f32 0.0, %v987
      %v989 = vpop.f32.mrf.mxu0
      %v990 = vpop.f32.mrf.mxu0
      %v991 = vadd.f32 0.0, %v990
      %v992 = vpop.f32.mrf.mxu0
      %993 = vmatprep.mubr.bf16.mxu0 0
      %994 = vmatmul.mubr.bf16.gmra.mxu0 %v910
      %v995 = vpop.f32.mrf.mxu0
      %v996 = vadd.f32 0.0, %v995
      %v997 = vpop.f32.mrf.mxu0
      %v998 = vpop.f32.mrf.mxu0
      %v999 = vadd.f32 0.0, %v998
      %v1000 = vpop.f32.mrf.mxu0
      %1001 = vmatprep.mubr.bf16.mxu0 0
      %1002 = vmatmul.mubr.bf16.gmra.mxu0 %v913
      %v1003 = vpop.f32.mrf.mxu0
      %v1004 = vadd.f32 0.0, %v1003
      %v1005 = vpop.f32.mrf.mxu0
      %v1006 = vpop.f32.mrf.mxu0
      %v1007 = vadd.f32 0.0, %v1006
      %v1008 = vpop.f32.mrf.mxu0
      %1009 = vmatprep.mubr.bf16.mxu0 0
      %1010 = vmatmul.mubr.bf16.gmra.mxu0 %v916
      %v1011 = vpop.f32.mrf.mxu0
      %v1012 = vadd.f32 0.0, %v1011
      %v1013 = vpop.f32.mrf.mxu0
      %v1014 = vpop.f32.mrf.mxu0
      %v1015 = vadd.f32 0.0, %v1014
      %v1016 = vpop.f32.mrf.mxu0
      %1017 = vmatprep.mubr.bf16.mxu0 0
      %1018 = vmatmul.mubr.bf16.gmra.mxu0 %v919
      %v1019 = vpop.f32.mrf.mxu0
      %v1020 = vadd.f32 0.0, %v1019
      %v1021 = vpop.f32.mrf.mxu0
      %v1022 = vpop.f32.mrf.mxu0
      %v1023 = vadd.f32 0.0, %v1022
      %v1024 = vpop.f32.mrf.mxu0
      %1025 = vdwg.mxu0
      %v1026 = vpack.c.bf16 %v959, %v956
      %v1027 = vpack.c.bf16 %v967, %v964
      %v1028 = vpack.c.bf16 %v975, %v972
      %v1029 = vpack.c.bf16 %v983, %v980
      %v1030 = vpack.c.bf16 %v991, %v988
      %v1031 = vpack.c.bf16 %v999, %v996
      %v1032 = vpack.c.bf16 %v1007, %v1004
      %v1033 = vpack.c.bf16 %v1015, %v1012
      %v1034 = vpack.c.bf16 %v1023, %v1020
      %v1035 = vld [vmem:[%s2] sm:$0xf]
      %v1036 = vld [vmem:[%s2 + $0x4] sm:$0xf]
      %v1037 = vld [vmem:[%s2 + $0x8] sm:$0xf]
      %v1038 = vld [vmem:[%s2 + $0xc] sm:$0xf]
      %v1039 = vld [vmem:[%s2 + $0x10] sm:$0xf]
      %v1040 = vld [vmem:[%s2 + $0x14] sm:$0xf]
      %v1041 = vld [vmem:[%s2 + $0x18] sm:$0xf]
      %v1042 = vld [vmem:[%s2 + $0x1c] sm:$0xf]
      %v1043 = vld [vmem:[%s2 + $0x20] sm:$0xf]
      %v1044 = vld [vmem:[%s2 + $0x24] sm:$0xf]
      %v1045 = vld [vmem:[%s2 + $0x28] sm:$0xf]
      %v1046 = vld [vmem:[%s2 + $0x2c] sm:$0xf]
      %v1047 = vld [vmem:[%s2 + $0x30] sm:$0xf]
      %v1048 = vld [vmem:[%s2 + $0x34] sm:$0xf]
      %v1049 = vld [vmem:[%s2 + $0x38] sm:$0xf]
      %v1050 = vld [vmem:[%s2 + $0x3c] sm:$0xf]
      %s1051 = scalar_lea.vmem %s2, 64
      %v1052 = vld [vmem:[%s1051] sm:$0xf]
      %v1053 = vld [vmem:[%s1051 + $0x4] sm:$0xf]
      %v1054 = vld [vmem:[%s1051 + $0x8] sm:$0xf]
      %v1055 = vld [vmem:[%s1051 + $0xc] sm:$0xf]
      %v1056 = vld [vmem:[%s1051 + $0x10] sm:$0xf]
      %v1057 = vld [vmem:[%s1051 + $0x14] sm:$0xf]
      %v1058 = vld [vmem:[%s1051 + $0x18] sm:$0xf]
      %v1059 = vld [vmem:[%s1051 + $0x1c] sm:$0xf]
      %v1060 = vld [vmem:[%s1051 + $0x20] sm:$0xf]
      %v1061 = vld [vmem:[%s1051 + $0x24] sm:$0xf]
      %v1062 = vld [vmem:[%s1051 + $0x28] sm:$0xf]
      %v1063 = vld [vmem:[%s1051 + $0x2c] sm:$0xf]
      %v1064 = vld [vmem:[%s1051 + $0x30] sm:$0xf]
      %v1065 = vld [vmem:[%s1051 + $0x34] sm:$0xf]
      %v1066 = vld [vmem:[%s1051 + $0x38] sm:$0xf]
      %v1067 = vld [vmem:[%s1051 + $0x3c] sm:$0xf]
      %v1084 = vunpack.c.l.b16 %v1052
      %v1085 = vunpack.c.l.b16 %v1053
      %v1086 = vunpack.c.l.b16 %v1054
      %v1087 = vunpack.c.l.b16 %v1055
      %v1088 = vunpack.c.l.b16 %v1056
      %v1089 = vunpack.c.l.b16 %v1057
      %v1090 = vunpack.c.l.b16 %v1058
      %v1091 = vunpack.c.l.b16 %v1059
      %v1092 = vunpack.c.l.b16 %v1060
      %v1093 = vunpack.c.l.b16 %v1061
      %v1094 = vunpack.c.l.b16 %v1062
      %v1095 = vunpack.c.l.b16 %v1063
      %v1096 = vunpack.c.l.b16 %v1064
      %v1097 = vunpack.c.l.b16 %v1065
      %v1098 = vunpack.c.l.b16 %v1066
      %v1099 = vunpack.c.l.b16 %v1067
      %v1100 = vpack.c.b16 %v1085, %v1084
      %v1101 = vpack.c.b16 %v1087, %v1086
      %v1102 = vpack.c.b16 %v1089, %v1088
      %v1103 = vpack.c.b16 %v1091, %v1090
      %v1104 = vpack.c.b16 %v1093, %v1092
      %v1105 = vpack.c.b16 %v1095, %v1094
      %v1106 = vpack.c.b16 %v1097, %v1096
      %v1107 = vpack.c.b16 %v1099, %v1098
      %1116 = vmatprep.subr.bf16.mxu0 0
      %1117 = vmatpush1.bf16.msra.mxu0 %v1107
      %1118 = vmatprep.subr.bf16.mxu0 0
      %1119 = vmatpush1.bf16.msra.mxu0 %v1106
      %1120 = vmatprep.subr.bf16.mxu0 0
      %1121 = vmatpush1.bf16.msra.mxu0 %v1105
      %1122 = vmatprep.subr.bf16.mxu0 0
      %1123 = vmatpush1.bf16.msra.mxu0 %v1104
      %1124 = vmatprep.subr.bf16.mxu0 0
      %1125 = vmatpush1.bf16.msra.mxu0 %v1103
      %1126 = vmatprep.subr.bf16.mxu0 0
      %1127 = vmatpush1.bf16.msra.mxu0 %v1102
      %1128 = vmatprep.subr.bf16.mxu0 0
      %1129 = vmatpush1.bf16.msra.mxu0 %v1101
      %1130 = vmatprep.subr.bf16.mxu0 0
      %1131 = vmatpush1.bf16.msra.mxu0 %v1100
      %1132 = vmatprep.subr.bf16.mxu0 0
      %1133 = vmatpush2.bf16.msra.mxu0 0
      %1134 = vmatprep.subr.bf16.mxu0 0
      %1135 = vmatpush2.bf16.msra.mxu0 0
      %1136 = vmatprep.subr.bf16.mxu0 0
      %1137 = vmatpush2.bf16.msra.mxu0 0
      %1138 = vmatprep.subr.bf16.mxu0 0
      %1139 = vmatpush2.bf16.msra.mxu0 0
      %1140 = vmatprep.subr.bf16.mxu0 0
      %1141 = vmatpush2.bf16.msra.mxu0 0
      %1142 = vmatprep.subr.bf16.mxu0 0
      %1143 = vmatpush2.bf16.msra.mxu0 0
      %1144 = vmatprep.subr.bf16.mxu0 0
      %1145 = vmatpush2.bf16.msra.mxu0 0
      %1146 = vmatprep.subr.bf16.mxu0 0
      %1147 = vmatpush2.bf16.msra.mxu0 0
      %1148 = vmatprep.mubr.bf16.mxu0 0
      %1149 = vmatmul.mubr.bf16.gmra.mxu0 %v1027
      %v1150 = vpop.f32.mrf.mxu0
      %v1151 = vadd.f32 0.0, %v1150
      %v1152 = vpop.f32.mrf.mxu0
      %v1153 = vpop.f32.mrf.mxu0
      %v1154 = vadd.f32 0.0, %v1153
      %v1155 = vpop.f32.mrf.mxu0
      %1156 = vdwg.mxu0
      %v1173 = vunpack.c.l.b16 %v1035
      %v1174 = vunpack.c.l.b16 %v1036
      %v1175 = vunpack.c.l.b16 %v1037
      %v1176 = vunpack.c.l.b16 %v1038
      %v1177 = vunpack.c.l.b16 %v1039
      %v1178 = vunpack.c.l.b16 %v1040
      %v1179 = vunpack.c.l.b16 %v1041
      %v1180 = vunpack.c.l.b16 %v1042
      %v1181 = vunpack.c.l.b16 %v1043
      %v1182 = vunpack.c.l.b16 %v1044
      %v1183 = vunpack.c.l.b16 %v1045
      %v1184 = vunpack.c.l.b16 %v1046
      %v1185 = vunpack.c.l.b16 %v1047
      %v1186 = vunpack.c.l.b16 %v1048
      %v1187 = vunpack.c.l.b16 %v1049
      %v1188 = vunpack.c.l.b16 %v1050
      %v1189 = vpack.c.b16 %v1174, %v1173
      %v1190 = vpack.c.b16 %v1176, %v1175
      %v1191 = vpack.c.b16 %v1178, %v1177
      %v1192 = vpack.c.b16 %v1180, %v1179
      %v1193 = vpack.c.b16 %v1182, %v1181
      %v1194 = vpack.c.b16 %v1184, %v1183
      %v1195 = vpack.c.b16 %v1186, %v1185
      %v1196 = vpack.c.b16 %v1188, %v1187
      %1205 = vmatprep.subr.bf16.mxu0 0
      %1206 = vmatpush1.bf16.msra.mxu0 %v1196
      %1207 = vmatprep.subr.bf16.mxu0 0
      %1208 = vmatpush1.bf16.msra.mxu0 %v1195
      %1209 = vmatprep.subr.bf16.mxu0 0
      %1210 = vmatpush1.bf16.msra.mxu0 %v1194
      %1211 = vmatprep.subr.bf16.mxu0 0
      %1212 = vmatpush1.bf16.msra.mxu0 %v1193
      %1213 = vmatprep.subr.bf16.mxu0 0
      %1214 = vmatpush1.bf16.msra.mxu0 %v1192
      %1215 = vmatprep.subr.bf16.mxu0 0
      %1216 = vmatpush1.bf16.msra.mxu0 %v1191
      %1217 = vmatprep.subr.bf16.mxu0 0
      %1218 = vmatpush1.bf16.msra.mxu0 %v1190
      %1219 = vmatprep.subr.bf16.mxu0 0
      %1220 = vmatpush1.bf16.msra.mxu0 %v1189
      %1221 = vmatprep.subr.bf16.mxu0 0
      %1222 = vmatpush2.bf16.msra.mxu0 0
      %1223 = vmatprep.subr.bf16.mxu0 0
      %1224 = vmatpush2.bf16.msra.mxu0 0
      %1225 = vmatprep.subr.bf16.mxu0 0
      %1226 = vmatpush2.bf16.msra.mxu0 0
      %1227 = vmatprep.subr.bf16.mxu0 0
      %1228 = vmatpush2.bf16.msra.mxu0 0
      %1229 = vmatprep.subr.bf16.mxu0 0
      %1230 = vmatpush2.bf16.msra.mxu0 0
      %1231 = vmatprep.subr.bf16.mxu0 0
      %1232 = vmatpush2.bf16.msra.mxu0 0
      %1233 = vmatprep.subr.bf16.mxu0 0
      %1234 = vmatpush2.bf16.msra.mxu0 0
      %1235 = vmatprep.subr.bf16.mxu0 0
      %1236 = vmatpush2.bf16.msra.mxu0 0
      %1237 = vmatprep.mubr.bf16.mxu0 0
      %1238 = vmatmul.mubr.bf16.gmra.mxu0 %v1026
      %v1239 = vpop.f32.mrf.mxu0
      %v1240 = vadd.f32 %v1151, %v1239
      %v1241 = vpop.f32.mrf.mxu0
      %v1242 = vpop.f32.mrf.mxu0
      %v1243 = vadd.f32 %v1154, %v1242
      %v1244 = vpop.f32.mrf.mxu0
      %1245 = vdwg.mxu0
      %s1246 = scalar_lea.vmem %s2, 128
      %v1247 = vld [vmem:[%s1246] sm:$0xf]
      %v1248 = vld [vmem:[%s1246 + $0x4] sm:$0xf]
      %v1249 = vld [vmem:[%s1246 + $0x8] sm:$0xf]
      %v1250 = vld [vmem:[%s1246 + $0xc] sm:$0xf]
      %v1251 = vld [vmem:[%s1246 + $0x10] sm:$0xf]
      %v1252 = vld [vmem:[%s1246 + $0x14] sm:$0xf]
      %v1253 = vld [vmem:[%s1246 + $0x18] sm:$0xf]
      %v1254 = vld [vmem:[%s1246 + $0x1c] sm:$0xf]
      %v1255 = vld [vmem:[%s1246 + $0x20] sm:$0xf]
      %v1256 = vld [vmem:[%s1246 + $0x24] sm:$0xf]
      %v1257 = vld [vmem:[%s1246 + $0x28] sm:$0xf]
      %v1258 = vld [vmem:[%s1246 + $0x2c] sm:$0xf]
      %v1259 = vld [vmem:[%s1246 + $0x30] sm:$0xf]
      %v1260 = vld [vmem:[%s1246 + $0x34] sm:$0xf]
      %v1261 = vld [vmem:[%s1246 + $0x38] sm:$0xf]
      %v1262 = vld [vmem:[%s1246 + $0x3c] sm:$0xf]
      %v1279 = vunpack.c.l.b16 %v1247
      %v1280 = vunpack.c.l.b16 %v1248
      %v1281 = vunpack.c.l.b16 %v1249
      %v1282 = vunpack.c.l.b16 %v1250
      %v1283 = vunpack.c.l.b16 %v1251
      %v1284 = vunpack.c.l.b16 %v1252
      %v1285 = vunpack.c.l.b16 %v1253
      %v1286 = vunpack.c.l.b16 %v1254
      %v1287 = vunpack.c.l.b16 %v1255
      %v1288 = vunpack.c.l.b16 %v1256
      %v1289 = vunpack.c.l.b16 %v1257
      %v1290 = vunpack.c.l.b16 %v1258
      %v1291 = vunpack.c.l.b16 %v1259
      %v1292 = vunpack.c.l.b16 %v1260
      %v1293 = vunpack.c.l.b16 %v1261
      %v1294 = vunpack.c.l.b16 %v1262
      %v1295 = vpack.c.b16 %v1280, %v1279
      %v1296 = vpack.c.b16 %v1282, %v1281
      %v1297 = vpack.c.b16 %v1284, %v1283
      %v1298 = vpack.c.b16 %v1286, %v1285
      %v1299 = vpack.c.b16 %v1288, %v1287
      %v1300 = vpack.c.b16 %v1290, %v1289
      %v1301 = vpack.c.b16 %v1292, %v1291
      %v1302 = vpack.c.b16 %v1294, %v1293
      %1311 = vmatprep.subr.bf16.mxu0 0
      %1312 = vmatpush1.bf16.msra.mxu0 %v1302
      %1313 = vmatprep.subr.bf16.mxu0 0
      %1314 = vmatpush1.bf16.msra.mxu0 %v1301
      %1315 = vmatprep.subr.bf16.mxu0 0
      %1316 = vmatpush1.bf16.msra.mxu0 %v1300
      %1317 = vmatprep.subr.bf16.mxu0 0
      %1318 = vmatpush1.bf16.msra.mxu0 %v1299
      %1319 = vmatprep.subr.bf16.mxu0 0
      %1320 = vmatpush1.bf16.msra.mxu0 %v1298
      %1321 = vmatprep.subr.bf16.mxu0 0
      %1322 = vmatpush1.bf16.msra.mxu0 %v1297
      %1323 = vmatprep.subr.bf16.mxu0 0
      %1324 = vmatpush1.bf16.msra.mxu0 %v1296
      %1325 = vmatprep.subr.bf16.mxu0 0
      %1326 = vmatpush1.bf16.msra.mxu0 %v1295
      %1327 = vmatprep.subr.bf16.mxu0 0
      %1328 = vmatpush2.bf16.msra.mxu0 0
      %1329 = vmatprep.subr.bf16.mxu0 0
      %1330 = vmatpush2.bf16.msra.mxu0 0
      %1331 = vmatprep.subr.bf16.mxu0 0
      %1332 = vmatpush2.bf16.msra.mxu0 0
      %1333 = vmatprep.subr.bf16.mxu0 0
      %1334 = vmatpush2.bf16.msra.mxu0 0
      %1335 = vmatprep.subr.bf16.mxu0 0
      %1336 = vmatpush2.bf16.msra.mxu0 0
      %1337 = vmatprep.subr.bf16.mxu0 0
      %1338 = vmatpush2.bf16.msra.mxu0 0
      %1339 = vmatprep.subr.bf16.mxu0 0
      %1340 = vmatpush2.bf16.msra.mxu0 0
      %1341 = vmatprep.subr.bf16.mxu0 0
      %1342 = vmatpush2.bf16.msra.mxu0 0
      %1343 = vmatprep.mubr.bf16.mxu0 0
      %1344 = vmatmul.mubr.bf16.gmra.mxu0 %v1028
      %v1345 = vpop.f32.mrf.mxu0
      %v1346 = vadd.f32 0.0, %v1345
      %v1347 = vpop.f32.mrf.mxu0
      %v1348 = vpop.f32.mrf.mxu0
      %v1349 = vadd.f32 0.0, %v1348
      %v1350 = vpop.f32.mrf.mxu0
      %1351 = vdwg.mxu0
      %v1352 = vadd.f32 %v1240, %v1346
      %v1353 = vadd.f32 %v1243, %v1349
      %s1354 = scalar_lea.vmem %s2, 192
      %v1355 = vld [vmem:[%s1354] sm:$0xf]
      %v1356 = vld [vmem:[%s1354 + $0x4] sm:$0xf]
      %v1357 = vld [vmem:[%s1354 + $0x8] sm:$0xf]
      %v1358 = vld [vmem:[%s1354 + $0xc] sm:$0xf]
      %v1359 = vld [vmem:[%s1354 + $0x10] sm:$0xf]
      %v1360 = vld [vmem:[%s1354 + $0x14] sm:$0xf]
      %v1361 = vld [vmem:[%s1354 + $0x18] sm:$0xf]
      %v1362 = vld [vmem:[%s1354 + $0x1c] sm:$0xf]
      %v1363 = vld [vmem:[%s1354 + $0x20] sm:$0xf]
      %v1364 = vld [vmem:[%s1354 + $0x24] sm:$0xf]
      %v1365 = vld [vmem:[%s1354 + $0x28] sm:$0xf]
      %v1366 = vld [vmem:[%s1354 + $0x2c] sm:$0xf]
      %v1367 = vld [vmem:[%s1354 + $0x30] sm:$0xf]
      %v1368 = vld [vmem:[%s1354 + $0x34] sm:$0xf]
      %v1369 = vld [vmem:[%s1354 + $0x38] sm:$0xf]
      %v1370 = vld [vmem:[%s1354 + $0x3c] sm:$0xf]
      %v1387 = vunpack.c.l.b16 %v1355
      %v1388 = vunpack.c.l.b16 %v1356
      %v1389 = vunpack.c.l.b16 %v1357
      %v1390 = vunpack.c.l.b16 %v1358
      %v1391 = vunpack.c.l.b16 %v1359
      %v1392 = vunpack.c.l.b16 %v1360
      %v1393 = vunpack.c.l.b16 %v1361
      %v1394 = vunpack.c.l.b16 %v1362
      %v1395 = vunpack.c.l.b16 %v1363
      %v1396 = vunpack.c.l.b16 %v1364
      %v1397 = vunpack.c.l.b16 %v1365
      %v1398 = vunpack.c.l.b16 %v1366
      %v1399 = vunpack.c.l.b16 %v1367
      %v1400 = vunpack.c.l.b16 %v1368
      %v1401 = vunpack.c.l.b16 %v1369
      %v1402 = vunpack.c.l.b16 %v1370
      %v1403 = vpack.c.b16 %v1388, %v1387
      %v1404 = vpack.c.b16 %v1390, %v1389
      %v1405 = vpack.c.b16 %v1392, %v1391
      %v1406 = vpack.c.b16 %v1394, %v1393
      %v1407 = vpack.c.b16 %v1396, %v1395
      %v1408 = vpack.c.b16 %v1398, %v1397
      %v1409 = vpack.c.b16 %v1400, %v1399
      %v1410 = vpack.c.b16 %v1402, %v1401
      %1419 = vmatprep.subr.bf16.mxu0 0
      %1420 = vmatpush1.bf16.msra.mxu0 %v1410
      %1421 = vmatprep.subr.bf16.mxu0 0
      %1422 = vmatpush1.bf16.msra.mxu0 %v1409
      %1423 = vmatprep.subr.bf16.mxu0 0
      %1424 = vmatpush1.bf16.msra.mxu0 %v1408
      %1425 = vmatprep.subr.bf16.mxu0 0
      %1426 = vmatpush1.bf16.msra.mxu0 %v1407
      %1427 = vmatprep.subr.bf16.mxu0 0
      %1428 = vmatpush1.bf16.msra.mxu0 %v1406
      %1429 = vmatprep.subr.bf16.mxu0 0
      %1430 = vmatpush1.bf16.msra.mxu0 %v1405
      %1431 = vmatprep.subr.bf16.mxu0 0
      %1432 = vmatpush1.bf16.msra.mxu0 %v1404
      %1433 = vmatprep.subr.bf16.mxu0 0
      %1434 = vmatpush1.bf16.msra.mxu0 %v1403
      %1435 = vmatprep.subr.bf16.mxu0 0
      %1436 = vmatpush2.bf16.msra.mxu0 0
      %1437 = vmatprep.subr.bf16.mxu0 0
      %1438 = vmatpush2.bf16.msra.mxu0 0
      %1439 = vmatprep.subr.bf16.mxu0 0
      %1440 = vmatpush2.bf16.msra.mxu0 0
      %1441 = vmatprep.subr.bf16.mxu0 0
      %1442 = vmatpush2.bf16.msra.mxu0 0
      %1443 = vmatprep.subr.bf16.mxu0 0
      %1444 = vmatpush2.bf16.msra.mxu0 0
      %1445 = vmatprep.subr.bf16.mxu0 0
      %1446 = vmatpush2.bf16.msra.mxu0 0
      %1447 = vmatprep.subr.bf16.mxu0 0
      %1448 = vmatpush2.bf16.msra.mxu0 0
      %1449 = vmatprep.subr.bf16.mxu0 0
      %1450 = vmatpush2.bf16.msra.mxu0 0
      %1451 = vmatprep.mubr.bf16.mxu0 0
      %1452 = vmatmul.mubr.bf16.gmra.mxu0 %v1029
      %v1453 = vpop.f32.mrf.mxu0
      %v1454 = vadd.f32 0.0, %v1453
      %v1455 = vpop.f32.mrf.mxu0
      %v1456 = vpop.f32.mrf.mxu0
      %v1457 = vadd.f32 0.0, %v1456
      %v1458 = vpop.f32.mrf.mxu0
      %1459 = vdwg.mxu0
      %v1460 = vadd.f32 %v1352, %v1454
      %v1461 = vadd.f32 %v1353, %v1457
      %s1462 = scalar_lea.vmem %s2, 256
      %v1463 = vld [vmem:[%s1462] sm:$0xf]
      %v1464 = vld [vmem:[%s1462 + $0x4] sm:$0xf]
      %v1465 = vld [vmem:[%s1462 + $0x8] sm:$0xf]
      %v1466 = vld [vmem:[%s1462 + $0xc] sm:$0xf]
      %v1467 = vld [vmem:[%s1462 + $0x10] sm:$0xf]
      %v1468 = vld [vmem:[%s1462 + $0x14] sm:$0xf]
      %v1469 = vld [vmem:[%s1462 + $0x18] sm:$0xf]
      %v1470 = vld [vmem:[%s1462 + $0x1c] sm:$0xf]
      %v1471 = vld [vmem:[%s1462 + $0x20] sm:$0xf]
      %v1472 = vld [vmem:[%s1462 + $0x24] sm:$0xf]
      %v1473 = vld [vmem:[%s1462 + $0x28] sm:$0xf]
      %v1474 = vld [vmem:[%s1462 + $0x2c] sm:$0xf]
      %v1475 = vld [vmem:[%s1462 + $0x30] sm:$0xf]
      %v1476 = vld [vmem:[%s1462 + $0x34] sm:$0xf]
      %v1477 = vld [vmem:[%s1462 + $0x38] sm:$0xf]
      %v1478 = vld [vmem:[%s1462 + $0x3c] sm:$0xf]
      %v1495 = vunpack.c.l.b16 %v1463
      %v1496 = vunpack.c.l.b16 %v1464
      %v1497 = vunpack.c.l.b16 %v1465
      %v1498 = vunpack.c.l.b16 %v1466
      %v1499 = vunpack.c.l.b16 %v1467
      %v1500 = vunpack.c.l.b16 %v1468
      %v1501 = vunpack.c.l.b16 %v1469
      %v1502 = vunpack.c.l.b16 %v1470
      %v1503 = vunpack.c.l.b16 %v1471
      %v1504 = vunpack.c.l.b16 %v1472
      %v1505 = vunpack.c.l.b16 %v1473
      %v1506 = vunpack.c.l.b16 %v1474
      %v1507 = vunpack.c.l.b16 %v1475
      %v1508 = vunpack.c.l.b16 %v1476
      %v1509 = vunpack.c.l.b16 %v1477
      %v1510 = vunpack.c.l.b16 %v1478
      %v1511 = vpack.c.b16 %v1496, %v1495
      %v1512 = vpack.c.b16 %v1498, %v1497
      %v1513 = vpack.c.b16 %v1500, %v1499
      %v1514 = vpack.c.b16 %v1502, %v1501
      %v1515 = vpack.c.b16 %v1504, %v1503
      %v1516 = vpack.c.b16 %v1506, %v1505
      %v1517 = vpack.c.b16 %v1508, %v1507
      %v1518 = vpack.c.b16 %v1510, %v1509
      %1527 = vmatprep.subr.bf16.mxu0 0
      %1528 = vmatpush1.bf16.msra.mxu0 %v1518
      %1529 = vmatprep.subr.bf16.mxu0 0
      %1530 = vmatpush1.bf16.msra.mxu0 %v1517
      %1531 = vmatprep.subr.bf16.mxu0 0
      %1532 = vmatpush1.bf16.msra.mxu0 %v1516
      %1533 = vmatprep.subr.bf16.mxu0 0
      %1534 = vmatpush1.bf16.msra.mxu0 %v1515
      %1535 = vmatprep.subr.bf16.mxu0 0
      %1536 = vmatpush1.bf16.msra.mxu0 %v1514
      %1537 = vmatprep.subr.bf16.mxu0 0
      %1538 = vmatpush1.bf16.msra.mxu0 %v1513
      %1539 = vmatprep.subr.bf16.mxu0 0
      %1540 = vmatpush1.bf16.msra.mxu0 %v1512
      %1541 = vmatprep.subr.bf16.mxu0 0
      %1542 = vmatpush1.bf16.msra.mxu0 %v1511
      %1543 = vmatprep.subr.bf16.mxu0 0
      %1544 = vmatpush2.bf16.msra.mxu0 0
      %1545 = vmatprep.subr.bf16.mxu0 0
      %1546 = vmatpush2.bf16.msra.mxu0 0
      %1547 = vmatprep.subr.bf16.mxu0 0
      %1548 = vmatpush2.bf16.msra.mxu0 0
      %1549 = vmatprep.subr.bf16.mxu0 0
      %1550 = vmatpush2.bf16.msra.mxu0 0
      %1551 = vmatprep.subr.bf16.mxu0 0
      %1552 = vmatpush2.bf16.msra.mxu0 0
      %1553 = vmatprep.subr.bf16.mxu0 0
      %1554 = vmatpush2.bf16.msra.mxu0 0
      %1555 = vmatprep.subr.bf16.mxu0 0
      %1556 = vmatpush2.bf16.msra.mxu0 0
      %1557 = vmatprep.subr.bf16.mxu0 0
      %1558 = vmatpush2.bf16.msra.mxu0 0
      %1559 = vmatprep.mubr.bf16.mxu0 0
      %1560 = vmatmul.mubr.bf16.gmra.mxu0 %v1030
      %v1561 = vpop.f32.mrf.mxu0
      %v1562 = vadd.f32 0.0, %v1561
      %v1563 = vpop.f32.mrf.mxu0
      %v1564 = vpop.f32.mrf.mxu0
      %v1565 = vadd.f32 0.0, %v1564
      %v1566 = vpop.f32.mrf.mxu0
      %1567 = vdwg.mxu0
      %v1568 = vadd.f32 %v1460, %v1562
      %v1569 = vadd.f32 %v1461, %v1565
      %s1570 = scalar_lea.vmem %s2, 320
      %v1571 = vld [vmem:[%s1570] sm:$0xf]
      %v1572 = vld [vmem:[%s1570 + $0x4] sm:$0xf]
      %v1573 = vld [vmem:[%s1570 + $0x8] sm:$0xf]
      %v1574 = vld [vmem:[%s1570 + $0xc] sm:$0xf]
      %v1575 = vld [vmem:[%s1570 + $0x10] sm:$0xf]
      %v1576 = vld [vmem:[%s1570 + $0x14] sm:$0xf]
      %v1577 = vld [vmem:[%s1570 + $0x18] sm:$0xf]
      %v1578 = vld [vmem:[%s1570 + $0x1c] sm:$0xf]
      %v1579 = vld [vmem:[%s1570 + $0x20] sm:$0xf]
      %v1580 = vld [vmem:[%s1570 + $0x24] sm:$0xf]
      %v1581 = vld [vmem:[%s1570 + $0x28] sm:$0xf]
      %v1582 = vld [vmem:[%s1570 + $0x2c] sm:$0xf]
      %v1583 = vld [vmem:[%s1570 + $0x30] sm:$0xf]
      %v1584 = vld [vmem:[%s1570 + $0x34] sm:$0xf]
      %v1585 = vld [vmem:[%s1570 + $0x38] sm:$0xf]
      %v1586 = vld [vmem:[%s1570 + $0x3c] sm:$0xf]
      %v1603 = vunpack.c.l.b16 %v1571
      %v1604 = vunpack.c.l.b16 %v1572
      %v1605 = vunpack.c.l.b16 %v1573
      %v1606 = vunpack.c.l.b16 %v1574
      %v1607 = vunpack.c.l.b16 %v1575
      %v1608 = vunpack.c.l.b16 %v1576
      %v1609 = vunpack.c.l.b16 %v1577
      %v1610 = vunpack.c.l.b16 %v1578
      %v1611 = vunpack.c.l.b16 %v1579
      %v1612 = vunpack.c.l.b16 %v1580
      %v1613 = vunpack.c.l.b16 %v1581
      %v1614 = vunpack.c.l.b16 %v1582
      %v1615 = vunpack.c.l.b16 %v1583
      %v1616 = vunpack.c.l.b16 %v1584
      %v1617 = vunpack.c.l.b16 %v1585
      %v1618 = vunpack.c.l.b16 %v1586
      %v1619 = vpack.c.b16 %v1604, %v1603
      %v1620 = vpack.c.b16 %v1606, %v1605
      %v1621 = vpack.c.b16 %v1608, %v1607
      %v1622 = vpack.c.b16 %v1610, %v1609
      %v1623 = vpack.c.b16 %v1612, %v1611
      %v1624 = vpack.c.b16 %v1614, %v1613
      %v1625 = vpack.c.b16 %v1616, %v1615
      %v1626 = vpack.c.b16 %v1618, %v1617
      %1635 = vmatprep.subr.bf16.mxu0 0
      %1636 = vmatpush1.bf16.msra.mxu0 %v1626
      %1637 = vmatprep.subr.bf16.mxu0 0
      %1638 = vmatpush1.bf16.msra.mxu0 %v1625
      %1639 = vmatprep.subr.bf16.mxu0 0
      %1640 = vmatpush1.bf16.msra.mxu0 %v1624
      %1641 = vmatprep.subr.bf16.mxu0 0
      %1642 = vmatpush1.bf16.msra.mxu0 %v1623
      %1643 = vmatprep.subr.bf16.mxu0 0
      %1644 = vmatpush1.bf16.msra.mxu0 %v1622
      %1645 = vmatprep.subr.bf16.mxu0 0
      %1646 = vmatpush1.bf16.msra.mxu0 %v1621
      %1647 = vmatprep.subr.bf16.mxu0 0
      %1648 = vmatpush1.bf16.msra.mxu0 %v1620
      %1649 = vmatprep.subr.bf16.mxu0 0
      %1650 = vmatpush1.bf16.msra.mxu0 %v1619
      %1651 = vmatprep.subr.bf16.mxu0 0
      %1652 = vmatpush2.bf16.msra.mxu0 0
      %1653 = vmatprep.subr.bf16.mxu0 0
      %1654 = vmatpush2.bf16.msra.mxu0 0
      %1655 = vmatprep.subr.bf16.mxu0 0
      %1656 = vmatpush2.bf16.msra.mxu0 0
      %1657 = vmatprep.subr.bf16.mxu0 0
      %1658 = vmatpush2.bf16.msra.mxu0 0
      %1659 = vmatprep.subr.bf16.mxu0 0
      %1660 = vmatpush2.bf16.msra.mxu0 0
      %1661 = vmatprep.subr.bf16.mxu0 0
      %1662 = vmatpush2.bf16.msra.mxu0 0
      %1663 = vmatprep.subr.bf16.mxu0 0
      %1664 = vmatpush2.bf16.msra.mxu0 0
      %1665 = vmatprep.subr.bf16.mxu0 0
      %1666 = vmatpush2.bf16.msra.mxu0 0
      %1667 = vmatprep.mubr.bf16.mxu0 0
      %1668 = vmatmul.mubr.bf16.gmra.mxu0 %v1031
      %v1669 = vpop.f32.mrf.mxu0
      %v1670 = vadd.f32 0.0, %v1669
      %v1671 = vpop.f32.mrf.mxu0
      %v1672 = vpop.f32.mrf.mxu0
      %v1673 = vadd.f32 0.0, %v1672
      %v1674 = vpop.f32.mrf.mxu0
      %1675 = vdwg.mxu0
      %v1676 = vadd.f32 %v1568, %v1670
      %v1677 = vadd.f32 %v1569, %v1673
      %s1678 = scalar_lea.vmem %s2, 384
      %v1679 = vld [vmem:[%s1678] sm:$0xf]
      %v1680 = vld [vmem:[%s1678 + $0x4] sm:$0xf]
      %v1681 = vld [vmem:[%s1678 + $0x8] sm:$0xf]
      %v1682 = vld [vmem:[%s1678 + $0xc] sm:$0xf]
      %v1683 = vld [vmem:[%s1678 + $0x10] sm:$0xf]
      %v1684 = vld [vmem:[%s1678 + $0x14] sm:$0xf]
      %v1685 = vld [vmem:[%s1678 + $0x18] sm:$0xf]
      %v1686 = vld [vmem:[%s1678 + $0x1c] sm:$0xf]
      %v1687 = vld [vmem:[%s1678 + $0x20] sm:$0xf]
      %v1688 = vld [vmem:[%s1678 + $0x24] sm:$0xf]
      %v1689 = vld [vmem:[%s1678 + $0x28] sm:$0xf]
      %v1690 = vld [vmem:[%s1678 + $0x2c] sm:$0xf]
      %v1691 = vld [vmem:[%s1678 + $0x30] sm:$0xf]
      %v1692 = vld [vmem:[%s1678 + $0x34] sm:$0xf]
      %v1693 = vld [vmem:[%s1678 + $0x38] sm:$0xf]
      %v1694 = vld [vmem:[%s1678 + $0x3c] sm:$0xf]
      %v1711 = vunpack.c.l.b16 %v1679
      %v1712 = vunpack.c.l.b16 %v1680
      %v1713 = vunpack.c.l.b16 %v1681
      %v1714 = vunpack.c.l.b16 %v1682
      %v1715 = vunpack.c.l.b16 %v1683
      %v1716 = vunpack.c.l.b16 %v1684
      %v1717 = vunpack.c.l.b16 %v1685
      %v1718 = vunpack.c.l.b16 %v1686
      %v1719 = vunpack.c.l.b16 %v1687
      %v1720 = vunpack.c.l.b16 %v1688
      %v1721 = vunpack.c.l.b16 %v1689
      %v1722 = vunpack.c.l.b16 %v1690
      %v1723 = vunpack.c.l.b16 %v1691
      %v1724 = vunpack.c.l.b16 %v1692
      %v1725 = vunpack.c.l.b16 %v1693
      %v1726 = vunpack.c.l.b16 %v1694
      %v1727 = vpack.c.b16 %v1712, %v1711
      %v1728 = vpack.c.b16 %v1714, %v1713
      %v1729 = vpack.c.b16 %v1716, %v1715
      %v1730 = vpack.c.b16 %v1718, %v1717
      %v1731 = vpack.c.b16 %v1720, %v1719
      %v1732 = vpack.c.b16 %v1722, %v1721
      %v1733 = vpack.c.b16 %v1724, %v1723
      %v1734 = vpack.c.b16 %v1726, %v1725
      %1743 = vmatprep.subr.bf16.mxu0 0
      %1744 = vmatpush1.bf16.msra.mxu0 %v1734
      %1745 = vmatprep.subr.bf16.mxu0 0
      %1746 = vmatpush1.bf16.msra.mxu0 %v1733
      %1747 = vmatprep.subr.bf16.mxu0 0
      %1748 = vmatpush1.bf16.msra.mxu0 %v1732
      %1749 = vmatprep.subr.bf16.mxu0 0
      %1750 = vmatpush1.bf16.msra.mxu0 %v1731
      %1751 = vmatprep.subr.bf16.mxu0 0
      %1752 = vmatpush1.bf16.msra.mxu0 %v1730
      %1753 = vmatprep.subr.bf16.mxu0 0
      %1754 = vmatpush1.bf16.msra.mxu0 %v1729
      %1755 = vmatprep.subr.bf16.mxu0 0
      %1756 = vmatpush1.bf16.msra.mxu0 %v1728
      %1757 = vmatprep.subr.bf16.mxu0 0
      %1758 = vmatpush1.bf16.msra.mxu0 %v1727
      %1759 = vmatprep.subr.bf16.mxu0 0
      %1760 = vmatpush2.bf16.msra.mxu0 0
      %1761 = vmatprep.subr.bf16.mxu0 0
      %1762 = vmatpush2.bf16.msra.mxu0 0
      %1763 = vmatprep.subr.bf16.mxu0 0
      %1764 = vmatpush2.bf16.msra.mxu0 0
      %1765 = vmatprep.subr.bf16.mxu0 0
      %1766 = vmatpush2.bf16.msra.mxu0 0
      %1767 = vmatprep.subr.bf16.mxu0 0
      %1768 = vmatpush2.bf16.msra.mxu0 0
      %1769 = vmatprep.subr.bf16.mxu0 0
      %1770 = vmatpush2.bf16.msra.mxu0 0
      %1771 = vmatprep.subr.bf16.mxu0 0
      %1772 = vmatpush2.bf16.msra.mxu0 0
      %1773 = vmatprep.subr.bf16.mxu0 0
      %1774 = vmatpush2.bf16.msra.mxu0 0
      %1775 = vmatprep.mubr.bf16.mxu0 0
      %1776 = vmatmul.mubr.bf16.gmra.mxu0 %v1032
      %v1777 = vpop.f32.mrf.mxu0
      %v1778 = vadd.f32 0.0, %v1777
      %v1779 = vpop.f32.mrf.mxu0
      %v1780 = vpop.f32.mrf.mxu0
      %v1781 = vadd.f32 0.0, %v1780
      %v1782 = vpop.f32.mrf.mxu0
      %1783 = vdwg.mxu0
      %v1784 = vadd.f32 %v1676, %v1778
      %v1785 = vadd.f32 %v1677, %v1781
      %s1786 = scalar_lea.vmem %s2, 448
      %v1787 = vld [vmem:[%s1786] sm:$0xf]
      %v1788 = vld [vmem:[%s1786 + $0x4] sm:$0xf]
      %v1789 = vld [vmem:[%s1786 + $0x8] sm:$0xf]
      %v1790 = vld [vmem:[%s1786 + $0xc] sm:$0xf]
      %v1791 = vld [vmem:[%s1786 + $0x10] sm:$0xf]
      %v1792 = vld [vmem:[%s1786 + $0x14] sm:$0xf]
      %v1793 = vld [vmem:[%s1786 + $0x18] sm:$0xf]
      %v1794 = vld [vmem:[%s1786 + $0x1c] sm:$0xf]
      %v1795 = vld [vmem:[%s1786 + $0x20] sm:$0xf]
      %v1796 = vld [vmem:[%s1786 + $0x24] sm:$0xf]
      %v1797 = vld [vmem:[%s1786 + $0x28] sm:$0xf]
      %v1798 = vld [vmem:[%s1786 + $0x2c] sm:$0xf]
      %v1799 = vld [vmem:[%s1786 + $0x30] sm:$0xf]
      %v1800 = vld [vmem:[%s1786 + $0x34] sm:$0xf]
      %v1801 = vld [vmem:[%s1786 + $0x38] sm:$0xf]
      %v1802 = vld [vmem:[%s1786 + $0x3c] sm:$0xf]
      %v1819 = vunpack.c.l.b16 %v1787
      %v1820 = vunpack.c.l.b16 %v1788
      %v1821 = vunpack.c.l.b16 %v1789
      %v1822 = vunpack.c.l.b16 %v1790
      %v1823 = vunpack.c.l.b16 %v1791
      %v1824 = vunpack.c.l.b16 %v1792
      %v1825 = vunpack.c.l.b16 %v1793
      %v1826 = vunpack.c.l.b16 %v1794
      %v1827 = vunpack.c.l.b16 %v1795
      %v1828 = vunpack.c.l.b16 %v1796
      %v1829 = vunpack.c.l.b16 %v1797
      %v1830 = vunpack.c.l.b16 %v1798
      %v1831 = vunpack.c.l.b16 %v1799
      %v1832 = vunpack.c.l.b16 %v1800
      %v1833 = vunpack.c.l.b16 %v1801
      %v1834 = vunpack.c.l.b16 %v1802
      %v1835 = vpack.c.b16 %v1820, %v1819
      %v1836 = vpack.c.b16 %v1822, %v1821
      %v1837 = vpack.c.b16 %v1824, %v1823
      %v1838 = vpack.c.b16 %v1826, %v1825
      %v1839 = vpack.c.b16 %v1828, %v1827
      %v1840 = vpack.c.b16 %v1830, %v1829
      %v1841 = vpack.c.b16 %v1832, %v1831
      %v1842 = vpack.c.b16 %v1834, %v1833
      %1851 = vmatprep.subr.bf16.mxu0 0
      %1852 = vmatpush1.bf16.msra.mxu0 %v1842
      %1853 = vmatprep.subr.bf16.mxu0 0
      %1854 = vmatpush1.bf16.msra.mxu0 %v1841
      %1855 = vmatprep.subr.bf16.mxu0 0
      %1856 = vmatpush1.bf16.msra.mxu0 %v1840
      %1857 = vmatprep.subr.bf16.mxu0 0
      %1858 = vmatpush1.bf16.msra.mxu0 %v1839
      %1859 = vmatprep.subr.bf16.mxu0 0
      %1860 = vmatpush1.bf16.msra.mxu0 %v1838
      %1861 = vmatprep.subr.bf16.mxu0 0
      %1862 = vmatpush1.bf16.msra.mxu0 %v1837
      %1863 = vmatprep.subr.bf16.mxu0 0
      %1864 = vmatpush1.bf16.msra.mxu0 %v1836
      %1865 = vmatprep.subr.bf16.mxu0 0
      %1866 = vmatpush1.bf16.msra.mxu0 %v1835
      %1867 = vmatprep.subr.bf16.mxu0 0
      %1868 = vmatpush2.bf16.msra.mxu0 0
      %1869 = vmatprep.subr.bf16.mxu0 0
      %1870 = vmatpush2.bf16.msra.mxu0 0
      %1871 = vmatprep.subr.bf16.mxu0 0
      %1872 = vmatpush2.bf16.msra.mxu0 0
      %1873 = vmatprep.subr.bf16.mxu0 0
      %1874 = vmatpush2.bf16.msra.mxu0 0
      %1875 = vmatprep.subr.bf16.mxu0 0
      %1876 = vmatpush2.bf16.msra.mxu0 0
      %1877 = vmatprep.subr.bf16.mxu0 0
      %1878 = vmatpush2.bf16.msra.mxu0 0
      %1879 = vmatprep.subr.bf16.mxu0 0
      %1880 = vmatpush2.bf16.msra.mxu0 0
      %1881 = vmatprep.subr.bf16.mxu0 0
      %1882 = vmatpush2.bf16.msra.mxu0 0
      %1883 = vmatprep.mubr.bf16.mxu0 0
      %1884 = vmatmul.mubr.bf16.gmra.mxu0 %v1033
      %v1885 = vpop.f32.mrf.mxu0
      %v1886 = vadd.f32 0.0, %v1885
      %v1887 = vpop.f32.mrf.mxu0
      %v1888 = vpop.f32.mrf.mxu0
      %v1889 = vadd.f32 0.0, %v1888
      %v1890 = vpop.f32.mrf.mxu0
      %1891 = vdwg.mxu0
      %v1892 = vadd.f32 %v1784, %v1886
      %v1893 = vadd.f32 %v1785, %v1889
      %s1894 = scalar_lea.vmem %s2, 512
      %v1895 = vld [vmem:[%s1894] sm:$0xf]
      %v1896 = vld [vmem:[%s1894 + $0x4] sm:$0xf]
      %v1897 = vld [vmem:[%s1894 + $0x8] sm:$0xf]
      %v1898 = vld [vmem:[%s1894 + $0xc] sm:$0xf]
      %v1899 = vld [vmem:[%s1894 + $0x10] sm:$0xf]
      %v1900 = vld [vmem:[%s1894 + $0x14] sm:$0xf]
      %v1901 = vld [vmem:[%s1894 + $0x18] sm:$0xf]
      %v1902 = vld [vmem:[%s1894 + $0x1c] sm:$0xf]
      %v1903 = vld [vmem:[%s1894 + $0x20] sm:$0xf]
      %v1904 = vld [vmem:[%s1894 + $0x24] sm:$0xf]
      %v1905 = vld [vmem:[%s1894 + $0x28] sm:$0xf]
      %v1906 = vld [vmem:[%s1894 + $0x2c] sm:$0xf]
      %v1907 = vld [vmem:[%s1894 + $0x30] sm:$0xf]
      %v1908 = vld [vmem:[%s1894 + $0x34] sm:$0xf]
      %v1909 = vld [vmem:[%s1894 + $0x38] sm:$0xf]
      %v1910 = vld [vmem:[%s1894 + $0x3c] sm:$0xf]
      %v1927 = vunpack.c.l.b16 %v1895
      %v1928 = vunpack.c.l.b16 %v1896
      %v1929 = vunpack.c.l.b16 %v1897
      %v1930 = vunpack.c.l.b16 %v1898
      %v1931 = vunpack.c.l.b16 %v1899
      %v1932 = vunpack.c.l.b16 %v1900
      %v1933 = vunpack.c.l.b16 %v1901
      %v1934 = vunpack.c.l.b16 %v1902
      %v1935 = vunpack.c.l.b16 %v1903
      %v1936 = vunpack.c.l.b16 %v1904
      %v1937 = vunpack.c.l.b16 %v1905
      %v1938 = vunpack.c.l.b16 %v1906
      %v1939 = vunpack.c.l.b16 %v1907
      %v1940 = vunpack.c.l.b16 %v1908
      %v1941 = vunpack.c.l.b16 %v1909
      %v1942 = vunpack.c.l.b16 %v1910
      %v1943 = vpack.c.b16 %v1928, %v1927
      %v1944 = vpack.c.b16 %v1930, %v1929
      %v1945 = vpack.c.b16 %v1932, %v1931
      %v1946 = vpack.c.b16 %v1934, %v1933
      %v1947 = vpack.c.b16 %v1936, %v1935
      %v1948 = vpack.c.b16 %v1938, %v1937
      %v1949 = vpack.c.b16 %v1940, %v1939
      %v1950 = vpack.c.b16 %v1942, %v1941
      %1959 = vmatprep.subr.bf16.mxu0 0
      %1960 = vmatpush1.bf16.msra.mxu0 %v1950
      %1961 = vmatprep.subr.bf16.mxu0 0
      %1962 = vmatpush1.bf16.msra.mxu0 %v1949
      %1963 = vmatprep.subr.bf16.mxu0 0
      %1964 = vmatpush1.bf16.msra.mxu0 %v1948
      %1965 = vmatprep.subr.bf16.mxu0 0
      %1966 = vmatpush1.bf16.msra.mxu0 %v1947
      %1967 = vmatprep.subr.bf16.mxu0 0
      %1968 = vmatpush1.bf16.msra.mxu0 %v1946
      %1969 = vmatprep.subr.bf16.mxu0 0
      %1970 = vmatpush1.bf16.msra.mxu0 %v1945
      %1971 = vmatprep.subr.bf16.mxu0 0
      %1972 = vmatpush1.bf16.msra.mxu0 %v1944
      %1973 = vmatprep.subr.bf16.mxu0 0
      %1974 = vmatpush1.bf16.msra.mxu0 %v1943
      %1975 = vmatprep.subr.bf16.mxu0 0
      %1976 = vmatpush2.bf16.msra.mxu0 0
      %1977 = vmatprep.subr.bf16.mxu0 0
      %1978 = vmatpush2.bf16.msra.mxu0 0
      %1979 = vmatprep.subr.bf16.mxu0 0
      %1980 = vmatpush2.bf16.msra.mxu0 0
      %1981 = vmatprep.subr.bf16.mxu0 0
      %1982 = vmatpush2.bf16.msra.mxu0 0
      %1983 = vmatprep.subr.bf16.mxu0 0
      %1984 = vmatpush2.bf16.msra.mxu0 0
      %1985 = vmatprep.subr.bf16.mxu0 0
      %1986 = vmatpush2.bf16.msra.mxu0 0
      %1987 = vmatprep.subr.bf16.mxu0 0
      %1988 = vmatpush2.bf16.msra.mxu0 0
      %1989 = vmatprep.subr.bf16.mxu0 0
      %1990 = vmatpush2.bf16.msra.mxu0 0
      %1991 = vmatprep.mubr.bf16.mxu0 0
      %1992 = vmatmul.mubr.bf16.gmra.mxu0 %v1034
      %v1993 = vpop.f32.mrf.mxu0
      %v1994 = vadd.f32 0.0, %v1993
      %v1995 = vpop.f32.mrf.mxu0
      %v1996 = vpop.f32.mrf.mxu0
      %v1997 = vadd.f32 0.0, %v1996
      %v1998 = vpop.f32.mrf.mxu0
      %1999 = vdwg.mxu0
      %v2000 = vadd.f32 %v1892, %v1994
      %v2001 = vadd.f32 %v1893, %v1997
      %v2002 = vld [vmem:[%s3 + $0x1] sm:$0x1]
      %v2003 = vlaneseq
      %v2004 = vshrl.u32 %v2003, 7
      %v2005 = vsub.s32 0, %v2004
      %v2006 = vrot.slane %v2002, %v2005
      %v2007 = vadd.f32 %v2000, %v2006
      %v2008 = vadd.f32 %v2001, %v2006
      %v2009 = vmax.f32 %v2007, 0.0
      %v2010 = vmax.f32 %v2008, 0.0
      %v2011 = vpack.c.bf16 %v2010, %v2009
      %2012 = vmatprep.subr.bf16.mxu0 0
      %2013 = vmatpush1.bf16.msra.mxu0 0
      %2014 = vmatprep.subr.bf16.mxu0 0
      %2015 = vmatpush1.bf16.msra.mxu0 0
      %2016 = vmatprep.subr.bf16.mxu0 0
      %2017 = vmatpush1.bf16.msra.mxu0 0
      %2018 = vmatprep.subr.bf16.mxu0 0
      %2019 = vmatpush1.bf16.msra.mxu0 0
      %2020 = vmatprep.subr.bf16.mxu0 0
      %2021 = vmatpush1.bf16.msra.mxu0 0
      %2022 = vmatprep.subr.bf16.mxu0 0
      %2023 = vmatpush1.bf16.msra.mxu0 0
      %2024 = vmatprep.subr.bf16.mxu0 0
      %2025 = vmatpush1.bf16.msra.mxu0 0
      %2026 = vmatprep.subr.bf16.mxu0 0
      %2027 = vmatpush1.bf16.msra.mxu0 %v2011
      %2028 = vmatprep.subr.bf16.mxu0 0
      %2029 = vmatpush2.bf16.msra.mxu0 0
      %2030 = vmatprep.subr.bf16.mxu0 0
      %2031 = vmatpush2.bf16.msra.mxu0 0
      %2032 = vmatprep.subr.bf16.mxu0 0
      %2033 = vmatpush2.bf16.msra.mxu0 0
      %2034 = vmatprep.subr.bf16.mxu0 0
      %2035 = vmatpush2.bf16.msra.mxu0 0
      %2036 = vmatprep.subr.bf16.mxu0 0
      %2037 = vmatpush2.bf16.msra.mxu0 0
      %2038 = vmatprep.subr.bf16.mxu0 0
      %2039 = vmatpush2.bf16.msra.mxu0 0
      %2040 = vmatprep.subr.bf16.mxu0 0
      %2041 = vmatpush2.bf16.msra.mxu0 0
      %2042 = vmatprep.subr.bf16.mxu0 0
      %2043 = vmatpush2.bf16.msra.mxu0 0
      %2044 = vmatprep.mubr.bf16.mxu0 0
      %2045 = vmatmul.mubr.bf16.gmra.mxu0 %v895
      %v2046 = vpop.f32.mrf.mxu0
      %v2047 = vadd.f32 0.0, %v2046
      %v2048 = vpop.f32.mrf.mxu0
      %v2049 = vpop.f32.mrf.mxu0
      %v2050 = vadd.f32 0.0, %v2049
      %v2051 = vpop.f32.mrf.mxu0
      %2052 = vmatprep.mubr.bf16.mxu0 0
      %2053 = vmatmul.mubr.bf16.gmra.mxu0 %v898
      %v2054 = vpop.f32.mrf.mxu0
      %v2055 = vadd.f32 0.0, %v2054
      %v2056 = vpop.f32.mrf.mxu0
      %v2057 = vpop.f32.mrf.mxu0
      %v2058 = vadd.f32 0.0, %v2057
      %v2059 = vpop.f32.mrf.mxu0
      %2060 = vmatprep.mubr.bf16.mxu0 0
      %2061 = vmatmul.mubr.bf16.gmra.mxu0 %v901
      %v2062 = vpop.f32.mrf.mxu0
      %v2063 = vadd.f32 0.0, %v2062
      %v2064 = vpop.f32.mrf.mxu0
      %v2065 = vpop.f32.mrf.mxu0
      %v2066 = vadd.f32 0.0, %v2065
      %v2067 = vpop.f32.mrf.mxu0
      %2068 = vmatprep.mubr.bf16.mxu0 0
      %2069 = vmatmul.mubr.bf16.gmra.mxu0 %v904
      %v2070 = vpop.f32.mrf.mxu0
      %v2071 = vadd.f32 0.0, %v2070
      %v2072 = vpop.f32.mrf.mxu0
      %v2073 = vpop.f32.mrf.mxu0
      %v2074 = vadd.f32 0.0, %v2073
      %v2075 = vpop.f32.mrf.mxu0
      %2076 = vmatprep.mubr.bf16.mxu0 0
      %2077 = vmatmul.mubr.bf16.gmra.mxu0 %v907
      %v2078 = vpop.f32.mrf.mxu0
      %v2079 = vadd.f32 0.0, %v2078
      %v2080 = vpop.f32.mrf.mxu0
      %v2081 = vpop.f32.mrf.mxu0
      %v2082 = vadd.f32 0.0, %v2081
      %v2083 = vpop.f32.mrf.mxu0
      %2084 = vmatprep.mubr.bf16.mxu0 0
      %2085 = vmatmul.mubr.bf16.gmra.mxu0 %v910
      %v2086 = vpop.f32.mrf.mxu0
      %v2087 = vadd.f32 0.0, %v2086
      %v2088 = vpop.f32.mrf.mxu0
      %v2089 = vpop.f32.mrf.mxu0
      %v2090 = vadd.f32 0.0, %v2089
      %v2091 = vpop.f32.mrf.mxu0
      %2092 = vmatprep.mubr.bf16.mxu0 0
      %2093 = vmatmul.mubr.bf16.gmra.mxu0 %v913
      %v2094 = vpop.f32.mrf.mxu0
      %v2095 = vadd.f32 0.0, %v2094
      %v2096 = vpop.f32.mrf.mxu0
      %v2097 = vpop.f32.mrf.mxu0
      %v2098 = vadd.f32 0.0, %v2097
      %v2099 = vpop.f32.mrf.mxu0
      %2100 = vmatprep.mubr.bf16.mxu0 0
      %2101 = vmatmul.mubr.bf16.gmra.mxu0 %v916
      %v2102 = vpop.f32.mrf.mxu0
      %v2103 = vadd.f32 0.0, %v2102
      %v2104 = vpop.f32.mrf.mxu0
      %v2105 = vpop.f32.mrf.mxu0
      %v2106 = vadd.f32 0.0, %v2105
      %v2107 = vpop.f32.mrf.mxu0
      %2108 = vmatprep.mubr.bf16.mxu0 0
      %2109 = vmatmul.mubr.bf16.gmra.mxu0 %v919
      %v2110 = vpop.f32.mrf.mxu0
      %v2111 = vadd.f32 0.0, %v2110
      %v2112 = vpop.f32.mrf.mxu0
      %v2113 = vpop.f32.mrf.mxu0
      %v2114 = vadd.f32 0.0, %v2113
      %v2115 = vpop.f32.mrf.mxu0
      %2116 = vdwg.mxu0
      %v2117 = vpack.c.bf16 %v2050, %v2047
      %v2118 = vpack.c.bf16 %v2058, %v2055
      %v2119 = vpack.c.bf16 %v2066, %v2063
      %v2120 = vpack.c.bf16 %v2074, %v2071
      %v2121 = vpack.c.bf16 %v2082, %v2079
      %v2122 = vpack.c.bf16 %v2090, %v2087
      %v2123 = vpack.c.bf16 %v2098, %v2095
      %v2124 = vpack.c.bf16 %v2106, %v2103
      %v2125 = vpack.c.bf16 %v2114, %v2111
      %s2126 = scalar_lea.vmem %s2, 576
      %v2127 = vld [vmem:[%s2126] sm:$0xf]
      %v2128 = vld [vmem:[%s2126 + $0x4] sm:$0xf]
      %v2129 = vld [vmem:[%s2126 + $0x8] sm:$0xf]
      %v2130 = vld [vmem:[%s2126 + $0xc] sm:$0xf]
      %v2131 = vld [vmem:[%s2126 + $0x10] sm:$0xf]
      %v2132 = vld [vmem:[%s2126 + $0x14] sm:$0xf]
      %v2133 = vld [vmem:[%s2126 + $0x18] sm:$0xf]
      %v2134 = vld [vmem:[%s2126 + $0x1c] sm:$0xf]
      %v2135 = vld [vmem:[%s2126 + $0x20] sm:$0xf]
      %v2136 = vld [vmem:[%s2126 + $0x24] sm:$0xf]
      %v2137 = vld [vmem:[%s2126 + $0x28] sm:$0xf]
      %v2138 = vld [vmem:[%s2126 + $0x2c] sm:$0xf]
      %v2139 = vld [vmem:[%s2126 + $0x30] sm:$0xf]
      %v2140 = vld [vmem:[%s2126 + $0x34] sm:$0xf]
      %v2141 = vld [vmem:[%s2126 + $0x38] sm:$0xf]
      %v2142 = vld [vmem:[%s2126 + $0x3c] sm:$0xf]
      %s2143 = scalar_lea.vmem %s2, 640
      %v2144 = vld [vmem:[%s2143] sm:$0xf]
      %v2145 = vld [vmem:[%s2143 + $0x4] sm:$0xf]
      %v2146 = vld [vmem:[%s2143 + $0x8] sm:$0xf]
      %v2147 = vld [vmem:[%s2143 + $0xc] sm:$0xf]
      %v2148 = vld [vmem:[%s2143 + $0x10] sm:$0xf]
      %v2149 = vld [vmem:[%s2143 + $0x14] sm:$0xf]
      %v2150 = vld [vmem:[%s2143 + $0x18] sm:$0xf]
      %v2151 = vld [vmem:[%s2143 + $0x1c] sm:$0xf]
      %v2152 = vld [vmem:[%s2143 + $0x20] sm:$0xf]
      %v2153 = vld [vmem:[%s2143 + $0x24] sm:$0xf]
      %v2154 = vld [vmem:[%s2143 + $0x28] sm:$0xf]
      %v2155 = vld [vmem:[%s2143 + $0x2c] sm:$0xf]
      %v2156 = vld [vmem:[%s2143 + $0x30] sm:$0xf]
      %v2157 = vld [vmem:[%s2143 + $0x34] sm:$0xf]
      %v2158 = vld [vmem:[%s2143 + $0x38] sm:$0xf]
      %v2159 = vld [vmem:[%s2143 + $0x3c] sm:$0xf]
      %v2176 = vunpack.c.l.b16 %v2144
      %v2177 = vunpack.c.l.b16 %v2145
      %v2178 = vunpack.c.l.b16 %v2146
      %v2179 = vunpack.c.l.b16 %v2147
      %v2180 = vunpack.c.l.b16 %v2148
      %v2181 = vunpack.c.l.b16 %v2149
      %v2182 = vunpack.c.l.b16 %v2150
      %v2183 = vunpack.c.l.b16 %v2151
      %v2184 = vunpack.c.l.b16 %v2152
      %v2185 = vunpack.c.l.b16 %v2153
      %v2186 = vunpack.c.l.b16 %v2154
      %v2187 = vunpack.c.l.b16 %v2155
      %v2188 = vunpack.c.l.b16 %v2156
      %v2189 = vunpack.c.l.b16 %v2157
      %v2190 = vunpack.c.l.b16 %v2158
      %v2191 = vunpack.c.l.b16 %v2159
      %v2192 = vpack.c.b16 %v2177, %v2176
      %v2193 = vpack.c.b16 %v2179, %v2178
      %v2194 = vpack.c.b16 %v2181, %v2180
      %v2195 = vpack.c.b16 %v2183, %v2182
      %v2196 = vpack.c.b16 %v2185, %v2184
      %v2197 = vpack.c.b16 %v2187, %v2186
      %v2198 = vpack.c.b16 %v2189, %v2188
      %v2199 = vpack.c.b16 %v2191, %v2190
      %2208 = vmatprep.subr.bf16.mxu0 0
      %2209 = vmatpush1.bf16.msra.mxu0 %v2199
      %2210 = vmatprep.subr.bf16.mxu0 0
      %2211 = vmatpush1.bf16.msra.mxu0 %v2198
      %2212 = vmatprep.subr.bf16.mxu0 0
      %2213 = vmatpush1.bf16.msra.mxu0 %v2197
      %2214 = vmatprep.subr.bf16.mxu0 0
      %2215 = vmatpush1.bf16.msra.mxu0 %v2196
      %2216 = vmatprep.subr.bf16.mxu0 0
      %2217 = vmatpush1.bf16.msra.mxu0 %v2195
      %2218 = vmatprep.subr.bf16.mxu0 0
      %2219 = vmatpush1.bf16.msra.mxu0 %v2194
      %2220 = vmatprep.subr.bf16.mxu0 0
      %2221 = vmatpush1.bf16.msra.mxu0 %v2193
      %2222 = vmatprep.subr.bf16.mxu0 0
      %2223 = vmatpush1.bf16.msra.mxu0 %v2192
      %2224 = vmatprep.subr.bf16.mxu0 0
      %2225 = vmatpush2.bf16.msra.mxu0 0
      %2226 = vmatprep.subr.bf16.mxu0 0
      %2227 = vmatpush2.bf16.msra.mxu0 0
      %2228 = vmatprep.subr.bf16.mxu0 0
      %2229 = vmatpush2.bf16.msra.mxu0 0
      %2230 = vmatprep.subr.bf16.mxu0 0
      %2231 = vmatpush2.bf16.msra.mxu0 0
      %2232 = vmatprep.subr.bf16.mxu0 0
      %2233 = vmatpush2.bf16.msra.mxu0 0
      %2234 = vmatprep.subr.bf16.mxu0 0
      %2235 = vmatpush2.bf16.msra.mxu0 0
      %2236 = vmatprep.subr.bf16.mxu0 0
      %2237 = vmatpush2.bf16.msra.mxu0 0
      %2238 = vmatprep.subr.bf16.mxu0 0
      %2239 = vmatpush2.bf16.msra.mxu0 0
      %2240 = vmatprep.mubr.bf16.mxu0 0
      %2241 = vmatmul.mubr.bf16.gmra.mxu0 %v2118
      %v2242 = vpop.f32.mrf.mxu0
      %v2243 = vadd.f32 0.0, %v2242
      %v2244 = vpop.f32.mrf.mxu0
      %v2245 = vpop.f32.mrf.mxu0
      %v2246 = vadd.f32 0.0, %v2245
      %v2247 = vpop.f32.mrf.mxu0
      %2248 = vdwg.mxu0
      %v2265 = vunpack.c.l.b16 %v2127
      %v2266 = vunpack.c.l.b16 %v2128
      %v2267 = vunpack.c.l.b16 %v2129
      %v2268 = vunpack.c.l.b16 %v2130
      %v2269 = vunpack.c.l.b16 %v2131
      %v2270 = vunpack.c.l.b16 %v2132
      %v2271 = vunpack.c.l.b16 %v2133
      %v2272 = vunpack.c.l.b16 %v2134
      %v2273 = vunpack.c.l.b16 %v2135
      %v2274 = vunpack.c.l.b16 %v2136
      %v2275 = vunpack.c.l.b16 %v2137
      %v2276 = vunpack.c.l.b16 %v2138
      %v2277 = vunpack.c.l.b16 %v2139
      %v2278 = vunpack.c.l.b16 %v2140
      %v2279 = vunpack.c.l.b16 %v2141
      %v2280 = vunpack.c.l.b16 %v2142
      %v2281 = vpack.c.b16 %v2266, %v2265
      %v2282 = vpack.c.b16 %v2268, %v2267
      %v2283 = vpack.c.b16 %v2270, %v2269
      %v2284 = vpack.c.b16 %v2272, %v2271
      %v2285 = vpack.c.b16 %v2274, %v2273
      %v2286 = vpack.c.b16 %v2276, %v2275
      %v2287 = vpack.c.b16 %v2278, %v2277
      %v2288 = vpack.c.b16 %v2280, %v2279
      %2297 = vmatprep.subr.bf16.mxu0 0
      %2298 = vmatpush1.bf16.msra.mxu0 %v2288
      %2299 = vmatprep.subr.bf16.mxu0 0
      %2300 = vmatpush1.bf16.msra.mxu0 %v2287
      %2301 = vmatprep.subr.bf16.mxu0 0
      %2302 = vmatpush1.bf16.msra.mxu0 %v2286
      %2303 = vmatprep.subr.bf16.mxu0 0
      %2304 = vmatpush1.bf16.msra.mxu0 %v2285
      %2305 = vmatprep.subr.bf16.mxu0 0
      %2306 = vmatpush1.bf16.msra.mxu0 %v2284
      %2307 = vmatprep.subr.bf16.mxu0 0
      %2308 = vmatpush1.bf16.msra.mxu0 %v2283
      %2309 = vmatprep.subr.bf16.mxu0 0
      %2310 = vmatpush1.bf16.msra.mxu0 %v2282
      %2311 = vmatprep.subr.bf16.mxu0 0
      %2312 = vmatpush1.bf16.msra.mxu0 %v2281
      %2313 = vmatprep.subr.bf16.mxu0 0
      %2314 = vmatpush2.bf16.msra.mxu0 0
      %2315 = vmatprep.subr.bf16.mxu0 0
      %2316 = vmatpush2.bf16.msra.mxu0 0
      %2317 = vmatprep.subr.bf16.mxu0 0
      %2318 = vmatpush2.bf16.msra.mxu0 0
      %2319 = vmatprep.subr.bf16.mxu0 0
      %2320 = vmatpush2.bf16.msra.mxu0 0
      %2321 = vmatprep.subr.bf16.mxu0 0
      %2322 = vmatpush2.bf16.msra.mxu0 0
      %2323 = vmatprep.subr.bf16.mxu0 0
      %2324 = vmatpush2.bf16.msra.mxu0 0
      %2325 = vmatprep.subr.bf16.mxu0 0
      %2326 = vmatpush2.bf16.msra.mxu0 0
      %2327 = vmatprep.subr.bf16.mxu0 0
      %2328 = vmatpush2.bf16.msra.mxu0 0
      %2329 = vmatprep.mubr.bf16.mxu0 0
      %2330 = vmatmul.mubr.bf16.gmra.mxu0 %v2117
      %v2331 = vpop.f32.mrf.mxu0
      %v2332 = vadd.f32 %v2243, %v2331
      %v2333 = vpop.f32.mrf.mxu0
      %v2334 = vpop.f32.mrf.mxu0
      %v2335 = vadd.f32 %v2246, %v2334
      %v2336 = vpop.f32.mrf.mxu0
      %2337 = vdwg.mxu0
      %s2338 = scalar_lea.vmem %s2, 704
      %v2339 = vld [vmem:[%s2338] sm:$0xf]
      %v2340 = vld [vmem:[%s2338 + $0x4] sm:$0xf]
      %v2341 = vld [vmem:[%s2338 + $0x8] sm:$0xf]
      %v2342 = vld [vmem:[%s2338 + $0xc] sm:$0xf]
      %v2343 = vld [vmem:[%s2338 + $0x10] sm:$0xf]
      %v2344 = vld [vmem:[%s2338 + $0x14] sm:$0xf]
      %v2345 = vld [vmem:[%s2338 + $0x18] sm:$0xf]
      %v2346 = vld [vmem:[%s2338 + $0x1c] sm:$0xf]
      %v2347 = vld [vmem:[%s2338 + $0x20] sm:$0xf]
      %v2348 = vld [vmem:[%s2338 + $0x24] sm:$0xf]
      %v2349 = vld [vmem:[%s2338 + $0x28] sm:$0xf]
      %v2350 = vld [vmem:[%s2338 + $0x2c] sm:$0xf]
      %v2351 = vld [vmem:[%s2338 + $0x30] sm:$0xf]
      %v2352 = vld [vmem:[%s2338 + $0x34] sm:$0xf]
      %v2353 = vld [vmem:[%s2338 + $0x38] sm:$0xf]
      %v2354 = vld [vmem:[%s2338 + $0x3c] sm:$0xf]
      %v2371 = vunpack.c.l.b16 %v2339
      %v2372 = vunpack.c.l.b16 %v2340
      %v2373 = vunpack.c.l.b16 %v2341
      %v2374 = vunpack.c.l.b16 %v2342
      %v2375 = vunpack.c.l.b16 %v2343
      %v2376 = vunpack.c.l.b16 %v2344
      %v2377 = vunpack.c.l.b16 %v2345
      %v2378 = vunpack.c.l.b16 %v2346
      %v2379 = vunpack.c.l.b16 %v2347
      %v2380 = vunpack.c.l.b16 %v2348
      %v2381 = vunpack.c.l.b16 %v2349
      %v2382 = vunpack.c.l.b16 %v2350
      %v2383 = vunpack.c.l.b16 %v2351
      %v2384 = vunpack.c.l.b16 %v2352
      %v2385 = vunpack.c.l.b16 %v2353
      %v2386 = vunpack.c.l.b16 %v2354
      %v2387 = vpack.c.b16 %v2372, %v2371
      %v2388 = vpack.c.b16 %v2374, %v2373
      %v2389 = vpack.c.b16 %v2376, %v2375
      %v2390 = vpack.c.b16 %v2378, %v2377
      %v2391 = vpack.c.b16 %v2380, %v2379
      %v2392 = vpack.c.b16 %v2382, %v2381
      %v2393 = vpack.c.b16 %v2384, %v2383
      %v2394 = vpack.c.b16 %v2386, %v2385
      %2403 = vmatprep.subr.bf16.mxu0 0
      %2404 = vmatpush1.bf16.msra.mxu0 %v2394
      %2405 = vmatprep.subr.bf16.mxu0 0
      %2406 = vmatpush1.bf16.msra.mxu0 %v2393
      %2407 = vmatprep.subr.bf16.mxu0 0
      %2408 = vmatpush1.bf16.msra.mxu0 %v2392
      %2409 = vmatprep.subr.bf16.mxu0 0
      %2410 = vmatpush1.bf16.msra.mxu0 %v2391
      %2411 = vmatprep.subr.bf16.mxu0 0
      %2412 = vmatpush1.bf16.msra.mxu0 %v2390
      %2413 = vmatprep.subr.bf16.mxu0 0
      %2414 = vmatpush1.bf16.msra.mxu0 %v2389
      %2415 = vmatprep.subr.bf16.mxu0 0
      %2416 = vmatpush1.bf16.msra.mxu0 %v2388
      %2417 = vmatprep.subr.bf16.mxu0 0
      %2418 = vmatpush1.bf16.msra.mxu0 %v2387
      %2419 = vmatprep.subr.bf16.mxu0 0
      %2420 = vmatpush2.bf16.msra.mxu0 0
      %2421 = vmatprep.subr.bf16.mxu0 0
      %2422 = vmatpush2.bf16.msra.mxu0 0
      %2423 = vmatprep.subr.bf16.mxu0 0
      %2424 = vmatpush2.bf16.msra.mxu0 0
      %2425 = vmatprep.subr.bf16.mxu0 0
      %2426 = vmatpush2.bf16.msra.mxu0 0
      %2427 = vmatprep.subr.bf16.mxu0 0
      %2428 = vmatpush2.bf16.msra.mxu0 0
      %2429 = vmatprep.subr.bf16.mxu0 0
      %2430 = vmatpush2.bf16.msra.mxu0 0
      %2431 = vmatprep.subr.bf16.mxu0 0
      %2432 = vmatpush2.bf16.msra.mxu0 0
      %2433 = vmatprep.subr.bf16.mxu0 0
      %2434 = vmatpush2.bf16.msra.mxu0 0
      %2435 = vmatprep.mubr.bf16.mxu0 0
      %2436 = vmatmul.mubr.bf16.gmra.mxu0 %v2119
      %v2437 = vpop.f32.mrf.mxu0
      %v2438 = vadd.f32 0.0, %v2437
      %v2439 = vpop.f32.mrf.mxu0
      %v2440 = vpop.f32.mrf.mxu0
      %v2441 = vadd.f32 0.0, %v2440
      %v2442 = vpop.f32.mrf.mxu0
      %2443 = vdwg.mxu0
      %v2444 = vadd.f32 %v2332, %v2438
      %v2445 = vadd.f32 %v2335, %v2441
      %s2446 = scalar_lea.vmem %s2, 768
      %v2447 = vld [vmem:[%s2446] sm:$0xf]
      %v2448 = vld [vmem:[%s2446 + $0x4] sm:$0xf]
      %v2449 = vld [vmem:[%s2446 + $0x8] sm:$0xf]
      %v2450 = vld [vmem:[%s2446 + $0xc] sm:$0xf]
      %v2451 = vld [vmem:[%s2446 + $0x10] sm:$0xf]
      %v2452 = vld [vmem:[%s2446 + $0x14] sm:$0xf]
      %v2453 = vld [vmem:[%s2446 + $0x18] sm:$0xf]
      %v2454 = vld [vmem:[%s2446 + $0x1c] sm:$0xf]
      %v2455 = vld [vmem:[%s2446 + $0x20] sm:$0xf]
      %v2456 = vld [vmem:[%s2446 + $0x24] sm:$0xf]
      %v2457 = vld [vmem:[%s2446 + $0x28] sm:$0xf]
      %v2458 = vld [vmem:[%s2446 + $0x2c] sm:$0xf]
      %v2459 = vld [vmem:[%s2446 + $0x30] sm:$0xf]
      %v2460 = vld [vmem:[%s2446 + $0x34] sm:$0xf]
      %v2461 = vld [vmem:[%s2446 + $0x38] sm:$0xf]
      %v2462 = vld [vmem:[%s2446 + $0x3c] sm:$0xf]
      %v2479 = vunpack.c.l.b16 %v2447
      %v2480 = vunpack.c.l.b16 %v2448
      %v2481 = vunpack.c.l.b16 %v2449
      %v2482 = vunpack.c.l.b16 %v2450
      %v2483 = vunpack.c.l.b16 %v2451
      %v2484 = vunpack.c.l.b16 %v2452
      %v2485 = vunpack.c.l.b16 %v2453
      %v2486 = vunpack.c.l.b16 %v2454
      %v2487 = vunpack.c.l.b16 %v2455
      %v2488 = vunpack.c.l.b16 %v2456
      %v2489 = vunpack.c.l.b16 %v2457
      %v2490 = vunpack.c.l.b16 %v2458
      %v2491 = vunpack.c.l.b16 %v2459
      %v2492 = vunpack.c.l.b16 %v2460
      %v2493 = vunpack.c.l.b16 %v2461
      %v2494 = vunpack.c.l.b16 %v2462
      %v2495 = vpack.c.b16 %v2480, %v2479
      %v2496 = vpack.c.b16 %v2482, %v2481
      %v2497 = vpack.c.b16 %v2484, %v2483
      %v2498 = vpack.c.b16 %v2486, %v2485
      %v2499 = vpack.c.b16 %v2488, %v2487
      %v2500 = vpack.c.b16 %v2490, %v2489
      %v2501 = vpack.c.b16 %v2492, %v2491
      %v2502 = vpack.c.b16 %v2494, %v2493
      %2511 = vmatprep.subr.bf16.mxu0 0
      %2512 = vmatpush1.bf16.msra.mxu0 %v2502
      %2513 = vmatprep.subr.bf16.mxu0 0
      %2514 = vmatpush1.bf16.msra.mxu0 %v2501
      %2515 = vmatprep.subr.bf16.mxu0 0
      %2516 = vmatpush1.bf16.msra.mxu0 %v2500
      %2517 = vmatprep.subr.bf16.mxu0 0
      %2518 = vmatpush1.bf16.msra.mxu0 %v2499
      %2519 = vmatprep.subr.bf16.mxu0 0
      %2520 = vmatpush1.bf16.msra.mxu0 %v2498
      %2521 = vmatprep.subr.bf16.mxu0 0
      %2522 = vmatpush1.bf16.msra.mxu0 %v2497
      %2523 = vmatprep.subr.bf16.mxu0 0
      %2524 = vmatpush1.bf16.msra.mxu0 %v2496
      %2525 = vmatprep.subr.bf16.mxu0 0
      %2526 = vmatpush1.bf16.msra.mxu0 %v2495
      %2527 = vmatprep.subr.bf16.mxu0 0
      %2528 = vmatpush2.bf16.msra.mxu0 0
      %2529 = vmatprep.subr.bf16.mxu0 0
      %2530 = vmatpush2.bf16.msra.mxu0 0
      %2531 = vmatprep.subr.bf16.mxu0 0
      %2532 = vmatpush2.bf16.msra.mxu0 0
      %2533 = vmatprep.subr.bf16.mxu0 0
      %2534 = vmatpush2.bf16.msra.mxu0 0
      %2535 = vmatprep.subr.bf16.mxu0 0
      %2536 = vmatpush2.bf16.msra.mxu0 0
      %2537 = vmatprep.subr.bf16.mxu0 0
      %2538 = vmatpush2.bf16.msra.mxu0 0
      %2539 = vmatprep.subr.bf16.mxu0 0
      %2540 = vmatpush2.bf16.msra.mxu0 0
      %2541 = vmatprep.subr.bf16.mxu0 0
      %2542 = vmatpush2.bf16.msra.mxu0 0
      %2543 = vmatprep.mubr.bf16.mxu0 0
      %2544 = vmatmul.mubr.bf16.gmra.mxu0 %v2120
      %v2545 = vpop.f32.mrf.mxu0
      %v2546 = vadd.f32 0.0, %v2545
      %v2547 = vpop.f32.mrf.mxu0
      %v2548 = vpop.f32.mrf.mxu0
      %v2549 = vadd.f32 0.0, %v2548
      %v2550 = vpop.f32.mrf.mxu0
      %2551 = vdwg.mxu0
      %v2552 = vadd.f32 %v2444, %v2546
      %v2553 = vadd.f32 %v2445, %v2549
      %s2554 = scalar_lea.vmem %s2, 832
      %v2555 = vld [vmem:[%s2554] sm:$0xf]
      %v2556 = vld [vmem:[%s2554 + $0x4] sm:$0xf]
      %v2557 = vld [vmem:[%s2554 + $0x8] sm:$0xf]
      %v2558 = vld [vmem:[%s2554 + $0xc] sm:$0xf]
      %v2559 = vld [vmem:[%s2554 + $0x10] sm:$0xf]
      %v2560 = vld [vmem:[%s2554 + $0x14] sm:$0xf]
      %v2561 = vld [vmem:[%s2554 + $0x18] sm:$0xf]
      %v2562 = vld [vmem:[%s2554 + $0x1c] sm:$0xf]
      %v2563 = vld [vmem:[%s2554 + $0x20] sm:$0xf]
      %v2564 = vld [vmem:[%s2554 + $0x24] sm:$0xf]
      %v2565 = vld [vmem:[%s2554 + $0x28] sm:$0xf]
      %v2566 = vld [vmem:[%s2554 + $0x2c] sm:$0xf]
      %v2567 = vld [vmem:[%s2554 + $0x30] sm:$0xf]
      %v2568 = vld [vmem:[%s2554 + $0x34] sm:$0xf]
      %v2569 = vld [vmem:[%s2554 + $0x38] sm:$0xf]
      %v2570 = vld [vmem:[%s2554 + $0x3c] sm:$0xf]
      %v2587 = vunpack.c.l.b16 %v2555
      %v2588 = vunpack.c.l.b16 %v2556
      %v2589 = vunpack.c.l.b16 %v2557
      %v2590 = vunpack.c.l.b16 %v2558
      %v2591 = vunpack.c.l.b16 %v2559
      %v2592 = vunpack.c.l.b16 %v2560
      %v2593 = vunpack.c.l.b16 %v2561
      %v2594 = vunpack.c.l.b16 %v2562
      %v2595 = vunpack.c.l.b16 %v2563
      %v2596 = vunpack.c.l.b16 %v2564
      %v2597 = vunpack.c.l.b16 %v2565
      %v2598 = vunpack.c.l.b16 %v2566
      %v2599 = vunpack.c.l.b16 %v2567
      %v2600 = vunpack.c.l.b16 %v2568
      %v2601 = vunpack.c.l.b16 %v2569
      %v2602 = vunpack.c.l.b16 %v2570
      %v2603 = vpack.c.b16 %v2588, %v2587
      %v2604 = vpack.c.b16 %v2590, %v2589
      %v2605 = vpack.c.b16 %v2592, %v2591
      %v2606 = vpack.c.b16 %v2594, %v2593
      %v2607 = vpack.c.b16 %v2596, %v2595
      %v2608 = vpack.c.b16 %v2598, %v2597
      %v2609 = vpack.c.b16 %v2600, %v2599
      %v2610 = vpack.c.b16 %v2602, %v2601
      %2619 = vmatprep.subr.bf16.mxu0 0
      %2620 = vmatpush1.bf16.msra.mxu0 %v2610
      %2621 = vmatprep.subr.bf16.mxu0 0
      %2622 = vmatpush1.bf16.msra.mxu0 %v2609
      %2623 = vmatprep.subr.bf16.mxu0 0
      %2624 = vmatpush1.bf16.msra.mxu0 %v2608
      %2625 = vmatprep.subr.bf16.mxu0 0
      %2626 = vmatpush1.bf16.msra.mxu0 %v2607
      %2627 = vmatprep.subr.bf16.mxu0 0
      %2628 = vmatpush1.bf16.msra.mxu0 %v2606
      %2629 = vmatprep.subr.bf16.mxu0 0
      %2630 = vmatpush1.bf16.msra.mxu0 %v2605
      %2631 = vmatprep.subr.bf16.mxu0 0
      %2632 = vmatpush1.bf16.msra.mxu0 %v2604
      %2633 = vmatprep.subr.bf16.mxu0 0
      %2634 = vmatpush1.bf16.msra.mxu0 %v2603
      %2635 = vmatprep.subr.bf16.mxu0 0
      %2636 = vmatpush2.bf16.msra.mxu0 0
      %2637 = vmatprep.subr.bf16.mxu0 0
      %2638 = vmatpush2.bf16.msra.mxu0 0
      %2639 = vmatprep.subr.bf16.mxu0 0
      %2640 = vmatpush2.bf16.msra.mxu0 0
      %2641 = vmatprep.subr.bf16.mxu0 0
      %2642 = vmatpush2.bf16.msra.mxu0 0
      %2643 = vmatprep.subr.bf16.mxu0 0
      %2644 = vmatpush2.bf16.msra.mxu0 0
      %2645 = vmatprep.subr.bf16.mxu0 0
      %2646 = vmatpush2.bf16.msra.mxu0 0
      %2647 = vmatprep.subr.bf16.mxu0 0
      %2648 = vmatpush2.bf16.msra.mxu0 0
      %2649 = vmatprep.subr.bf16.mxu0 0
      %2650 = vmatpush2.bf16.msra.mxu0 0
      %2651 = vmatprep.mubr.bf16.mxu0 0
      %2652 = vmatmul.mubr.bf16.gmra.mxu0 %v2121
      %v2653 = vpop.f32.mrf.mxu0
      %v2654 = vadd.f32 0.0, %v2653
      %v2655 = vpop.f32.mrf.mxu0
      %v2656 = vpop.f32.mrf.mxu0
      %v2657 = vadd.f32 0.0, %v2656
      %v2658 = vpop.f32.mrf.mxu0
      %2659 = vdwg.mxu0
      %v2660 = vadd.f32 %v2552, %v2654
      %v2661 = vadd.f32 %v2553, %v2657
      %s2662 = scalar_lea.vmem %s2, 896
      %v2663 = vld [vmem:[%s2662] sm:$0xf]
      %v2664 = vld [vmem:[%s2662 + $0x4] sm:$0xf]
      %v2665 = vld [vmem:[%s2662 + $0x8] sm:$0xf]
      %v2666 = vld [vmem:[%s2662 + $0xc] sm:$0xf]
      %v2667 = vld [vmem:[%s2662 + $0x10] sm:$0xf]
      %v2668 = vld [vmem:[%s2662 + $0x14] sm:$0xf]
      %v2669 = vld [vmem:[%s2662 + $0x18] sm:$0xf]
      %v2670 = vld [vmem:[%s2662 + $0x1c] sm:$0xf]
      %v2671 = vld [vmem:[%s2662 + $0x20] sm:$0xf]
      %v2672 = vld [vmem:[%s2662 + $0x24] sm:$0xf]
      %v2673 = vld [vmem:[%s2662 + $0x28] sm:$0xf]
      %v2674 = vld [vmem:[%s2662 + $0x2c] sm:$0xf]
      %v2675 = vld [vmem:[%s2662 + $0x30] sm:$0xf]
      %v2676 = vld [vmem:[%s2662 + $0x34] sm:$0xf]
      %v2677 = vld [vmem:[%s2662 + $0x38] sm:$0xf]
      %v2678 = vld [vmem:[%s2662 + $0x3c] sm:$0xf]
      %v2695 = vunpack.c.l.b16 %v2663
      %v2696 = vunpack.c.l.b16 %v2664
      %v2697 = vunpack.c.l.b16 %v2665
      %v2698 = vunpack.c.l.b16 %v2666
      %v2699 = vunpack.c.l.b16 %v2667
      %v2700 = vunpack.c.l.b16 %v2668
      %v2701 = vunpack.c.l.b16 %v2669
      %v2702 = vunpack.c.l.b16 %v2670
      %v2703 = vunpack.c.l.b16 %v2671
      %v2704 = vunpack.c.l.b16 %v2672
      %v2705 = vunpack.c.l.b16 %v2673
      %v2706 = vunpack.c.l.b16 %v2674
      %v2707 = vunpack.c.l.b16 %v2675
      %v2708 = vunpack.c.l.b16 %v2676
      %v2709 = vunpack.c.l.b16 %v2677
      %v2710 = vunpack.c.l.b16 %v2678
      %v2711 = vpack.c.b16 %v2696, %v2695
      %v2712 = vpack.c.b16 %v2698, %v2697
      %v2713 = vpack.c.b16 %v2700, %v2699
      %v2714 = vpack.c.b16 %v2702, %v2701
      %v2715 = vpack.c.b16 %v2704, %v2703
      %v2716 = vpack.c.b16 %v2706, %v2705
      %v2717 = vpack.c.b16 %v2708, %v2707
      %v2718 = vpack.c.b16 %v2710, %v2709
      %2727 = vmatprep.subr.bf16.mxu0 0
      %2728 = vmatpush1.bf16.msra.mxu0 %v2718
      %2729 = vmatprep.subr.bf16.mxu0 0
      %2730 = vmatpush1.bf16.msra.mxu0 %v2717
      %2731 = vmatprep.subr.bf16.mxu0 0
      %2732 = vmatpush1.bf16.msra.mxu0 %v2716
      %2733 = vmatprep.subr.bf16.mxu0 0
      %2734 = vmatpush1.bf16.msra.mxu0 %v2715
      %2735 = vmatprep.subr.bf16.mxu0 0
      %2736 = vmatpush1.bf16.msra.mxu0 %v2714
      %2737 = vmatprep.subr.bf16.mxu0 0
      %2738 = vmatpush1.bf16.msra.mxu0 %v2713
      %2739 = vmatprep.subr.bf16.mxu0 0
      %2740 = vmatpush1.bf16.msra.mxu0 %v2712
      %2741 = vmatprep.subr.bf16.mxu0 0
      %2742 = vmatpush1.bf16.msra.mxu0 %v2711
      %2743 = vmatprep.subr.bf16.mxu0 0
      %2744 = vmatpush2.bf16.msra.mxu0 0
      %2745 = vmatprep.subr.bf16.mxu0 0
      %2746 = vmatpush2.bf16.msra.mxu0 0
      %2747 = vmatprep.subr.bf16.mxu0 0
      %2748 = vmatpush2.bf16.msra.mxu0 0
      %2749 = vmatprep.subr.bf16.mxu0 0
      %2750 = vmatpush2.bf16.msra.mxu0 0
      %2751 = vmatprep.subr.bf16.mxu0 0
      %2752 = vmatpush2.bf16.msra.mxu0 0
      %2753 = vmatprep.subr.bf16.mxu0 0
      %2754 = vmatpush2.bf16.msra.mxu0 0
      %2755 = vmatprep.subr.bf16.mxu0 0
      %2756 = vmatpush2.bf16.msra.mxu0 0
      %2757 = vmatprep.subr.bf16.mxu0 0
      %2758 = vmatpush2.bf16.msra.mxu0 0
      %2759 = vmatprep.mubr.bf16.mxu0 0
      %2760 = vmatmul.mubr.bf16.gmra.mxu0 %v2122
      %v2761 = vpop.f32.mrf.mxu0
      %v2762 = vadd.f32 0.0, %v2761
      %v2763 = vpop.f32.mrf.mxu0
      %v2764 = vpop.f32.mrf.mxu0
      %v2765 = vadd.f32 0.0, %v2764
      %v2766 = vpop.f32.mrf.mxu0
      %2767 = vdwg.mxu0
      %v2768 = vadd.f32 %v2660, %v2762
      %v2769 = vadd.f32 %v2661, %v2765
      %s2770 = scalar_lea.vmem %s2, 960
      %v2771 = vld [vmem:[%s2770] sm:$0xf]
      %v2772 = vld [vmem:[%s2770 + $0x4] sm:$0xf]
      %v2773 = vld [vmem:[%s2770 + $0x8] sm:$0xf]
      %v2774 = vld [vmem:[%s2770 + $0xc] sm:$0xf]
      %v2775 = vld [vmem:[%s2770 + $0x10] sm:$0xf]
      %v2776 = vld [vmem:[%s2770 + $0x14] sm:$0xf]
      %v2777 = vld [vmem:[%s2770 + $0x18] sm:$0xf]
      %v2778 = vld [vmem:[%s2770 + $0x1c] sm:$0xf]
      %v2779 = vld [vmem:[%s2770 + $0x20] sm:$0xf]
      %v2780 = vld [vmem:[%s2770 + $0x24] sm:$0xf]
      %v2781 = vld [vmem:[%s2770 + $0x28] sm:$0xf]
      %v2782 = vld [vmem:[%s2770 + $0x2c] sm:$0xf]
      %v2783 = vld [vmem:[%s2770 + $0x30] sm:$0xf]
      %v2784 = vld [vmem:[%s2770 + $0x34] sm:$0xf]
      %v2785 = vld [vmem:[%s2770 + $0x38] sm:$0xf]
      %v2786 = vld [vmem:[%s2770 + $0x3c] sm:$0xf]
      %v2803 = vunpack.c.l.b16 %v2771
      %v2804 = vunpack.c.l.b16 %v2772
      %v2805 = vunpack.c.l.b16 %v2773
      %v2806 = vunpack.c.l.b16 %v2774
      %v2807 = vunpack.c.l.b16 %v2775
      %v2808 = vunpack.c.l.b16 %v2776
      %v2809 = vunpack.c.l.b16 %v2777
      %v2810 = vunpack.c.l.b16 %v2778
      %v2811 = vunpack.c.l.b16 %v2779
      %v2812 = vunpack.c.l.b16 %v2780
      %v2813 = vunpack.c.l.b16 %v2781
      %v2814 = vunpack.c.l.b16 %v2782
      %v2815 = vunpack.c.l.b16 %v2783
      %v2816 = vunpack.c.l.b16 %v2784
      %v2817 = vunpack.c.l.b16 %v2785
      %v2818 = vunpack.c.l.b16 %v2786
      %v2819 = vpack.c.b16 %v2804, %v2803
      %v2820 = vpack.c.b16 %v2806, %v2805
      %v2821 = vpack.c.b16 %v2808, %v2807
      %v2822 = vpack.c.b16 %v2810, %v2809
      %v2823 = vpack.c.b16 %v2812, %v2811
      %v2824 = vpack.c.b16 %v2814, %v2813
      %v2825 = vpack.c.b16 %v2816, %v2815
      %v2826 = vpack.c.b16 %v2818, %v2817
      %2835 = vmatprep.subr.bf16.mxu0 0
      %2836 = vmatpush1.bf16.msra.mxu0 %v2826
      %2837 = vmatprep.subr.bf16.mxu0 0
      %2838 = vmatpush1.bf16.msra.mxu0 %v2825
      %2839 = vmatprep.subr.bf16.mxu0 0
      %2840 = vmatpush1.bf16.msra.mxu0 %v2824
      %2841 = vmatprep.subr.bf16.mxu0 0
      %2842 = vmatpush1.bf16.msra.mxu0 %v2823
      %2843 = vmatprep.subr.bf16.mxu0 0
      %2844 = vmatpush1.bf16.msra.mxu0 %v2822
      %2845 = vmatprep.subr.bf16.mxu0 0
      %2846 = vmatpush1.bf16.msra.mxu0 %v2821
      %2847 = vmatprep.subr.bf16.mxu0 0
      %2848 = vmatpush1.bf16.msra.mxu0 %v2820
      %2849 = vmatprep.subr.bf16.mxu0 0
      %2850 = vmatpush1.bf16.msra.mxu0 %v2819
      %2851 = vmatprep.subr.bf16.mxu0 0
      %2852 = vmatpush2.bf16.msra.mxu0 0
      %2853 = vmatprep.subr.bf16.mxu0 0
      %2854 = vmatpush2.bf16.msra.mxu0 0
      %2855 = vmatprep.subr.bf16.mxu0 0
      %2856 = vmatpush2.bf16.msra.mxu0 0
      %2857 = vmatprep.subr.bf16.mxu0 0
      %2858 = vmatpush2.bf16.msra.mxu0 0
      %2859 = vmatprep.subr.bf16.mxu0 0
      %2860 = vmatpush2.bf16.msra.mxu0 0
      %2861 = vmatprep.subr.bf16.mxu0 0
      %2862 = vmatpush2.bf16.msra.mxu0 0
      %2863 = vmatprep.subr.bf16.mxu0 0
      %2864 = vmatpush2.bf16.msra.mxu0 0
      %2865 = vmatprep.subr.bf16.mxu0 0
      %2866 = vmatpush2.bf16.msra.mxu0 0
      %2867 = vmatprep.mubr.bf16.mxu0 0
      %2868 = vmatmul.mubr.bf16.gmra.mxu0 %v2123
      %v2869 = vpop.f32.mrf.mxu0
      %v2870 = vadd.f32 0.0, %v2869
      %v2871 = vpop.f32.mrf.mxu0
      %v2872 = vpop.f32.mrf.mxu0
      %v2873 = vadd.f32 0.0, %v2872
      %v2874 = vpop.f32.mrf.mxu0
      %2875 = vdwg.mxu0
      %v2876 = vadd.f32 %v2768, %v2870
      %v2877 = vadd.f32 %v2769, %v2873
      %s2878 = scalar_lea.vmem %s2, 1024
      %v2879 = vld [vmem:[%s2878] sm:$0xf]
      %v2880 = vld [vmem:[%s2878 + $0x4] sm:$0xf]
      %v2881 = vld [vmem:[%s2878 + $0x8] sm:$0xf]
      %v2882 = vld [vmem:[%s2878 + $0xc] sm:$0xf]
      %v2883 = vld [vmem:[%s2878 + $0x10] sm:$0xf]
      %v2884 = vld [vmem:[%s2878 + $0x14] sm:$0xf]
      %v2885 = vld [vmem:[%s2878 + $0x18] sm:$0xf]
      %v2886 = vld [vmem:[%s2878 + $0x1c] sm:$0xf]
      %v2887 = vld [vmem:[%s2878 + $0x20] sm:$0xf]
      %v2888 = vld [vmem:[%s2878 + $0x24] sm:$0xf]
      %v2889 = vld [vmem:[%s2878 + $0x28] sm:$0xf]
      %v2890 = vld [vmem:[%s2878 + $0x2c] sm:$0xf]
      %v2891 = vld [vmem:[%s2878 + $0x30] sm:$0xf]
      %v2892 = vld [vmem:[%s2878 + $0x34] sm:$0xf]
      %v2893 = vld [vmem:[%s2878 + $0x38] sm:$0xf]
      %v2894 = vld [vmem:[%s2878 + $0x3c] sm:$0xf]
      %v2911 = vunpack.c.l.b16 %v2879
      %v2912 = vunpack.c.l.b16 %v2880
      %v2913 = vunpack.c.l.b16 %v2881
      %v2914 = vunpack.c.l.b16 %v2882
      %v2915 = vunpack.c.l.b16 %v2883
      %v2916 = vunpack.c.l.b16 %v2884
      %v2917 = vunpack.c.l.b16 %v2885
      %v2918 = vunpack.c.l.b16 %v2886
      %v2919 = vunpack.c.l.b16 %v2887
      %v2920 = vunpack.c.l.b16 %v2888
      %v2921 = vunpack.c.l.b16 %v2889
      %v2922 = vunpack.c.l.b16 %v2890
      %v2923 = vunpack.c.l.b16 %v2891
      %v2924 = vunpack.c.l.b16 %v2892
      %v2925 = vunpack.c.l.b16 %v2893
      %v2926 = vunpack.c.l.b16 %v2894
      %v2927 = vpack.c.b16 %v2912, %v2911
      %v2928 = vpack.c.b16 %v2914, %v2913
      %v2929 = vpack.c.b16 %v2916, %v2915
      %v2930 = vpack.c.b16 %v2918, %v2917
      %v2931 = vpack.c.b16 %v2920, %v2919
      %v2932 = vpack.c.b16 %v2922, %v2921
      %v2933 = vpack.c.b16 %v2924, %v2923
      %v2934 = vpack.c.b16 %v2926, %v2925
      %2943 = vmatprep.subr.bf16.mxu0 0
      %2944 = vmatpush1.bf16.msra.mxu0 %v2934
      %2945 = vmatprep.subr.bf16.mxu0 0
      %2946 = vmatpush1.bf16.msra.mxu0 %v2933
      %2947 = vmatprep.subr.bf16.mxu0 0
      %2948 = vmatpush1.bf16.msra.mxu0 %v2932
      %2949 = vmatprep.subr.bf16.mxu0 0
      %2950 = vmatpush1.bf16.msra.mxu0 %v2931
      %2951 = vmatprep.subr.bf16.mxu0 0
      %2952 = vmatpush1.bf16.msra.mxu0 %v2930
      %2953 = vmatprep.subr.bf16.mxu0 0
      %2954 = vmatpush1.bf16.msra.mxu0 %v2929
      %2955 = vmatprep.subr.bf16.mxu0 0
      %2956 = vmatpush1.bf16.msra.mxu0 %v2928
      %2957 = vmatprep.subr.bf16.mxu0 0
      %2958 = vmatpush1.bf16.msra.mxu0 %v2927
      %2959 = vmatprep.subr.bf16.mxu0 0
      %2960 = vmatpush2.bf16.msra.mxu0 0
      %2961 = vmatprep.subr.bf16.mxu0 0
      %2962 = vmatpush2.bf16.msra.mxu0 0
      %2963 = vmatprep.subr.bf16.mxu0 0
      %2964 = vmatpush2.bf16.msra.mxu0 0
      %2965 = vmatprep.subr.bf16.mxu0 0
      %2966 = vmatpush2.bf16.msra.mxu0 0
      %2967 = vmatprep.subr.bf16.mxu0 0
      %2968 = vmatpush2.bf16.msra.mxu0 0
      %2969 = vmatprep.subr.bf16.mxu0 0
      %2970 = vmatpush2.bf16.msra.mxu0 0
      %2971 = vmatprep.subr.bf16.mxu0 0
      %2972 = vmatpush2.bf16.msra.mxu0 0
      %2973 = vmatprep.subr.bf16.mxu0 0
      %2974 = vmatpush2.bf16.msra.mxu0 0
      %2975 = vmatprep.mubr.bf16.mxu0 0
      %2976 = vmatmul.mubr.bf16.gmra.mxu0 %v2124
      %v2977 = vpop.f32.mrf.mxu0
      %v2978 = vadd.f32 0.0, %v2977
      %v2979 = vpop.f32.mrf.mxu0
      %v2980 = vpop.f32.mrf.mxu0
      %v2981 = vadd.f32 0.0, %v2980
      %v2982 = vpop.f32.mrf.mxu0
      %2983 = vdwg.mxu0
      %v2984 = vadd.f32 %v2876, %v2978
      %v2985 = vadd.f32 %v2877, %v2981
      %s2986 = scalar_lea.vmem %s2, 1088
      %v2987 = vld [vmem:[%s2986] sm:$0xf]
      %v2988 = vld [vmem:[%s2986 + $0x4] sm:$0xf]
      %v2989 = vld [vmem:[%s2986 + $0x8] sm:$0xf]
      %v2990 = vld [vmem:[%s2986 + $0xc] sm:$0xf]
      %v2991 = vld [vmem:[%s2986 + $0x10] sm:$0xf]
      %v2992 = vld [vmem:[%s2986 + $0x14] sm:$0xf]
      %v2993 = vld [vmem:[%s2986 + $0x18] sm:$0xf]
      %v2994 = vld [vmem:[%s2986 + $0x1c] sm:$0xf]
      %v2995 = vld [vmem:[%s2986 + $0x20] sm:$0xf]
      %v2996 = vld [vmem:[%s2986 + $0x24] sm:$0xf]
      %v2997 = vld [vmem:[%s2986 + $0x28] sm:$0xf]
      %v2998 = vld [vmem:[%s2986 + $0x2c] sm:$0xf]
      %v2999 = vld [vmem:[%s2986 + $0x30] sm:$0xf]
      %v3000 = vld [vmem:[%s2986 + $0x34] sm:$0xf]
      %v3001 = vld [vmem:[%s2986 + $0x38] sm:$0xf]
      %v3002 = vld [vmem:[%s2986 + $0x3c] sm:$0xf]
      %v3019 = vunpack.c.l.b16 %v2987
      %v3020 = vunpack.c.l.b16 %v2988
      %v3021 = vunpack.c.l.b16 %v2989
      %v3022 = vunpack.c.l.b16 %v2990
      %v3023 = vunpack.c.l.b16 %v2991
      %v3024 = vunpack.c.l.b16 %v2992
      %v3025 = vunpack.c.l.b16 %v2993
      %v3026 = vunpack.c.l.b16 %v2994
      %v3027 = vunpack.c.l.b16 %v2995
      %v3028 = vunpack.c.l.b16 %v2996
      %v3029 = vunpack.c.l.b16 %v2997
      %v3030 = vunpack.c.l.b16 %v2998
      %v3031 = vunpack.c.l.b16 %v2999
      %v3032 = vunpack.c.l.b16 %v3000
      %v3033 = vunpack.c.l.b16 %v3001
      %v3034 = vunpack.c.l.b16 %v3002
      %v3035 = vpack.c.b16 %v3020, %v3019
      %v3036 = vpack.c.b16 %v3022, %v3021
      %v3037 = vpack.c.b16 %v3024, %v3023
      %v3038 = vpack.c.b16 %v3026, %v3025
      %v3039 = vpack.c.b16 %v3028, %v3027
      %v3040 = vpack.c.b16 %v3030, %v3029
      %v3041 = vpack.c.b16 %v3032, %v3031
      %v3042 = vpack.c.b16 %v3034, %v3033
      %3051 = vmatprep.subr.bf16.mxu0 0
      %3052 = vmatpush1.bf16.msra.mxu0 %v3042
      %3053 = vmatprep.subr.bf16.mxu0 0
      %3054 = vmatpush1.bf16.msra.mxu0 %v3041
      %3055 = vmatprep.subr.bf16.mxu0 0
      %3056 = vmatpush1.bf16.msra.mxu0 %v3040
      %3057 = vmatprep.subr.bf16.mxu0 0
      %3058 = vmatpush1.bf16.msra.mxu0 %v3039
      %3059 = vmatprep.subr.bf16.mxu0 0
      %3060 = vmatpush1.bf16.msra.mxu0 %v3038
      %3061 = vmatprep.subr.bf16.mxu0 0
      %3062 = vmatpush1.bf16.msra.mxu0 %v3037
      %3063 = vmatprep.subr.bf16.mxu0 0
      %3064 = vmatpush1.bf16.msra.mxu0 %v3036
      %3065 = vmatprep.subr.bf16.mxu0 0
      %3066 = vmatpush1.bf16.msra.mxu0 %v3035
      %3067 = vmatprep.subr.bf16.mxu0 0
      %3068 = vmatpush2.bf16.msra.mxu0 0
      %3069 = vmatprep.subr.bf16.mxu0 0
      %3070 = vmatpush2.bf16.msra.mxu0 0
      %3071 = vmatprep.subr.bf16.mxu0 0
      %3072 = vmatpush2.bf16.msra.mxu0 0
      %3073 = vmatprep.subr.bf16.mxu0 0
      %3074 = vmatpush2.bf16.msra.mxu0 0
      %3075 = vmatprep.subr.bf16.mxu0 0
      %3076 = vmatpush2.bf16.msra.mxu0 0
      %3077 = vmatprep.subr.bf16.mxu0 0
      %3078 = vmatpush2.bf16.msra.mxu0 0
      %3079 = vmatprep.subr.bf16.mxu0 0
      %3080 = vmatpush2.bf16.msra.mxu0 0
      %3081 = vmatprep.subr.bf16.mxu0 0
      %3082 = vmatpush2.bf16.msra.mxu0 0
      %3083 = vmatprep.mubr.bf16.mxu0 0
      %3084 = vmatmul.mubr.bf16.gmra.mxu0 %v2125
      %v3085 = vpop.f32.mrf.mxu0
      %v3086 = vadd.f32 0.0, %v3085
      %v3087 = vpop.f32.mrf.mxu0
      %v3088 = vpop.f32.mrf.mxu0
      %v3089 = vadd.f32 0.0, %v3088
      %v3090 = vpop.f32.mrf.mxu0
      %3091 = vdwg.mxu0
      %v3092 = vadd.f32 %v2984, %v3086
      %v3093 = vadd.f32 %v2985, %v3089
      %v3094 = vld [vmem:[%s3 + $0x2] sm:$0x1]
      %v3095 = vlaneseq
      %v3096 = vshrl.u32 %v3095, 7
      %v3097 = vsub.s32 0, %v3096
      %v3098 = vrot.slane %v3094, %v3097
      %v3099 = vadd.f32 %v3092, %v3098
      %v3100 = vadd.f32 %v3093, %v3098
      %v3101 = vunpack.c.l.bf16 %v829
      %v3102 = vunpack.c.h.bf16 %v829
      %v3103 = vadd.f32 %v3099, %v3101
      %v3104 = vadd.f32 %v3100, %v3102
      %v3105 = vmax.f32 %v3103, 0.0
      %v3106 = vmax.f32 %v3104, 0.0
      %v3107 = vpack.c.bf16 %v3106, %v3105
      %v3108 = vld [vmem:[%s6] sm:$0xf]
      %v3110 = vsel %vm893, %v3108, 0
      %3112 = vmatprep.subr.bf16.mxu0 0
      %3113 = vmatpush1.bf16.msra.mxu0 0
      %3114 = vmatprep.subr.bf16.mxu0 0
      %3115 = vmatpush1.bf16.msra.mxu0 0
      %3116 = vmatprep.subr.bf16.mxu0 0
      %3117 = vmatpush1.bf16.msra.mxu0 0
      %3118 = vmatprep.subr.bf16.mxu0 0
      %3119 = vmatpush1.bf16.msra.mxu0 0
      %3120 = vmatprep.subr.bf16.mxu0 0
      %3121 = vmatpush1.bf16.msra.mxu0 0
      %3122 = vmatprep.subr.bf16.mxu0 0
      %3123 = vmatpush1.bf16.msra.mxu0 0
      %3124 = vmatprep.subr.bf16.mxu0 0
      %3125 = vmatpush1.bf16.msra.mxu0 0
      %3126 = vmatprep.subr.bf16.mxu0 0
      %3127 = vmatpush1.bf16.msra.mxu0 %v3107
      %3128 = vmatprep.subr.bf16.mxu0 0
      %3129 = vmatpush2.bf16.msra.mxu0 0
      %3130 = vmatprep.subr.bf16.mxu0 0
      %3131 = vmatpush2.bf16.msra.mxu0 0
      %3132 = vmatprep.subr.bf16.mxu0 0
      %3133 = vmatpush2.bf16.msra.mxu0 0
      %3134 = vmatprep.subr.bf16.mxu0 0
      %3135 = vmatpush2.bf16.msra.mxu0 0
      %3136 = vmatprep.subr.bf16.mxu0 0
      %3137 = vmatpush2.bf16.msra.mxu0 0
      %3138 = vmatprep.subr.bf16.mxu0 0
      %3139 = vmatpush2.bf16.msra.mxu0 0
      %3140 = vmatprep.subr.bf16.mxu0 0
      %3141 = vmatpush2.bf16.msra.mxu0 0
      %3142 = vmatprep.subr.bf16.mxu0 0
      %3143 = vmatpush2.bf16.msra.mxu0 0
      %3144 = vmatprep.mubr.bf16.mxu0 0
      %3145 = vmatmul.mubr.bf16.gmra.mxu0 %v3110
      %v3146 = vpop.f32.mrf.mxu0
      %v3147 = vadd.f32 0.0, %v3146
      %v3148 = vpop.f32.mrf.mxu0
      %v3149 = vpop.f32.mrf.mxu0
      %v3150 = vpop.f32.mrf.mxu0
      %3151 = vdwg.mxu0
      %v3152 = vpack.c.bf16 %v3147, %v3147
      %s3153 = scalar_lea.vmem %s2, 1152
      %v3154 = vld [vmem:[%s3153] sm:$0xf]
      %v3155 = vld [vmem:[%s3153 + $0x4] sm:$0xf]
      %v3156 = vld [vmem:[%s3153 + $0x8] sm:$0xf]
      %v3157 = vld [vmem:[%s3153 + $0xc] sm:$0xf]
      %v3158 = vld [vmem:[%s3153 + $0x10] sm:$0xf]
      %v3159 = vld [vmem:[%s3153 + $0x14] sm:$0xf]
      %v3160 = vld [vmem:[%s3153 + $0x18] sm:$0xf]
      %v3161 = vld [vmem:[%s3153 + $0x1c] sm:$0xf]
      %v3162 = vld [vmem:[%s3153 + $0x20] sm:$0xf]
      %v3163 = vld [vmem:[%s3153 + $0x24] sm:$0xf]
      %v3164 = vld [vmem:[%s3153 + $0x28] sm:$0xf]
      %v3165 = vld [vmem:[%s3153 + $0x2c] sm:$0xf]
      %v3166 = vld [vmem:[%s3153 + $0x30] sm:$0xf]
      %v3167 = vld [vmem:[%s3153 + $0x34] sm:$0xf]
      %v3168 = vld [vmem:[%s3153 + $0x38] sm:$0xf]
      %v3169 = vld [vmem:[%s3153 + $0x3c] sm:$0xf]
      %v3170 = vld [vmem:[%s3 + $0x3] sm:$0x1]
      %v3171 = vlaneseq
      %v3172 = vshrl.u32 %v3171, 7
      %v3173 = vsub.s32 0, %v3172
      %v3174 = vrot.slane %v3170, %v3173
      %v3191 = vunpack.c.l.b16 %v3154
      %v3192 = vunpack.c.l.b16 %v3155
      %v3193 = vunpack.c.l.b16 %v3156
      %v3194 = vunpack.c.l.b16 %v3157
      %v3195 = vunpack.c.l.b16 %v3158
      %v3196 = vunpack.c.l.b16 %v3159
      %v3197 = vunpack.c.l.b16 %v3160
      %v3198 = vunpack.c.l.b16 %v3161
      %v3199 = vunpack.c.l.b16 %v3162
      %v3200 = vunpack.c.l.b16 %v3163
      %v3201 = vunpack.c.l.b16 %v3164
      %v3202 = vunpack.c.l.b16 %v3165
      %v3203 = vunpack.c.l.b16 %v3166
      %v3204 = vunpack.c.l.b16 %v3167
      %v3205 = vunpack.c.l.b16 %v3168
      %v3206 = vunpack.c.l.b16 %v3169
      %v3207 = vpack.c.b16 %v3192, %v3191
      %v3208 = vpack.c.b16 %v3194, %v3193
      %v3209 = vpack.c.b16 %v3196, %v3195
      %v3210 = vpack.c.b16 %v3198, %v3197
      %v3211 = vpack.c.b16 %v3200, %v3199
      %v3212 = vpack.c.b16 %v3202, %v3201
      %v3213 = vpack.c.b16 %v3204, %v3203
      %v3214 = vpack.c.b16 %v3206, %v3205
      %3223 = vmatprep.subr.bf16.mxu0 0
      %3224 = vmatpush1.bf16.msra.mxu0 %v3214
      %3225 = vmatprep.subr.bf16.mxu0 0
      %3226 = vmatpush1.bf16.msra.mxu0 %v3213
      %3227 = vmatprep.subr.bf16.mxu0 0
      %3228 = vmatpush1.bf16.msra.mxu0 %v3212
      %3229 = vmatprep.subr.bf16.mxu0 0
      %3230 = vmatpush1.bf16.msra.mxu0 %v3211
      %3231 = vmatprep.subr.bf16.mxu0 0
      %3232 = vmatpush1.bf16.msra.mxu0 %v3210
      %3233 = vmatprep.subr.bf16.mxu0 0
      %3234 = vmatpush1.bf16.msra.mxu0 %v3209
      %3235 = vmatprep.subr.bf16.mxu0 0
      %3236 = vmatpush1.bf16.msra.mxu0 %v3208
      %3237 = vmatprep.subr.bf16.mxu0 0
      %3238 = vmatpush1.bf16.msra.mxu0 %v3207
      %3239 = vmatprep.subr.bf16.mxu0 0
      %3240 = vmatpush2.bf16.msra.mxu0 0
      %3241 = vmatprep.subr.bf16.mxu0 0
      %3242 = vmatpush2.bf16.msra.mxu0 0
      %3243 = vmatprep.subr.bf16.mxu0 0
      %3244 = vmatpush2.bf16.msra.mxu0 0
      %3245 = vmatprep.subr.bf16.mxu0 0
      %3246 = vmatpush2.bf16.msra.mxu0 0
      %3247 = vmatprep.subr.bf16.mxu0 0
      %3248 = vmatpush2.bf16.msra.mxu0 0
      %3249 = vmatprep.subr.bf16.mxu0 0
      %3250 = vmatpush2.bf16.msra.mxu0 0
      %3251 = vmatprep.subr.bf16.mxu0 0
      %3252 = vmatpush2.bf16.msra.mxu0 0
      %3253 = vmatprep.subr.bf16.mxu0 0
      %3254 = vmatpush2.bf16.msra.mxu0 0
      %3255 = vmatprep.mubr.bf16.mxu0 0
      %3256 = vmatmul.mubr.bf16.gmra.mxu0 %v3152
      %v3257 = vpop.f32.mrf.mxu0
      %v3258 = vadd.f32 %v3174, %v3257
      %v3259 = vpop.f32.mrf.mxu0
      %v3260 = vpop.f32.mrf.mxu0
      %v3261 = vpop.f32.mrf.mxu0
      %3262 = vdwg.mxu0
      %v3263 = vld [vmem:[%s7] sm:$0xf]
      %v3264 = vld [vmem:[%s7 + $0x4] sm:$0xf]
      %v3265 = vld [vmem:[%s7 + $0x8] sm:$0xf]
      %v3266 = vld [vmem:[%s7 + $0xc] sm:$0xf]
      %v3267 = vld [vmem:[%s7 + $0x10] sm:$0xf]
      %v3268 = vld [vmem:[%s7 + $0x14] sm:$0xf]
      %v3269 = vld [vmem:[%s7 + $0x18] sm:$0xf]
      %v3270 = vld [vmem:[%s7 + $0x1c] sm:$0xf]
      %v3271 = vld [vmem:[%s7 + $0x20] sm:$0xf]
      %v3281 = vunpack.c.l.b16 %v3263
      %v3282 = vunpack.c.l.b16 %v3264
      %v3283 = vunpack.c.l.b16 %v3265
      %v3284 = vunpack.c.l.b16 %v3266
      %v3285 = vunpack.c.l.b16 %v3267
      %v3286 = vunpack.c.l.b16 %v3268
      %v3287 = vunpack.c.l.b16 %v3269
      %v3288 = vunpack.c.l.b16 %v3270
      %v3289 = vunpack.c.l.b16 %v3271
      %v3290 = vpack.c.b16 %v3282, %v3281
      %v3291 = vpack.c.b16 %v3284, %v3283
      %v3292 = vpack.c.b16 %v3286, %v3285
      %v3293 = vpack.c.b16 %v3288, %v3287
      %v3294 = vpack.c.b16 %v3289, %v3289
      %v3296 = vsel %vm893, %v3290, 0
      %v3299 = vsel %vm893, %v3291, 0
      %v3302 = vsel %vm893, %v3292, 0
      %v3305 = vsel %vm893, %v3293, 0
      %v3308 = vsel %vm893, %v3294, 0
      %3310 = vmatprep.subr.bf16.mxu0 0
      %3311 = vmatpush1.bf16.msra.mxu0 0
      %3312 = vmatprep.subr.bf16.mxu0 0
      %3313 = vmatpush1.bf16.msra.mxu0 0
      %3314 = vmatprep.subr.bf16.mxu0 0
      %3315 = vmatpush1.bf16.msra.mxu0 0
      %3316 = vmatprep.subr.bf16.mxu0 0
      %3317 = vmatpush1.bf16.msra.mxu0 0
      %3318 = vmatprep.subr.bf16.mxu0 0
      %3319 = vmatpush1.bf16.msra.mxu0 0
      %3320 = vmatprep.subr.bf16.mxu0 0
      %3321 = vmatpush1.bf16.msra.mxu0 0
      %3322 = vmatprep.subr.bf16.mxu0 0
      %3323 = vmatpush1.bf16.msra.mxu0 0
      %3324 = vmatprep.subr.bf16.mxu0 0
      %3325 = vmatpush1.bf16.msra.mxu0 %v3107
      %3326 = vmatprep.subr.bf16.mxu0 0
      %3327 = vmatpush2.bf16.msra.mxu0 0
      %3328 = vmatprep.subr.bf16.mxu0 0
      %3329 = vmatpush2.bf16.msra.mxu0 0
      %3330 = vmatprep.subr.bf16.mxu0 0
      %3331 = vmatpush2.bf16.msra.mxu0 0
      %3332 = vmatprep.subr.bf16.mxu0 0
      %3333 = vmatpush2.bf16.msra.mxu0 0
      %3334 = vmatprep.subr.bf16.mxu0 0
      %3335 = vmatpush2.bf16.msra.mxu0 0
      %3336 = vmatprep.subr.bf16.mxu0 0
      %3337 = vmatpush2.bf16.msra.mxu0 0
      %3338 = vmatprep.subr.bf16.mxu0 0
      %3339 = vmatpush2.bf16.msra.mxu0 0
      %3340 = vmatprep.subr.bf16.mxu0 0
      %3341 = vmatpush2.bf16.msra.mxu0 0
      %3342 = vmatprep.mubr.bf16.mxu0 0
      %3343 = vmatmul.mubr.bf16.gmra.mxu0 %v3296
      %v3344 = vpop.f32.mrf.mxu0
      %v3345 = vadd.f32 0.0, %v3344
      %v3346 = vpop.f32.mrf.mxu0
      %v3347 = vpop.f32.mrf.mxu0
      %v3348 = vadd.f32 0.0, %v3347
      %v3349 = vpop.f32.mrf.mxu0
      %3350 = vmatprep.mubr.bf16.mxu0 0
      %3351 = vmatmul.mubr.bf16.gmra.mxu0 %v3299
      %v3352 = vpop.f32.mrf.mxu0
      %v3353 = vadd.f32 0.0, %v3352
      %v3354 = vpop.f32.mrf.mxu0
      %v3355 = vpop.f32.mrf.mxu0
      %v3356 = vadd.f32 0.0, %v3355
      %v3357 = vpop.f32.mrf.mxu0
      %3358 = vmatprep.mubr.bf16.mxu0 0
      %3359 = vmatmul.mubr.bf16.gmra.mxu0 %v3302
      %v3360 = vpop.f32.mrf.mxu0
      %v3361 = vadd.f32 0.0, %v3360
      %v3362 = vpop.f32.mrf.mxu0
      %v3363 = vpop.f32.mrf.mxu0
      %v3364 = vadd.f32 0.0, %v3363
      %v3365 = vpop.f32.mrf.mxu0
      %3366 = vmatprep.mubr.bf16.mxu0 0
      %3367 = vmatmul.mubr.bf16.gmra.mxu0 %v3305
      %v3368 = vpop.f32.mrf.mxu0
      %v3369 = vadd.f32 0.0, %v3368
      %v3370 = vpop.f32.mrf.mxu0
      %v3371 = vpop.f32.mrf.mxu0
      %v3372 = vadd.f32 0.0, %v3371
      %v3373 = vpop.f32.mrf.mxu0
      %3374 = vmatprep.mubr.bf16.mxu0 0
      %3375 = vmatmul.mubr.bf16.gmra.mxu0 %v3308
      %v3376 = vpop.f32.mrf.mxu0
      %v3377 = vadd.f32 0.0, %v3376
      %v3378 = vpop.f32.mrf.mxu0
      %v3379 = vpop.f32.mrf.mxu0
      %v3380 = vpop.f32.mrf.mxu0
      %3381 = vdwg.mxu0
      %v3382 = vpack.c.bf16 %v3348, %v3345
      %v3383 = vpack.c.bf16 %v3356, %v3353
      %v3384 = vpack.c.bf16 %v3364, %v3361
      %v3385 = vpack.c.bf16 %v3372, %v3369
      %v3386 = vpack.c.bf16 %v3377, %v3377
      %s3387 = scalar_lea.vmem %s2, 1216
      %v3388 = vld [vmem:[%s3387] sm:$0xf]
      %v3389 = vld [vmem:[%s3387 + $0x4] sm:$0xf]
      %v3390 = vld [vmem:[%s3387 + $0x8] sm:$0xf]
      %v3391 = vld [vmem:[%s3387 + $0xc] sm:$0xf]
      %v3392 = vld [vmem:[%s3387 + $0x10] sm:$0xf]
      %v3393 = vld [vmem:[%s3387 + $0x14] sm:$0xf]
      %v3394 = vld [vmem:[%s3387 + $0x18] sm:$0xf]
      %v3395 = vld [vmem:[%s3387 + $0x1c] sm:$0xf]
      %v3396 = vld [vmem:[%s3387 + $0x20] sm:$0xf]
      %v3397 = vld [vmem:[%s3387 + $0x24] sm:$0xf]
      %v3398 = vld [vmem:[%s3387 + $0x28] sm:$0xf]
      %v3399 = vld [vmem:[%s3387 + $0x2c] sm:$0xf]
      %v3400 = vld [vmem:[%s3387 + $0x30] sm:$0xf]
      %v3401 = vld [vmem:[%s3387 + $0x34] sm:$0xf]
      %v3402 = vld [vmem:[%s3387 + $0x38] sm:$0xf]
      %v3403 = vld [vmem:[%s3387 + $0x3c] sm:$0xf]
      %s3404 = scalar_lea.vmem %s2, 1280
      %v3405 = vld [vmem:[%s3404] sm:$0xf]
      %v3406 = vld [vmem:[%s3404 + $0x4] sm:$0xf]
      %v3407 = vld [vmem:[%s3404 + $0x8] sm:$0xf]
      %v3408 = vld [vmem:[%s3404 + $0xc] sm:$0xf]
      %v3409 = vld [vmem:[%s3404 + $0x10] sm:$0xf]
      %v3410 = vld [vmem:[%s3404 + $0x14] sm:$0xf]
      %v3411 = vld [vmem:[%s3404 + $0x18] sm:$0xf]
      %v3412 = vld [vmem:[%s3404 + $0x1c] sm:$0xf]
      %v3413 = vld [vmem:[%s3404 + $0x20] sm:$0xf]
      %v3414 = vld [vmem:[%s3404 + $0x24] sm:$0xf]
      %v3415 = vld [vmem:[%s3404 + $0x28] sm:$0xf]
      %v3416 = vld [vmem:[%s3404 + $0x2c] sm:$0xf]
      %v3417 = vld [vmem:[%s3404 + $0x30] sm:$0xf]
      %v3418 = vld [vmem:[%s3404 + $0x34] sm:$0xf]
      %v3419 = vld [vmem:[%s3404 + $0x38] sm:$0xf]
      %v3420 = vld [vmem:[%s3404 + $0x3c] sm:$0xf]
      %v3422 = vrot.slane %v3382, 4
      %v3440 = vunpack.c.l.b16 %v3405
      %v3441 = vunpack.c.l.b16 %v3406
      %v3442 = vunpack.c.l.b16 %v3407
      %v3443 = vunpack.c.l.b16 %v3408
      %v3444 = vunpack.c.l.b16 %v3409
      %v3445 = vunpack.c.l.b16 %v3410
      %v3446 = vunpack.c.l.b16 %v3411
      %v3447 = vunpack.c.l.b16 %v3412
      %v3448 = vunpack.c.l.b16 %v3413
      %v3449 = vunpack.c.l.b16 %v3414
      %v3450 = vunpack.c.l.b16 %v3415
      %v3451 = vunpack.c.l.b16 %v3416
      %v3452 = vunpack.c.l.b16 %v3417
      %v3453 = vunpack.c.l.b16 %v3418
      %v3454 = vunpack.c.l.b16 %v3419
      %v3455 = vunpack.c.l.b16 %v3420
      %v3456 = vpack.c.b16 %v3441, %v3440
      %v3457 = vpack.c.b16 %v3443, %v3442
      %v3458 = vpack.c.b16 %v3445, %v3444
      %v3459 = vpack.c.b16 %v3447, %v3446
      %v3460 = vpack.c.b16 %v3449, %v3448
      %v3461 = vpack.c.b16 %v3451, %v3450
      %v3462 = vpack.c.b16 %v3453, %v3452
      %v3463 = vpack.c.b16 %v3455, %v3454
      %3472 = vmatprep.subr.bf16.mxu0 0
      %3473 = vmatpush1.bf16.msra.mxu0 %v3463
      %3474 = vmatprep.subr.bf16.mxu0 0
      %3475 = vmatpush1.bf16.msra.mxu0 %v3462
      %3476 = vmatprep.subr.bf16.mxu0 0
      %3477 = vmatpush1.bf16.msra.mxu0 %v3461
      %3478 = vmatprep.subr.bf16.mxu0 0
      %3479 = vmatpush1.bf16.msra.mxu0 %v3460
      %3480 = vmatprep.subr.bf16.mxu0 0
      %3481 = vmatpush1.bf16.msra.mxu0 %v3459
      %3482 = vmatprep.subr.bf16.mxu0 0
      %3483 = vmatpush1.bf16.msra.mxu0 %v3458
      %3484 = vmatprep.subr.bf16.mxu0 0
      %3485 = vmatpush1.bf16.msra.mxu0 %v3457
      %3486 = vmatprep.subr.bf16.mxu0 0
      %3487 = vmatpush1.bf16.msra.mxu0 %v3456
      %3488 = vmatprep.subr.bf16.mxu0 0
      %3489 = vmatpush2.bf16.msra.mxu0 0
      %3490 = vmatprep.subr.bf16.mxu0 0
      %3491 = vmatpush2.bf16.msra.mxu0 0
      %3492 = vmatprep.subr.bf16.mxu0 0
      %3493 = vmatpush2.bf16.msra.mxu0 0
      %3494 = vmatprep.subr.bf16.mxu0 0
      %3495 = vmatpush2.bf16.msra.mxu0 0
      %3496 = vmatprep.subr.bf16.mxu0 0
      %3497 = vmatpush2.bf16.msra.mxu0 0
      %3498 = vmatprep.subr.bf16.mxu0 0
      %3499 = vmatpush2.bf16.msra.mxu0 0
      %3500 = vmatprep.subr.bf16.mxu0 0
      %3501 = vmatpush2.bf16.msra.mxu0 0
      %3502 = vmatprep.subr.bf16.mxu0 0
      %3503 = vmatpush2.bf16.msra.mxu0 0
      %3504 = vmatprep.mubr.bf16.mxu0 0
      %3505 = vmatmul.mubr.bf16.gmra.mxu0 %v3422
      %v3506 = vpop.f32.mrf.mxu0
      %v3507 = vadd.f32 0.0, %v3506
      %v3508 = vpop.f32.mrf.mxu0
      %v3509 = vpop.f32.mrf.mxu0
      %v3510 = vpop.f32.mrf.mxu0
      %3511 = vdwg.mxu0
      %v3528 = vunpack.c.l.b16 %v3388
      %v3529 = vunpack.c.l.b16 %v3389
      %v3530 = vunpack.c.l.b16 %v3390
      %v3531 = vunpack.c.l.b16 %v3391
      %v3532 = vunpack.c.l.b16 %v3392
      %v3533 = vunpack.c.l.b16 %v3393
      %v3534 = vunpack.c.l.b16 %v3394
      %v3535 = vunpack.c.l.b16 %v3395
      %v3536 = vunpack.c.l.b16 %v3396
      %v3537 = vunpack.c.l.b16 %v3397
      %v3538 = vunpack.c.l.b16 %v3398
      %v3539 = vunpack.c.l.b16 %v3399
      %v3540 = vunpack.c.l.b16 %v3400
      %v3541 = vunpack.c.l.b16 %v3401
      %v3542 = vunpack.c.l.b16 %v3402
      %v3543 = vunpack.c.l.b16 %v3403
      %v3544 = vpack.c.b16 %v3529, %v3528
      %v3545 = vpack.c.b16 %v3531, %v3530
      %v3546 = vpack.c.b16 %v3533, %v3532
      %v3547 = vpack.c.b16 %v3535, %v3534
      %v3548 = vpack.c.b16 %v3537, %v3536
      %v3549 = vpack.c.b16 %v3539, %v3538
      %v3550 = vpack.c.b16 %v3541, %v3540
      %v3551 = vpack.c.b16 %v3543, %v3542
      %3560 = vmatprep.subr.bf16.mxu0 0
      %3561 = vmatpush1.bf16.msra.mxu0 %v3551
      %3562 = vmatprep.subr.bf16.mxu0 0
      %3563 = vmatpush1.bf16.msra.mxu0 %v3550
      %3564 = vmatprep.subr.bf16.mxu0 0
      %3565 = vmatpush1.bf16.msra.mxu0 %v3549
      %3566 = vmatprep.subr.bf16.mxu0 0
      %3567 = vmatpush1.bf16.msra.mxu0 %v3548
      %3568 = vmatprep.subr.bf16.mxu0 0
      %3569 = vmatpush1.bf16.msra.mxu0 %v3547
      %3570 = vmatprep.subr.bf16.mxu0 0
      %3571 = vmatpush1.bf16.msra.mxu0 %v3546
      %3572 = vmatprep.subr.bf16.mxu0 0
      %3573 = vmatpush1.bf16.msra.mxu0 %v3545
      %3574 = vmatprep.subr.bf16.mxu0 0
      %3575 = vmatpush1.bf16.msra.mxu0 %v3544
      %3576 = vmatprep.subr.bf16.mxu0 0
      %3577 = vmatpush2.bf16.msra.mxu0 0
      %3578 = vmatprep.subr.bf16.mxu0 0
      %3579 = vmatpush2.bf16.msra.mxu0 0
      %3580 = vmatprep.subr.bf16.mxu0 0
      %3581 = vmatpush2.bf16.msra.mxu0 0
      %3582 = vmatprep.subr.bf16.mxu0 0
      %3583 = vmatpush2.bf16.msra.mxu0 0
      %3584 = vmatprep.subr.bf16.mxu0 0
      %3585 = vmatpush2.bf16.msra.mxu0 0
      %3586 = vmatprep.subr.bf16.mxu0 0
      %3587 = vmatpush2.bf16.msra.mxu0 0
      %3588 = vmatprep.subr.bf16.mxu0 0
      %3589 = vmatpush2.bf16.msra.mxu0 0
      %3590 = vmatprep.subr.bf16.mxu0 0
      %3591 = vmatpush2.bf16.msra.mxu0 0
      %3592 = vmatprep.mubr.bf16.mxu0 0
      %3593 = vmatmul.mubr.bf16.gmra.mxu0 %v3382
      %v3594 = vpop.f32.mrf.mxu0
      %v3595 = vadd.f32 %v3507, %v3594
      %v3596 = vpop.f32.mrf.mxu0
      %v3597 = vpop.f32.mrf.mxu0
      %v3598 = vpop.f32.mrf.mxu0
      %3599 = vdwg.mxu0
      %s3600 = scalar_lea.vmem %s2, 1344
      %v3601 = vld [vmem:[%s3600] sm:$0xf]
      %v3602 = vld [vmem:[%s3600 + $0x4] sm:$0xf]
      %v3603 = vld [vmem:[%s3600 + $0x8] sm:$0xf]
      %v3604 = vld [vmem:[%s3600 + $0xc] sm:$0xf]
      %v3605 = vld [vmem:[%s3600 + $0x10] sm:$0xf]
      %v3606 = vld [vmem:[%s3600 + $0x14] sm:$0xf]
      %v3607 = vld [vmem:[%s3600 + $0x18] sm:$0xf]
      %v3608 = vld [vmem:[%s3600 + $0x1c] sm:$0xf]
      %v3609 = vld [vmem:[%s3600 + $0x20] sm:$0xf]
      %v3610 = vld [vmem:[%s3600 + $0x24] sm:$0xf]
      %v3611 = vld [vmem:[%s3600 + $0x28] sm:$0xf]
      %v3612 = vld [vmem:[%s3600 + $0x2c] sm:$0xf]
      %v3613 = vld [vmem:[%s3600 + $0x30] sm:$0xf]
      %v3614 = vld [vmem:[%s3600 + $0x34] sm:$0xf]
      %v3615 = vld [vmem:[%s3600 + $0x38] sm:$0xf]
      %v3616 = vld [vmem:[%s3600 + $0x3c] sm:$0xf]
      %v3633 = vunpack.c.l.b16 %v3601
      %v3634 = vunpack.c.l.b16 %v3602
      %v3635 = vunpack.c.l.b16 %v3603
      %v3636 = vunpack.c.l.b16 %v3604
      %v3637 = vunpack.c.l.b16 %v3605
      %v3638 = vunpack.c.l.b16 %v3606
      %v3639 = vunpack.c.l.b16 %v3607
      %v3640 = vunpack.c.l.b16 %v3608
      %v3641 = vunpack.c.l.b16 %v3609
      %v3642 = vunpack.c.l.b16 %v3610
      %v3643 = vunpack.c.l.b16 %v3611
      %v3644 = vunpack.c.l.b16 %v3612
      %v3645 = vunpack.c.l.b16 %v3613
      %v3646 = vunpack.c.l.b16 %v3614
      %v3647 = vunpack.c.l.b16 %v3615
      %v3648 = vunpack.c.l.b16 %v3616
      %v3649 = vpack.c.b16 %v3634, %v3633
      %v3650 = vpack.c.b16 %v3636, %v3635
      %v3651 = vpack.c.b16 %v3638, %v3637
      %v3652 = vpack.c.b16 %v3640, %v3639
      %v3653 = vpack.c.b16 %v3642, %v3641
      %v3654 = vpack.c.b16 %v3644, %v3643
      %v3655 = vpack.c.b16 %v3646, %v3645
      %v3656 = vpack.c.b16 %v3648, %v3647
      %3665 = vmatprep.subr.bf16.mxu0 0
      %3666 = vmatpush1.bf16.msra.mxu0 %v3656
      %3667 = vmatprep.subr.bf16.mxu0 0
      %3668 = vmatpush1.bf16.msra.mxu0 %v3655
      %3669 = vmatprep.subr.bf16.mxu0 0
      %3670 = vmatpush1.bf16.msra.mxu0 %v3654
      %3671 = vmatprep.subr.bf16.mxu0 0
      %3672 = vmatpush1.bf16.msra.mxu0 %v3653
      %3673 = vmatprep.subr.bf16.mxu0 0
      %3674 = vmatpush1.bf16.msra.mxu0 %v3652
      %3675 = vmatprep.subr.bf16.mxu0 0
      %3676 = vmatpush1.bf16.msra.mxu0 %v3651
      %3677 = vmatprep.subr.bf16.mxu0 0
      %3678 = vmatpush1.bf16.msra.mxu0 %v3650
      %3679 = vmatprep.subr.bf16.mxu0 0
      %3680 = vmatpush1.bf16.msra.mxu0 %v3649
      %3681 = vmatprep.subr.bf16.mxu0 0
      %3682 = vmatpush2.bf16.msra.mxu0 0
      %3683 = vmatprep.subr.bf16.mxu0 0
      %3684 = vmatpush2.bf16.msra.mxu0 0
      %3685 = vmatprep.subr.bf16.mxu0 0
      %3686 = vmatpush2.bf16.msra.mxu0 0
      %3687 = vmatprep.subr.bf16.mxu0 0
      %3688 = vmatpush2.bf16.msra.mxu0 0
      %3689 = vmatprep.subr.bf16.mxu0 0
      %3690 = vmatpush2.bf16.msra.mxu0 0
      %3691 = vmatprep.subr.bf16.mxu0 0
      %3692 = vmatpush2.bf16.msra.mxu0 0
      %3693 = vmatprep.subr.bf16.mxu0 0
      %3694 = vmatpush2.bf16.msra.mxu0 0
      %3695 = vmatprep.subr.bf16.mxu0 0
      %3696 = vmatpush2.bf16.msra.mxu0 0
      %3697 = vmatprep.mubr.bf16.mxu0 0
      %3698 = vmatmul.mubr.bf16.gmra.mxu0 %v3383
      %v3699 = vpop.f32.mrf.mxu0
      %v3700 = vadd.f32 0.0, %v3699
      %v3701 = vpop.f32.mrf.mxu0
      %v3702 = vpop.f32.mrf.mxu0
      %v3703 = vpop.f32.mrf.mxu0
      %3704 = vdwg.mxu0
      %v3705 = vadd.f32 %v3595, %v3700
      %s3706 = scalar_lea.vmem %s2, 1408
      %v3707 = vld [vmem:[%s3706] sm:$0xf]
      %v3708 = vld [vmem:[%s3706 + $0x4] sm:$0xf]
      %v3709 = vld [vmem:[%s3706 + $0x8] sm:$0xf]
      %v3710 = vld [vmem:[%s3706 + $0xc] sm:$0xf]
      %v3711 = vld [vmem:[%s3706 + $0x10] sm:$0xf]
      %v3712 = vld [vmem:[%s3706 + $0x14] sm:$0xf]
      %v3713 = vld [vmem:[%s3706 + $0x18] sm:$0xf]
      %v3714 = vld [vmem:[%s3706 + $0x1c] sm:$0xf]
      %v3715 = vld [vmem:[%s3706 + $0x20] sm:$0xf]
      %v3716 = vld [vmem:[%s3706 + $0x24] sm:$0xf]
      %v3717 = vld [vmem:[%s3706 + $0x28] sm:$0xf]
      %v3718 = vld [vmem:[%s3706 + $0x2c] sm:$0xf]
      %v3719 = vld [vmem:[%s3706 + $0x30] sm:$0xf]
      %v3720 = vld [vmem:[%s3706 + $0x34] sm:$0xf]
      %v3721 = vld [vmem:[%s3706 + $0x38] sm:$0xf]
      %v3722 = vld [vmem:[%s3706 + $0x3c] sm:$0xf]
      %v3724 = vrot.slane %v3383, 4
      %v3742 = vunpack.c.l.b16 %v3707
      %v3743 = vunpack.c.l.b16 %v3708
      %v3744 = vunpack.c.l.b16 %v3709
      %v3745 = vunpack.c.l.b16 %v3710
      %v3746 = vunpack.c.l.b16 %v3711
      %v3747 = vunpack.c.l.b16 %v3712
      %v3748 = vunpack.c.l.b16 %v3713
      %v3749 = vunpack.c.l.b16 %v3714
      %v3750 = vunpack.c.l.b16 %v3715
      %v3751 = vunpack.c.l.b16 %v3716
      %v3752 = vunpack.c.l.b16 %v3717
      %v3753 = vunpack.c.l.b16 %v3718
      %v3754 = vunpack.c.l.b16 %v3719
      %v3755 = vunpack.c.l.b16 %v3720
      %v3756 = vunpack.c.l.b16 %v3721
      %v3757 = vunpack.c.l.b16 %v3722
      %v3758 = vpack.c.b16 %v3743, %v3742
      %v3759 = vpack.c.b16 %v3745, %v3744
      %v3760 = vpack.c.b16 %v3747, %v3746
      %v3761 = vpack.c.b16 %v3749, %v3748
      %v3762 = vpack.c.b16 %v3751, %v3750
      %v3763 = vpack.c.b16 %v3753, %v3752
      %v3764 = vpack.c.b16 %v3755, %v3754
      %v3765 = vpack.c.b16 %v3757, %v3756
      %3774 = vmatprep.subr.bf16.mxu0 0
      %3775 = vmatpush1.bf16.msra.mxu0 %v3765
      %3776 = vmatprep.subr.bf16.mxu0 0
      %3777 = vmatpush1.bf16.msra.mxu0 %v3764
      %3778 = vmatprep.subr.bf16.mxu0 0
      %3779 = vmatpush1.bf16.msra.mxu0 %v3763
      %3780 = vmatprep.subr.bf16.mxu0 0
      %3781 = vmatpush1.bf16.msra.mxu0 %v3762
      %3782 = vmatprep.subr.bf16.mxu0 0
      %3783 = vmatpush1.bf16.msra.mxu0 %v3761
      %3784 = vmatprep.subr.bf16.mxu0 0
      %3785 = vmatpush1.bf16.msra.mxu0 %v3760
      %3786 = vmatprep.subr.bf16.mxu0 0
      %3787 = vmatpush1.bf16.msra.mxu0 %v3759
      %3788 = vmatprep.subr.bf16.mxu0 0
      %3789 = vmatpush1.bf16.msra.mxu0 %v3758
      %3790 = vmatprep.subr.bf16.mxu0 0
      %3791 = vmatpush2.bf16.msra.mxu0 0
      %3792 = vmatprep.subr.bf16.mxu0 0
      %3793 = vmatpush2.bf16.msra.mxu0 0
      %3794 = vmatprep.subr.bf16.mxu0 0
      %3795 = vmatpush2.bf16.msra.mxu0 0
      %3796 = vmatprep.subr.bf16.mxu0 0
      %3797 = vmatpush2.bf16.msra.mxu0 0
      %3798 = vmatprep.subr.bf16.mxu0 0
      %3799 = vmatpush2.bf16.msra.mxu0 0
      %3800 = vmatprep.subr.bf16.mxu0 0
      %3801 = vmatpush2.bf16.msra.mxu0 0
      %3802 = vmatprep.subr.bf16.mxu0 0
      %3803 = vmatpush2.bf16.msra.mxu0 0
      %3804 = vmatprep.subr.bf16.mxu0 0
      %3805 = vmatpush2.bf16.msra.mxu0 0
      %3806 = vmatprep.mubr.bf16.mxu0 0
      %3807 = vmatmul.mubr.bf16.gmra.mxu0 %v3724
      %v3808 = vpop.f32.mrf.mxu0
      %v3809 = vadd.f32 0.0, %v3808
      %v3810 = vpop.f32.mrf.mxu0
      %v3811 = vpop.f32.mrf.mxu0
      %v3812 = vpop.f32.mrf.mxu0
      %3813 = vdwg.mxu0
      %v3814 = vadd.f32 %v3705, %v3809
      %s3815 = scalar_lea.vmem %s2, 1472
      %v3816 = vld [vmem:[%s3815] sm:$0xf]
      %v3817 = vld [vmem:[%s3815 + $0x4] sm:$0xf]
      %v3818 = vld [vmem:[%s3815 + $0x8] sm:$0xf]
      %v3819 = vld [vmem:[%s3815 + $0xc] sm:$0xf]
      %v3820 = vld [vmem:[%s3815 + $0x10] sm:$0xf]
      %v3821 = vld [vmem:[%s3815 + $0x14] sm:$0xf]
      %v3822 = vld [vmem:[%s3815 + $0x18] sm:$0xf]
      %v3823 = vld [vmem:[%s3815 + $0x1c] sm:$0xf]
      %v3824 = vld [vmem:[%s3815 + $0x20] sm:$0xf]
      %v3825 = vld [vmem:[%s3815 + $0x24] sm:$0xf]
      %v3826 = vld [vmem:[%s3815 + $0x28] sm:$0xf]
      %v3827 = vld [vmem:[%s3815 + $0x2c] sm:$0xf]
      %v3828 = vld [vmem:[%s3815 + $0x30] sm:$0xf]
      %v3829 = vld [vmem:[%s3815 + $0x34] sm:$0xf]
      %v3830 = vld [vmem:[%s3815 + $0x38] sm:$0xf]
      %v3831 = vld [vmem:[%s3815 + $0x3c] sm:$0xf]
      %v3848 = vunpack.c.l.b16 %v3816
      %v3849 = vunpack.c.l.b16 %v3817
      %v3850 = vunpack.c.l.b16 %v3818
      %v3851 = vunpack.c.l.b16 %v3819
      %v3852 = vunpack.c.l.b16 %v3820
      %v3853 = vunpack.c.l.b16 %v3821
      %v3854 = vunpack.c.l.b16 %v3822
      %v3855 = vunpack.c.l.b16 %v3823
      %v3856 = vunpack.c.l.b16 %v3824
      %v3857 = vunpack.c.l.b16 %v3825
      %v3858 = vunpack.c.l.b16 %v3826
      %v3859 = vunpack.c.l.b16 %v3827
      %v3860 = vunpack.c.l.b16 %v3828
      %v3861 = vunpack.c.l.b16 %v3829
      %v3862 = vunpack.c.l.b16 %v3830
      %v3863 = vunpack.c.l.b16 %v3831
      %v3864 = vpack.c.b16 %v3849, %v3848
      %v3865 = vpack.c.b16 %v3851, %v3850
      %v3866 = vpack.c.b16 %v3853, %v3852
      %v3867 = vpack.c.b16 %v3855, %v3854
      %v3868 = vpack.c.b16 %v3857, %v3856
      %v3869 = vpack.c.b16 %v3859, %v3858
      %v3870 = vpack.c.b16 %v3861, %v3860
      %v3871 = vpack.c.b16 %v3863, %v3862
      %3880 = vmatprep.subr.bf16.mxu0 0
      %3881 = vmatpush1.bf16.msra.mxu0 %v3871
      %3882 = vmatprep.subr.bf16.mxu0 0
      %3883 = vmatpush1.bf16.msra.mxu0 %v3870
      %3884 = vmatprep.subr.bf16.mxu0 0
      %3885 = vmatpush1.bf16.msra.mxu0 %v3869
      %3886 = vmatprep.subr.bf16.mxu0 0
      %3887 = vmatpush1.bf16.msra.mxu0 %v3868
      %3888 = vmatprep.subr.bf16.mxu0 0
      %3889 = vmatpush1.bf16.msra.mxu0 %v3867
      %3890 = vmatprep.subr.bf16.mxu0 0
      %3891 = vmatpush1.bf16.msra.mxu0 %v3866
      %3892 = vmatprep.subr.bf16.mxu0 0
      %3893 = vmatpush1.bf16.msra.mxu0 %v3865
      %3894 = vmatprep.subr.bf16.mxu0 0
      %3895 = vmatpush1.bf16.msra.mxu0 %v3864
      %3896 = vmatprep.subr.bf16.mxu0 0
      %3897 = vmatpush2.bf16.msra.mxu0 0
      %3898 = vmatprep.subr.bf16.mxu0 0
      %3899 = vmatpush2.bf16.msra.mxu0 0
      %3900 = vmatprep.subr.bf16.mxu0 0
      %3901 = vmatpush2.bf16.msra.mxu0 0
      %3902 = vmatprep.subr.bf16.mxu0 0
      %3903 = vmatpush2.bf16.msra.mxu0 0
      %3904 = vmatprep.subr.bf16.mxu0 0
      %3905 = vmatpush2.bf16.msra.mxu0 0
      %3906 = vmatprep.subr.bf16.mxu0 0
      %3907 = vmatpush2.bf16.msra.mxu0 0
      %3908 = vmatprep.subr.bf16.mxu0 0
      %3909 = vmatpush2.bf16.msra.mxu0 0
      %3910 = vmatprep.subr.bf16.mxu0 0
      %3911 = vmatpush2.bf16.msra.mxu0 0
      %3912 = vmatprep.mubr.bf16.mxu0 0
      %3913 = vmatmul.mubr.bf16.gmra.mxu0 %v3384
      %v3914 = vpop.f32.mrf.mxu0
      %v3915 = vadd.f32 0.0, %v3914
      %v3916 = vpop.f32.mrf.mxu0
      %v3917 = vpop.f32.mrf.mxu0
      %v3918 = vpop.f32.mrf.mxu0
      %3919 = vdwg.mxu0
      %v3920 = vadd.f32 %v3814, %v3915
      %s3921 = scalar_lea.vmem %s2, 1536
      %v3922 = vld [vmem:[%s3921] sm:$0xf]
      %v3923 = vld [vmem:[%s3921 + $0x4] sm:$0xf]
      %v3924 = vld [vmem:[%s3921 + $0x8] sm:$0xf]
      %v3925 = vld [vmem:[%s3921 + $0xc] sm:$0xf]
      %v3926 = vld [vmem:[%s3921 + $0x10] sm:$0xf]
      %v3927 = vld [vmem:[%s3921 + $0x14] sm:$0xf]
      %v3928 = vld [vmem:[%s3921 + $0x18] sm:$0xf]
      %v3929 = vld [vmem:[%s3921 + $0x1c] sm:$0xf]
      %v3930 = vld [vmem:[%s3921 + $0x20] sm:$0xf]
      %v3931 = vld [vmem:[%s3921 + $0x24] sm:$0xf]
      %v3932 = vld [vmem:[%s3921 + $0x28] sm:$0xf]
      %v3933 = vld [vmem:[%s3921 + $0x2c] sm:$0xf]
      %v3934 = vld [vmem:[%s3921 + $0x30] sm:$0xf]
      %v3935 = vld [vmem:[%s3921 + $0x34] sm:$0xf]
      %v3936 = vld [vmem:[%s3921 + $0x38] sm:$0xf]
      %v3937 = vld [vmem:[%s3921 + $0x3c] sm:$0xf]
      %v3939 = vrot.slane %v3384, 4
      %v3957 = vunpack.c.l.b16 %v3922
      %v3958 = vunpack.c.l.b16 %v3923
      %v3959 = vunpack.c.l.b16 %v3924
      %v3960 = vunpack.c.l.b16 %v3925
      %v3961 = vunpack.c.l.b16 %v3926
      %v3962 = vunpack.c.l.b16 %v3927
      %v3963 = vunpack.c.l.b16 %v3928
      %v3964 = vunpack.c.l.b16 %v3929
      %v3965 = vunpack.c.l.b16 %v3930
      %v3966 = vunpack.c.l.b16 %v3931
      %v3967 = vunpack.c.l.b16 %v3932
      %v3968 = vunpack.c.l.b16 %v3933
      %v3969 = vunpack.c.l.b16 %v3934
      %v3970 = vunpack.c.l.b16 %v3935
      %v3971 = vunpack.c.l.b16 %v3936
      %v3972 = vunpack.c.l.b16 %v3937
      %v3973 = vpack.c.b16 %v3958, %v3957
      %v3974 = vpack.c.b16 %v3960, %v3959
      %v3975 = vpack.c.b16 %v3962, %v3961
      %v3976 = vpack.c.b16 %v3964, %v3963
      %v3977 = vpack.c.b16 %v3966, %v3965
      %v3978 = vpack.c.b16 %v3968, %v3967
      %v3979 = vpack.c.b16 %v3970, %v3969
      %v3980 = vpack.c.b16 %v3972, %v3971
      %3989 = vmatprep.subr.bf16.mxu0 0
      %3990 = vmatpush1.bf16.msra.mxu0 %v3980
      %3991 = vmatprep.subr.bf16.mxu0 0
      %3992 = vmatpush1.bf16.msra.mxu0 %v3979
      %3993 = vmatprep.subr.bf16.mxu0 0
      %3994 = vmatpush1.bf16.msra.mxu0 %v3978
      %3995 = vmatprep.subr.bf16.mxu0 0
      %3996 = vmatpush1.bf16.msra.mxu0 %v3977
      %3997 = vmatprep.subr.bf16.mxu0 0
      %3998 = vmatpush1.bf16.msra.mxu0 %v3976
      %3999 = vmatprep.subr.bf16.mxu0 0
      %4000 = vmatpush1.bf16.msra.mxu0 %v3975
      %4001 = vmatprep.subr.bf16.mxu0 0
      %4002 = vmatpush1.bf16.msra.mxu0 %v3974
      %4003 = vmatprep.subr.bf16.mxu0 0
      %4004 = vmatpush1.bf16.msra.mxu0 %v3973
      %4005 = vmatprep.subr.bf16.mxu0 0
      %4006 = vmatpush2.bf16.msra.mxu0 0
      %4007 = vmatprep.subr.bf16.mxu0 0
      %4008 = vmatpush2.bf16.msra.mxu0 0
      %4009 = vmatprep.subr.bf16.mxu0 0
      %4010 = vmatpush2.bf16.msra.mxu0 0
      %4011 = vmatprep.subr.bf16.mxu0 0
      %4012 = vmatpush2.bf16.msra.mxu0 0
      %4013 = vmatprep.subr.bf16.mxu0 0
      %4014 = vmatpush2.bf16.msra.mxu0 0
      %4015 = vmatprep.subr.bf16.mxu0 0
      %4016 = vmatpush2.bf16.msra.mxu0 0
      %4017 = vmatprep.subr.bf16.mxu0 0
      %4018 = vmatpush2.bf16.msra.mxu0 0
      %4019 = vmatprep.subr.bf16.mxu0 0
      %4020 = vmatpush2.bf16.msra.mxu0 0
      %4021 = vmatprep.mubr.bf16.mxu0 0
      %4022 = vmatmul.mubr.bf16.gmra.mxu0 %v3939
      %v4023 = vpop.f32.mrf.mxu0
      %v4024 = vadd.f32 0.0, %v4023
      %v4025 = vpop.f32.mrf.mxu0
      %v4026 = vpop.f32.mrf.mxu0
      %v4027 = vpop.f32.mrf.mxu0
      %4028 = vdwg.mxu0
      %v4029 = vadd.f32 %v3920, %v4024
      %s4030 = scalar_lea.vmem %s2, 1600
      %v4031 = vld [vmem:[%s4030] sm:$0xf]
      %v4032 = vld [vmem:[%s4030 + $0x4] sm:$0xf]
      %v4033 = vld [vmem:[%s4030 + $0x8] sm:$0xf]
      %v4034 = vld [vmem:[%s4030 + $0xc] sm:$0xf]
      %v4035 = vld [vmem:[%s4030 + $0x10] sm:$0xf]
      %v4036 = vld [vmem:[%s4030 + $0x14] sm:$0xf]
      %v4037 = vld [vmem:[%s4030 + $0x18] sm:$0xf]
      %v4038 = vld [vmem:[%s4030 + $0x1c] sm:$0xf]
      %v4039 = vld [vmem:[%s4030 + $0x20] sm:$0xf]
      %v4040 = vld [vmem:[%s4030 + $0x24] sm:$0xf]
      %v4041 = vld [vmem:[%s4030 + $0x28] sm:$0xf]
      %v4042 = vld [vmem:[%s4030 + $0x2c] sm:$0xf]
      %v4043 = vld [vmem:[%s4030 + $0x30] sm:$0xf]
      %v4044 = vld [vmem:[%s4030 + $0x34] sm:$0xf]
      %v4045 = vld [vmem:[%s4030 + $0x38] sm:$0xf]
      %v4046 = vld [vmem:[%s4030 + $0x3c] sm:$0xf]
      %v4063 = vunpack.c.l.b16 %v4031
      %v4064 = vunpack.c.l.b16 %v4032
      %v4065 = vunpack.c.l.b16 %v4033
      %v4066 = vunpack.c.l.b16 %v4034
      %v4067 = vunpack.c.l.b16 %v4035
      %v4068 = vunpack.c.l.b16 %v4036
      %v4069 = vunpack.c.l.b16 %v4037
      %v4070 = vunpack.c.l.b16 %v4038
      %v4071 = vunpack.c.l.b16 %v4039
      %v4072 = vunpack.c.l.b16 %v4040
      %v4073 = vunpack.c.l.b16 %v4041
      %v4074 = vunpack.c.l.b16 %v4042
      %v4075 = vunpack.c.l.b16 %v4043
      %v4076 = vunpack.c.l.b16 %v4044
      %v4077 = vunpack.c.l.b16 %v4045
      %v4078 = vunpack.c.l.b16 %v4046
      %v4079 = vpack.c.b16 %v4064, %v4063
      %v4080 = vpack.c.b16 %v4066, %v4065
      %v4081 = vpack.c.b16 %v4068, %v4067
      %v4082 = vpack.c.b16 %v4070, %v4069
      %v4083 = vpack.c.b16 %v4072, %v4071
      %v4084 = vpack.c.b16 %v4074, %v4073
      %v4085 = vpack.c.b16 %v4076, %v4075
      %v4086 = vpack.c.b16 %v4078, %v4077
      %4095 = vmatprep.subr.bf16.mxu0 0
      %4096 = vmatpush1.bf16.msra.mxu0 %v4086
      %4097 = vmatprep.subr.bf16.mxu0 0
      %4098 = vmatpush1.bf16.msra.mxu0 %v4085
      %4099 = vmatprep.subr.bf16.mxu0 0
      %4100 = vmatpush1.bf16.msra.mxu0 %v4084
      %4101 = vmatprep.subr.bf16.mxu0 0
      %4102 = vmatpush1.bf16.msra.mxu0 %v4083
      %4103 = vmatprep.subr.bf16.mxu0 0
      %4104 = vmatpush1.bf16.msra.mxu0 %v4082
      %4105 = vmatprep.subr.bf16.mxu0 0
      %4106 = vmatpush1.bf16.msra.mxu0 %v4081
      %4107 = vmatprep.subr.bf16.mxu0 0
      %4108 = vmatpush1.bf16.msra.mxu0 %v4080
      %4109 = vmatprep.subr.bf16.mxu0 0
      %4110 = vmatpush1.bf16.msra.mxu0 %v4079
      %4111 = vmatprep.subr.bf16.mxu0 0
      %4112 = vmatpush2.bf16.msra.mxu0 0
      %4113 = vmatprep.subr.bf16.mxu0 0
      %4114 = vmatpush2.bf16.msra.mxu0 0
      %4115 = vmatprep.subr.bf16.mxu0 0
      %4116 = vmatpush2.bf16.msra.mxu0 0
      %4117 = vmatprep.subr.bf16.mxu0 0
      %4118 = vmatpush2.bf16.msra.mxu0 0
      %4119 = vmatprep.subr.bf16.mxu0 0
      %4120 = vmatpush2.bf16.msra.mxu0 0
      %4121 = vmatprep.subr.bf16.mxu0 0
      %4122 = vmatpush2.bf16.msra.mxu0 0
      %4123 = vmatprep.subr.bf16.mxu0 0
      %4124 = vmatpush2.bf16.msra.mxu0 0
      %4125 = vmatprep.subr.bf16.mxu0 0
      %4126 = vmatpush2.bf16.msra.mxu0 0
      %4127 = vmatprep.mubr.bf16.mxu0 0
      %4128 = vmatmul.mubr.bf16.gmra.mxu0 %v3385
      %v4129 = vpop.f32.mrf.mxu0
      %v4130 = vadd.f32 0.0, %v4129
      %v4131 = vpop.f32.mrf.mxu0
      %v4132 = vpop.f32.mrf.mxu0
      %v4133 = vpop.f32.mrf.mxu0
      %4134 = vdwg.mxu0
      %v4135 = vadd.f32 %v4029, %v4130
      %s4136 = scalar_lea.vmem %s2, 1664
      %v4137 = vld [vmem:[%s4136] sm:$0xf]
      %v4138 = vld [vmem:[%s4136 + $0x4] sm:$0xf]
      %v4139 = vld [vmem:[%s4136 + $0x8] sm:$0xf]
      %v4140 = vld [vmem:[%s4136 + $0xc] sm:$0xf]
      %v4141 = vld [vmem:[%s4136 + $0x10] sm:$0xf]
      %v4142 = vld [vmem:[%s4136 + $0x14] sm:$0xf]
      %v4143 = vld [vmem:[%s4136 + $0x18] sm:$0xf]
      %v4144 = vld [vmem:[%s4136 + $0x1c] sm:$0xf]
      %v4145 = vld [vmem:[%s4136 + $0x20] sm:$0xf]
      %v4146 = vld [vmem:[%s4136 + $0x24] sm:$0xf]
      %v4147 = vld [vmem:[%s4136 + $0x28] sm:$0xf]
      %v4148 = vld [vmem:[%s4136 + $0x2c] sm:$0xf]
      %v4149 = vld [vmem:[%s4136 + $0x30] sm:$0xf]
      %v4150 = vld [vmem:[%s4136 + $0x34] sm:$0xf]
      %v4151 = vld [vmem:[%s4136 + $0x38] sm:$0xf]
      %v4152 = vld [vmem:[%s4136 + $0x3c] sm:$0xf]
      %v4154 = vrot.slane %v3385, 4
      %v4172 = vunpack.c.l.b16 %v4137
      %v4173 = vunpack.c.l.b16 %v4138
      %v4174 = vunpack.c.l.b16 %v4139
      %v4175 = vunpack.c.l.b16 %v4140
      %v4176 = vunpack.c.l.b16 %v4141
      %v4177 = vunpack.c.l.b16 %v4142
      %v4178 = vunpack.c.l.b16 %v4143
      %v4179 = vunpack.c.l.b16 %v4144
      %v4180 = vunpack.c.l.b16 %v4145
      %v4181 = vunpack.c.l.b16 %v4146
      %v4182 = vunpack.c.l.b16 %v4147
      %v4183 = vunpack.c.l.b16 %v4148
      %v4184 = vunpack.c.l.b16 %v4149
      %v4185 = vunpack.c.l.b16 %v4150
      %v4186 = vunpack.c.l.b16 %v4151
      %v4187 = vunpack.c.l.b16 %v4152
      %v4188 = vpack.c.b16 %v4173, %v4172
      %v4189 = vpack.c.b16 %v4175, %v4174
      %v4190 = vpack.c.b16 %v4177, %v4176
      %v4191 = vpack.c.b16 %v4179, %v4178
      %v4192 = vpack.c.b16 %v4181, %v4180
      %v4193 = vpack.c.b16 %v4183, %v4182
      %v4194 = vpack.c.b16 %v4185, %v4184
      %v4195 = vpack.c.b16 %v4187, %v4186
      %4204 = vmatprep.subr.bf16.mxu0 0
      %4205 = vmatpush1.bf16.msra.mxu0 %v4195
      %4206 = vmatprep.subr.bf16.mxu0 0
      %4207 = vmatpush1.bf16.msra.mxu0 %v4194
      %4208 = vmatprep.subr.bf16.mxu0 0
      %4209 = vmatpush1.bf16.msra.mxu0 %v4193
      %4210 = vmatprep.subr.bf16.mxu0 0
      %4211 = vmatpush1.bf16.msra.mxu0 %v4192
      %4212 = vmatprep.subr.bf16.mxu0 0
      %4213 = vmatpush1.bf16.msra.mxu0 %v4191
      %4214 = vmatprep.subr.bf16.mxu0 0
      %4215 = vmatpush1.bf16.msra.mxu0 %v4190
      %4216 = vmatprep.subr.bf16.mxu0 0
      %4217 = vmatpush1.bf16.msra.mxu0 %v4189
      %4218 = vmatprep.subr.bf16.mxu0 0
      %4219 = vmatpush1.bf16.msra.mxu0 %v4188
      %4220 = vmatprep.subr.bf16.mxu0 0
      %4221 = vmatpush2.bf16.msra.mxu0 0
      %4222 = vmatprep.subr.bf16.mxu0 0
      %4223 = vmatpush2.bf16.msra.mxu0 0
      %4224 = vmatprep.subr.bf16.mxu0 0
      %4225 = vmatpush2.bf16.msra.mxu0 0
      %4226 = vmatprep.subr.bf16.mxu0 0
      %4227 = vmatpush2.bf16.msra.mxu0 0
      %4228 = vmatprep.subr.bf16.mxu0 0
      %4229 = vmatpush2.bf16.msra.mxu0 0
      %4230 = vmatprep.subr.bf16.mxu0 0
      %4231 = vmatpush2.bf16.msra.mxu0 0
      %4232 = vmatprep.subr.bf16.mxu0 0
      %4233 = vmatpush2.bf16.msra.mxu0 0
      %4234 = vmatprep.subr.bf16.mxu0 0
      %4235 = vmatpush2.bf16.msra.mxu0 0
      %4236 = vmatprep.mubr.bf16.mxu0 0
      %4237 = vmatmul.mubr.bf16.gmra.mxu0 %v4154
      %v4238 = vpop.f32.mrf.mxu0
      %v4239 = vadd.f32 0.0, %v4238
      %v4240 = vpop.f32.mrf.mxu0
      %v4241 = vpop.f32.mrf.mxu0
      %v4242 = vpop.f32.mrf.mxu0
      %4243 = vdwg.mxu0
      %v4244 = vadd.f32 %v4135, %v4239
      %s4245 = scalar_lea.vmem %s2, 1728
      %v4246 = vld [vmem:[%s4245] sm:$0xf]
      %v4247 = vld [vmem:[%s4245 + $0x4] sm:$0xf]
      %v4248 = vld [vmem:[%s4245 + $0x8] sm:$0xf]
      %v4249 = vld [vmem:[%s4245 + $0xc] sm:$0xf]
      %v4250 = vld [vmem:[%s4245 + $0x10] sm:$0xf]
      %v4251 = vld [vmem:[%s4245 + $0x14] sm:$0xf]
      %v4252 = vld [vmem:[%s4245 + $0x18] sm:$0xf]
      %v4253 = vld [vmem:[%s4245 + $0x1c] sm:$0xf]
      %v4254 = vld [vmem:[%s4245 + $0x20] sm:$0xf]
      %v4255 = vld [vmem:[%s4245 + $0x24] sm:$0xf]
      %v4256 = vld [vmem:[%s4245 + $0x28] sm:$0xf]
      %v4257 = vld [vmem:[%s4245 + $0x2c] sm:$0xf]
      %v4258 = vld [vmem:[%s4245 + $0x30] sm:$0xf]
      %v4259 = vld [vmem:[%s4245 + $0x34] sm:$0xf]
      %v4260 = vld [vmem:[%s4245 + $0x38] sm:$0xf]
      %v4261 = vld [vmem:[%s4245 + $0x3c] sm:$0xf]
      %v4278 = vunpack.c.l.b16 %v4246
      %v4279 = vunpack.c.l.b16 %v4247
      %v4280 = vunpack.c.l.b16 %v4248
      %v4281 = vunpack.c.l.b16 %v4249
      %v4282 = vunpack.c.l.b16 %v4250
      %v4283 = vunpack.c.l.b16 %v4251
      %v4284 = vunpack.c.l.b16 %v4252
      %v4285 = vunpack.c.l.b16 %v4253
      %v4286 = vunpack.c.l.b16 %v4254
      %v4287 = vunpack.c.l.b16 %v4255
      %v4288 = vunpack.c.l.b16 %v4256
      %v4289 = vunpack.c.l.b16 %v4257
      %v4290 = vunpack.c.l.b16 %v4258
      %v4291 = vunpack.c.l.b16 %v4259
      %v4292 = vunpack.c.l.b16 %v4260
      %v4293 = vunpack.c.l.b16 %v4261
      %v4294 = vpack.c.b16 %v4279, %v4278
      %v4295 = vpack.c.b16 %v4281, %v4280
      %v4296 = vpack.c.b16 %v4283, %v4282
      %v4297 = vpack.c.b16 %v4285, %v4284
      %v4298 = vpack.c.b16 %v4287, %v4286
      %v4299 = vpack.c.b16 %v4289, %v4288
      %v4300 = vpack.c.b16 %v4291, %v4290
      %v4301 = vpack.c.b16 %v4293, %v4292
      %4310 = vmatprep.subr.bf16.mxu0 0
      %4311 = vmatpush1.bf16.msra.mxu0 %v4301
      %4312 = vmatprep.subr.bf16.mxu0 0
      %4313 = vmatpush1.bf16.msra.mxu0 %v4300
      %4314 = vmatprep.subr.bf16.mxu0 0
      %4315 = vmatpush1.bf16.msra.mxu0 %v4299
      %4316 = vmatprep.subr.bf16.mxu0 0
      %4317 = vmatpush1.bf16.msra.mxu0 %v4298
      %4318 = vmatprep.subr.bf16.mxu0 0
      %4319 = vmatpush1.bf16.msra.mxu0 %v4297
      %4320 = vmatprep.subr.bf16.mxu0 0
      %4321 = vmatpush1.bf16.msra.mxu0 %v4296
      %4322 = vmatprep.subr.bf16.mxu0 0
      %4323 = vmatpush1.bf16.msra.mxu0 %v4295
      %4324 = vmatprep.subr.bf16.mxu0 0
      %4325 = vmatpush1.bf16.msra.mxu0 %v4294
      %4326 = vmatprep.subr.bf16.mxu0 0
      %4327 = vmatpush2.bf16.msra.mxu0 0
      %4328 = vmatprep.subr.bf16.mxu0 0
      %4329 = vmatpush2.bf16.msra.mxu0 0
      %4330 = vmatprep.subr.bf16.mxu0 0
      %4331 = vmatpush2.bf16.msra.mxu0 0
      %4332 = vmatprep.subr.bf16.mxu0 0
      %4333 = vmatpush2.bf16.msra.mxu0 0
      %4334 = vmatprep.subr.bf16.mxu0 0
      %4335 = vmatpush2.bf16.msra.mxu0 0
      %4336 = vmatprep.subr.bf16.mxu0 0
      %4337 = vmatpush2.bf16.msra.mxu0 0
      %4338 = vmatprep.subr.bf16.mxu0 0
      %4339 = vmatpush2.bf16.msra.mxu0 0
      %4340 = vmatprep.subr.bf16.mxu0 0
      %4341 = vmatpush2.bf16.msra.mxu0 0
      %4342 = vmatprep.mubr.bf16.mxu0 0
      %4343 = vmatmul.mubr.bf16.gmra.mxu0 %v3386
      %v4344 = vpop.f32.mrf.mxu0
      %v4345 = vadd.f32 0.0, %v4344
      %v4346 = vpop.f32.mrf.mxu0
      %v4347 = vpop.f32.mrf.mxu0
      %v4348 = vpop.f32.mrf.mxu0
      %4349 = vdwg.mxu0
      %v4350 = vadd.f32 %v4244, %v4345
      %v4351 = vld [vmem:[%s3 + $0x4] sm:$0x1]
      %v4352 = vlaneseq
      %v4353 = vshrl.u32 %v4352, 7
      %v4354 = vsub.s32 0, %v4353
      %v4355 = vrot.slane %v4351, %v4354
      %v4356 = vadd.f32 %v4350, %v4355
      %v4357 = vmax.f32 %v4356, 0.0
      %v4358 = vpack.c.bf16 %v4357, %v4357
      %v4359 = vld [vmem:[%s8] sm:$0xf]
      %v4360 = vld [vmem:[%s8 + $0x4] sm:$0xf]
      %v4361 = vld [vmem:[%s8 + $0x8] sm:$0xf]
      %v4362 = vld [vmem:[%s8 + $0xc] sm:$0xf]
      %v4363 = vld [vmem:[%s8 + $0x10] sm:$0xf]
      %v4364 = vld [vmem:[%s8 + $0x14] sm:$0xf]
      %v4365 = vld [vmem:[%s8 + $0x18] sm:$0xf]
      %v4366 = vld [vmem:[%s8 + $0x1c] sm:$0xf]
      %v4367 = vld [vmem:[%s8 + $0x20] sm:$0xf]
      %v4377 = vunpack.c.l.b16 %v4359
      %v4378 = vunpack.c.l.b16 %v4360
      %v4379 = vunpack.c.l.b16 %v4361
      %v4380 = vunpack.c.l.b16 %v4362
      %v4381 = vunpack.c.l.b16 %v4363
      %v4382 = vunpack.c.l.b16 %v4364
      %v4383 = vunpack.c.l.b16 %v4365
      %v4384 = vunpack.c.l.b16 %v4366
      %v4385 = vunpack.c.l.b16 %v4367
      %v4386 = vpack.c.b16 %v4378, %v4377
      %v4387 = vpack.c.b16 %v4380, %v4379
      %v4388 = vpack.c.b16 %v4382, %v4381
      %v4389 = vpack.c.b16 %v4384, %v4383
      %v4390 = vpack.c.b16 %v4385, %v4385
      %vm4391 = vcmask 64512
      %v4393 = vsel %vm4391, %v4386, 0
      %v4396 = vsel %vm4391, %v4387, 0
      %v4399 = vsel %vm4391, %v4388, 0
      %v4402 = vsel %vm4391, %v4389, 0
      %v4405 = vsel %vm4391, %v4390, 0
      %vm4407 = vcmask 1043456
      %v4409 = vsel %vm4407, %v4358, 0
      %4411 = vmatprep.subr.bf16.mxu0 0
      %4412 = vmatpush1.bf16.msra.mxu0 0
      %4413 = vmatprep.subr.bf16.mxu0 0
      %4414 = vmatpush1.bf16.msra.mxu0 0
      %4415 = vmatprep.subr.bf16.mxu0 0
      %4416 = vmatpush1.bf16.msra.mxu0 0
      %4417 = vmatprep.subr.bf16.mxu0 0
      %4418 = vmatpush1.bf16.msra.mxu0 0
      %4419 = vmatprep.subr.bf16.mxu0 0
      %4420 = vmatpush1.bf16.msra.mxu0 0
      %4421 = vmatprep.subr.bf16.mxu0 0
      %4422 = vmatpush1.bf16.msra.mxu0 0
      %4423 = vmatprep.subr.bf16.mxu0 0
      %4424 = vmatpush1.bf16.msra.mxu0 0
      %4425 = vmatprep.subr.bf16.mxu0 0
      %4426 = vmatpush1.bf16.msra.mxu0 %v4409
      %4427 = vmatprep.subr.bf16.mxu0 0
      %4428 = vmatpush2.bf16.msra.mxu0 0
      %4429 = vmatprep.subr.bf16.mxu0 0
      %4430 = vmatpush2.bf16.msra.mxu0 0
      %4431 = vmatprep.subr.bf16.mxu0 0
      %4432 = vmatpush2.bf16.msra.mxu0 0
      %4433 = vmatprep.subr.bf16.mxu0 0
      %4434 = vmatpush2.bf16.msra.mxu0 0
      %4435 = vmatprep.subr.bf16.mxu0 0
      %4436 = vmatpush2.bf16.msra.mxu0 0
      %4437 = vmatprep.subr.bf16.mxu0 0
      %4438 = vmatpush2.bf16.msra.mxu0 0
      %4439 = vmatprep.subr.bf16.mxu0 0
      %4440 = vmatpush2.bf16.msra.mxu0 0
      %4441 = vmatprep.subr.bf16.mxu0 0
      %4442 = vmatpush2.bf16.msra.mxu0 0
      %4443 = vmatprep.mubr.bf16.mxu0 0
      %4444 = vmatmul.mubr.bf16.gmra.mxu0 %v4393
      %v4445 = vpop.f32.mrf.mxu0
      %v4446 = vadd.f32 0.0, %v4445
      %v4447 = vpop.f32.mrf.mxu0
      %v4448 = vpop.f32.mrf.mxu0
      %v4449 = vadd.f32 0.0, %v4448
      %v4450 = vpop.f32.mrf.mxu0
      %4451 = vmatprep.mubr.bf16.mxu0 0
      %4452 = vmatmul.mubr.bf16.gmra.mxu0 %v4396
      %v4453 = vpop.f32.mrf.mxu0
      %v4454 = vadd.f32 0.0, %v4453
      %v4455 = vpop.f32.mrf.mxu0
      %v4456 = vpop.f32.mrf.mxu0
      %v4457 = vadd.f32 0.0, %v4456
      %v4458 = vpop.f32.mrf.mxu0
      %4459 = vmatprep.mubr.bf16.mxu0 0
      %4460 = vmatmul.mubr.bf16.gmra.mxu0 %v4399
      %v4461 = vpop.f32.mrf.mxu0
      %v4462 = vadd.f32 0.0, %v4461
      %v4463 = vpop.f32.mrf.mxu0
      %v4464 = vpop.f32.mrf.mxu0
      %v4465 = vadd.f32 0.0, %v4464
      %v4466 = vpop.f32.mrf.mxu0
      %4467 = vmatprep.mubr.bf16.mxu0 0
      %4468 = vmatmul.mubr.bf16.gmra.mxu0 %v4402
      %v4469 = vpop.f32.mrf.mxu0
      %v4470 = vadd.f32 0.0, %v4469
      %v4471 = vpop.f32.mrf.mxu0
      %v4472 = vpop.f32.mrf.mxu0
      %v4473 = vadd.f32 0.0, %v4472
      %v4474 = vpop.f32.mrf.mxu0
      %4475 = vmatprep.mubr.bf16.mxu0 0
      %4476 = vmatmul.mubr.bf16.gmra.mxu0 %v4405
      %v4477 = vpop.f32.mrf.mxu0
      %v4478 = vadd.f32 0.0, %v4477
      %v4479 = vpop.f32.mrf.mxu0
      %v4480 = vpop.f32.mrf.mxu0
      %v4481 = vpop.f32.mrf.mxu0
      %4482 = vdwg.mxu0
      %v4483 = vpack.c.bf16 %v4449, %v4446
      %v4484 = vpack.c.bf16 %v4457, %v4454
      %v4485 = vpack.c.bf16 %v4465, %v4462
      %v4486 = vpack.c.bf16 %v4473, %v4470
      %v4487 = vpack.c.bf16 %v4478, %v4478
      %s4488 = scalar_lea.vmem %s2, 1792
      %v4489 = vld [vmem:[%s4488] sm:$0xf]
      %v4490 = vld [vmem:[%s4488 + $0x4] sm:$0xf]
      %v4491 = vld [vmem:[%s4488 + $0x8] sm:$0xf]
      %v4492 = vld [vmem:[%s4488 + $0xc] sm:$0xf]
      %v4493 = vld [vmem:[%s4488 + $0x10] sm:$0xf]
      %v4494 = vld [vmem:[%s4488 + $0x14] sm:$0xf]
      %v4495 = vld [vmem:[%s4488 + $0x18] sm:$0xf]
      %v4496 = vld [vmem:[%s4488 + $0x1c] sm:$0xf]
      %v4497 = vld [vmem:[%s4488 + $0x20] sm:$0xf]
      %v4498 = vld [vmem:[%s4488 + $0x24] sm:$0xf]
      %v4499 = vld [vmem:[%s4488 + $0x28] sm:$0xf]
      %v4500 = vld [vmem:[%s4488 + $0x2c] sm:$0xf]
      %v4501 = vld [vmem:[%s4488 + $0x30] sm:$0xf]
      %v4502 = vld [vmem:[%s4488 + $0x34] sm:$0xf]
      %v4503 = vld [vmem:[%s4488 + $0x38] sm:$0xf]
      %v4504 = vld [vmem:[%s4488 + $0x3c] sm:$0xf]
      %s4505 = scalar_lea.vmem %s2, 1856
      %v4506 = vld [vmem:[%s4505] sm:$0xf]
      %v4507 = vld [vmem:[%s4505 + $0x4] sm:$0xf]
      %v4508 = vld [vmem:[%s4505 + $0x8] sm:$0xf]
      %v4509 = vld [vmem:[%s4505 + $0xc] sm:$0xf]
      %v4510 = vld [vmem:[%s4505 + $0x10] sm:$0xf]
      %v4511 = vld [vmem:[%s4505 + $0x14] sm:$0xf]
      %v4512 = vld [vmem:[%s4505 + $0x18] sm:$0xf]
      %v4513 = vld [vmem:[%s4505 + $0x1c] sm:$0xf]
      %v4514 = vld [vmem:[%s4505 + $0x20] sm:$0xf]
      %v4515 = vld [vmem:[%s4505 + $0x24] sm:$0xf]
      %v4516 = vld [vmem:[%s4505 + $0x28] sm:$0xf]
      %v4517 = vld [vmem:[%s4505 + $0x2c] sm:$0xf]
      %v4518 = vld [vmem:[%s4505 + $0x30] sm:$0xf]
      %v4519 = vld [vmem:[%s4505 + $0x34] sm:$0xf]
      %v4520 = vld [vmem:[%s4505 + $0x38] sm:$0xf]
      %v4521 = vld [vmem:[%s4505 + $0x3c] sm:$0xf]
      %v4523 = vrot.slane %v4483, 4
      %v4541 = vunpack.c.l.b16 %v4506
      %v4542 = vunpack.c.l.b16 %v4507
      %v4543 = vunpack.c.l.b16 %v4508
      %v4544 = vunpack.c.l.b16 %v4509
      %v4545 = vunpack.c.l.b16 %v4510
      %v4546 = vunpack.c.l.b16 %v4511
      %v4547 = vunpack.c.l.b16 %v4512
      %v4548 = vunpack.c.l.b16 %v4513
      %v4549 = vunpack.c.l.b16 %v4514
      %v4550 = vunpack.c.l.b16 %v4515
      %v4551 = vunpack.c.l.b16 %v4516
      %v4552 = vunpack.c.l.b16 %v4517
      %v4553 = vunpack.c.l.b16 %v4518
      %v4554 = vunpack.c.l.b16 %v4519
      %v4555 = vunpack.c.l.b16 %v4520
      %v4556 = vunpack.c.l.b16 %v4521
      %v4557 = vpack.c.b16 %v4542, %v4541
      %v4558 = vpack.c.b16 %v4544, %v4543
      %v4559 = vpack.c.b16 %v4546, %v4545
      %v4560 = vpack.c.b16 %v4548, %v4547
      %v4561 = vpack.c.b16 %v4550, %v4549
      %v4562 = vpack.c.b16 %v4552, %v4551
      %v4563 = vpack.c.b16 %v4554, %v4553
      %v4564 = vpack.c.b16 %v4556, %v4555
      %4573 = vmatprep.subr.bf16.mxu0 0
      %4574 = vmatpush1.bf16.msra.mxu0 %v4564
      %4575 = vmatprep.subr.bf16.mxu0 0
      %4576 = vmatpush1.bf16.msra.mxu0 %v4563
      %4577 = vmatprep.subr.bf16.mxu0 0
      %4578 = vmatpush1.bf16.msra.mxu0 %v4562
      %4579 = vmatprep.subr.bf16.mxu0 0
      %4580 = vmatpush1.bf16.msra.mxu0 %v4561
      %4581 = vmatprep.subr.bf16.mxu0 0
      %4582 = vmatpush1.bf16.msra.mxu0 %v4560
      %4583 = vmatprep.subr.bf16.mxu0 0
      %4584 = vmatpush1.bf16.msra.mxu0 %v4559
      %4585 = vmatprep.subr.bf16.mxu0 0
      %4586 = vmatpush1.bf16.msra.mxu0 %v4558
      %4587 = vmatprep.subr.bf16.mxu0 0
      %4588 = vmatpush1.bf16.msra.mxu0 %v4557
      %4589 = vmatprep.subr.bf16.mxu0 0
      %4590 = vmatpush2.bf16.msra.mxu0 0
      %4591 = vmatprep.subr.bf16.mxu0 0
      %4592 = vmatpush2.bf16.msra.mxu0 0
      %4593 = vmatprep.subr.bf16.mxu0 0
      %4594 = vmatpush2.bf16.msra.mxu0 0
      %4595 = vmatprep.subr.bf16.mxu0 0
      %4596 = vmatpush2.bf16.msra.mxu0 0
      %4597 = vmatprep.subr.bf16.mxu0 0
      %4598 = vmatpush2.bf16.msra.mxu0 0
      %4599 = vmatprep.subr.bf16.mxu0 0
      %4600 = vmatpush2.bf16.msra.mxu0 0
      %4601 = vmatprep.subr.bf16.mxu0 0
      %4602 = vmatpush2.bf16.msra.mxu0 0
      %4603 = vmatprep.subr.bf16.mxu0 0
      %4604 = vmatpush2.bf16.msra.mxu0 0
      %4605 = vmatprep.mubr.bf16.mxu0 0
      %4606 = vmatmul.mubr.bf16.gmra.mxu0 %v4523
      %v4607 = vpop.f32.mrf.mxu0
      %v4608 = vadd.f32 0.0, %v4607
      %v4609 = vpop.f32.mrf.mxu0
      %v4610 = vpop.f32.mrf.mxu0
      %v4611 = vpop.f32.mrf.mxu0
      %4612 = vdwg.mxu0
      %v4629 = vunpack.c.l.b16 %v4489
      %v4630 = vunpack.c.l.b16 %v4490
      %v4631 = vunpack.c.l.b16 %v4491
      %v4632 = vunpack.c.l.b16 %v4492
      %v4633 = vunpack.c.l.b16 %v4493
      %v4634 = vunpack.c.l.b16 %v4494
      %v4635 = vunpack.c.l.b16 %v4495
      %v4636 = vunpack.c.l.b16 %v4496
      %v4637 = vunpack.c.l.b16 %v4497
      %v4638 = vunpack.c.l.b16 %v4498
      %v4639 = vunpack.c.l.b16 %v4499
      %v4640 = vunpack.c.l.b16 %v4500
      %v4641 = vunpack.c.l.b16 %v4501
      %v4642 = vunpack.c.l.b16 %v4502
      %v4643 = vunpack.c.l.b16 %v4503
      %v4644 = vunpack.c.l.b16 %v4504
      %v4645 = vpack.c.b16 %v4630, %v4629
      %v4646 = vpack.c.b16 %v4632, %v4631
      %v4647 = vpack.c.b16 %v4634, %v4633
      %v4648 = vpack.c.b16 %v4636, %v4635
      %v4649 = vpack.c.b16 %v4638, %v4637
      %v4650 = vpack.c.b16 %v4640, %v4639
      %v4651 = vpack.c.b16 %v4642, %v4641
      %v4652 = vpack.c.b16 %v4644, %v4643
      %4661 = vmatprep.subr.bf16.mxu0 0
      %4662 = vmatpush1.bf16.msra.mxu0 %v4652
      %4663 = vmatprep.subr.bf16.mxu0 0
      %4664 = vmatpush1.bf16.msra.mxu0 %v4651
      %4665 = vmatprep.subr.bf16.mxu0 0
      %4666 = vmatpush1.bf16.msra.mxu0 %v4650
      %4667 = vmatprep.subr.bf16.mxu0 0
      %4668 = vmatpush1.bf16.msra.mxu0 %v4649
      %4669 = vmatprep.subr.bf16.mxu0 0
      %4670 = vmatpush1.bf16.msra.mxu0 %v4648
      %4671 = vmatprep.subr.bf16.mxu0 0
      %4672 = vmatpush1.bf16.msra.mxu0 %v4647
      %4673 = vmatprep.subr.bf16.mxu0 0
      %4674 = vmatpush1.bf16.msra.mxu0 %v4646
      %4675 = vmatprep.subr.bf16.mxu0 0
      %4676 = vmatpush1.bf16.msra.mxu0 %v4645
      %4677 = vmatprep.subr.bf16.mxu0 0
      %4678 = vmatpush2.bf16.msra.mxu0 0
      %4679 = vmatprep.subr.bf16.mxu0 0
      %4680 = vmatpush2.bf16.msra.mxu0 0
      %4681 = vmatprep.subr.bf16.mxu0 0
      %4682 = vmatpush2.bf16.msra.mxu0 0
      %4683 = vmatprep.subr.bf16.mxu0 0
      %4684 = vmatpush2.bf16.msra.mxu0 0
      %4685 = vmatprep.subr.bf16.mxu0 0
      %4686 = vmatpush2.bf16.msra.mxu0 0
      %4687 = vmatprep.subr.bf16.mxu0 0
      %4688 = vmatpush2.bf16.msra.mxu0 0
      %4689 = vmatprep.subr.bf16.mxu0 0
      %4690 = vmatpush2.bf16.msra.mxu0 0
      %4691 = vmatprep.subr.bf16.mxu0 0
      %4692 = vmatpush2.bf16.msra.mxu0 0
      %4693 = vmatprep.mubr.bf16.mxu0 0
      %4694 = vmatmul.mubr.bf16.gmra.mxu0 %v4483
      %v4695 = vpop.f32.mrf.mxu0
      %v4696 = vadd.f32 %v4608, %v4695
      %v4697 = vpop.f32.mrf.mxu0
      %v4698 = vpop.f32.mrf.mxu0
      %v4699 = vpop.f32.mrf.mxu0
      %4700 = vdwg.mxu0
      %s4701 = scalar_lea.vmem %s2, 1920
      %v4702 = vld [vmem:[%s4701] sm:$0xf]
      %v4703 = vld [vmem:[%s4701 + $0x4] sm:$0xf]
      %v4704 = vld [vmem:[%s4701 + $0x8] sm:$0xf]
      %v4705 = vld [vmem:[%s4701 + $0xc] sm:$0xf]
      %v4706 = vld [vmem:[%s4701 + $0x10] sm:$0xf]
      %v4707 = vld [vmem:[%s4701 + $0x14] sm:$0xf]
      %v4708 = vld [vmem:[%s4701 + $0x18] sm:$0xf]
      %v4709 = vld [vmem:[%s4701 + $0x1c] sm:$0xf]
      %v4710 = vld [vmem:[%s4701 + $0x20] sm:$0xf]
      %v4711 = vld [vmem:[%s4701 + $0x24] sm:$0xf]
      %v4712 = vld [vmem:[%s4701 + $0x28] sm:$0xf]
      %v4713 = vld [vmem:[%s4701 + $0x2c] sm:$0xf]
      %v4714 = vld [vmem:[%s4701 + $0x30] sm:$0xf]
      %v4715 = vld [vmem:[%s4701 + $0x34] sm:$0xf]
      %v4716 = vld [vmem:[%s4701 + $0x38] sm:$0xf]
      %v4717 = vld [vmem:[%s4701 + $0x3c] sm:$0xf]
      %v4734 = vunpack.c.l.b16 %v4702
      %v4735 = vunpack.c.l.b16 %v4703
      %v4736 = vunpack.c.l.b16 %v4704
      %v4737 = vunpack.c.l.b16 %v4705
      %v4738 = vunpack.c.l.b16 %v4706
      %v4739 = vunpack.c.l.b16 %v4707
      %v4740 = vunpack.c.l.b16 %v4708
      %v4741 = vunpack.c.l.b16 %v4709
      %v4742 = vunpack.c.l.b16 %v4710
      %v4743 = vunpack.c.l.b16 %v4711
      %v4744 = vunpack.c.l.b16 %v4712
      %v4745 = vunpack.c.l.b16 %v4713
      %v4746 = vunpack.c.l.b16 %v4714
      %v4747 = vunpack.c.l.b16 %v4715
      %v4748 = vunpack.c.l.b16 %v4716
      %v4749 = vunpack.c.l.b16 %v4717
      %v4750 = vpack.c.b16 %v4735, %v4734
      %v4751 = vpack.c.b16 %v4737, %v4736
      %v4752 = vpack.c.b16 %v4739, %v4738
      %v4753 = vpack.c.b16 %v4741, %v4740
      %v4754 = vpack.c.b16 %v4743, %v4742
      %v4755 = vpack.c.b16 %v4745, %v4744
      %v4756 = vpack.c.b16 %v4747, %v4746
      %v4757 = vpack.c.b16 %v4749, %v4748
      %4766 = vmatprep.subr.bf16.mxu0 0
      %4767 = vmatpush1.bf16.msra.mxu0 %v4757
      %4768 = vmatprep.subr.bf16.mxu0 0
      %4769 = vmatpush1.bf16.msra.mxu0 %v4756
      %4770 = vmatprep.subr.bf16.mxu0 0
      %4771 = vmatpush1.bf16.msra.mxu0 %v4755
      %4772 = vmatprep.subr.bf16.mxu0 0
      %4773 = vmatpush1.bf16.msra.mxu0 %v4754
      %4774 = vmatprep.subr.bf16.mxu0 0
      %4775 = vmatpush1.bf16.msra.mxu0 %v4753
      %4776 = vmatprep.subr.bf16.mxu0 0
      %4777 = vmatpush1.bf16.msra.mxu0 %v4752
      %4778 = vmatprep.subr.bf16.mxu0 0
      %4779 = vmatpush1.bf16.msra.mxu0 %v4751
      %4780 = vmatprep.subr.bf16.mxu0 0
      %4781 = vmatpush1.bf16.msra.mxu0 %v4750
      %4782 = vmatprep.subr.bf16.mxu0 0
      %4783 = vmatpush2.bf16.msra.mxu0 0
      %4784 = vmatprep.subr.bf16.mxu0 0
      %4785 = vmatpush2.bf16.msra.mxu0 0
      %4786 = vmatprep.subr.bf16.mxu0 0
      %4787 = vmatpush2.bf16.msra.mxu0 0
      %4788 = vmatprep.subr.bf16.mxu0 0
      %4789 = vmatpush2.bf16.msra.mxu0 0
      %4790 = vmatprep.subr.bf16.mxu0 0
      %4791 = vmatpush2.bf16.msra.mxu0 0
      %4792 = vmatprep.subr.bf16.mxu0 0
      %4793 = vmatpush2.bf16.msra.mxu0 0
      %4794 = vmatprep.subr.bf16.mxu0 0
      %4795 = vmatpush2.bf16.msra.mxu0 0
      %4796 = vmatprep.subr.bf16.mxu0 0
      %4797 = vmatpush2.bf16.msra.mxu0 0
      %4798 = vmatprep.mubr.bf16.mxu0 0
      %4799 = vmatmul.mubr.bf16.gmra.mxu0 %v4484
      %v4800 = vpop.f32.mrf.mxu0
      %v4801 = vadd.f32 0.0, %v4800
      %v4802 = vpop.f32.mrf.mxu0
      %v4803 = vpop.f32.mrf.mxu0
      %v4804 = vpop.f32.mrf.mxu0
      %4805 = vdwg.mxu0
      %v4806 = vadd.f32 %v4696, %v4801
      %s4807 = scalar_lea.vmem %s2, 1984
      %v4808 = vld [vmem:[%s4807] sm:$0xf]
      %v4809 = vld [vmem:[%s4807 + $0x4] sm:$0xf]
      %v4810 = vld [vmem:[%s4807 + $0x8] sm:$0xf]
      %v4811 = vld [vmem:[%s4807 + $0xc] sm:$0xf]
      %v4812 = vld [vmem:[%s4807 + $0x10] sm:$0xf]
      %v4813 = vld [vmem:[%s4807 + $0x14] sm:$0xf]
      %v4814 = vld [vmem:[%s4807 + $0x18] sm:$0xf]
      %v4815 = vld [vmem:[%s4807 + $0x1c] sm:$0xf]
      %v4816 = vld [vmem:[%s4807 + $0x20] sm:$0xf]
      %v4817 = vld [vmem:[%s4807 + $0x24] sm:$0xf]
      %v4818 = vld [vmem:[%s4807 + $0x28] sm:$0xf]
      %v4819 = vld [vmem:[%s4807 + $0x2c] sm:$0xf]
      %v4820 = vld [vmem:[%s4807 + $0x30] sm:$0xf]
      %v4821 = vld [vmem:[%s4807 + $0x34] sm:$0xf]
      %v4822 = vld [vmem:[%s4807 + $0x38] sm:$0xf]
      %v4823 = vld [vmem:[%s4807 + $0x3c] sm:$0xf]
      %v4825 = vrot.slane %v4484, 4
      %v4843 = vunpack.c.l.b16 %v4808
      %v4844 = vunpack.c.l.b16 %v4809
      %v4845 = vunpack.c.l.b16 %v4810
      %v4846 = vunpack.c.l.b16 %v4811
      %v4847 = vunpack.c.l.b16 %v4812
      %v4848 = vunpack.c.l.b16 %v4813
      %v4849 = vunpack.c.l.b16 %v4814
      %v4850 = vunpack.c.l.b16 %v4815
      %v4851 = vunpack.c.l.b16 %v4816
      %v4852 = vunpack.c.l.b16 %v4817
      %v4853 = vunpack.c.l.b16 %v4818
      %v4854 = vunpack.c.l.b16 %v4819
      %v4855 = vunpack.c.l.b16 %v4820
      %v4856 = vunpack.c.l.b16 %v4821
      %v4857 = vunpack.c.l.b16 %v4822
      %v4858 = vunpack.c.l.b16 %v4823
      %v4859 = vpack.c.b16 %v4844, %v4843
      %v4860 = vpack.c.b16 %v4846, %v4845
      %v4861 = vpack.c.b16 %v4848, %v4847
      %v4862 = vpack.c.b16 %v4850, %v4849
      %v4863 = vpack.c.b16 %v4852, %v4851
      %v4864 = vpack.c.b16 %v4854, %v4853
      %v4865 = vpack.c.b16 %v4856, %v4855
      %v4866 = vpack.c.b16 %v4858, %v4857
      %4875 = vmatprep.subr.bf16.mxu0 0
      %4876 = vmatpush1.bf16.msra.mxu0 %v4866
      %4877 = vmatprep.subr.bf16.mxu0 0
      %4878 = vmatpush1.bf16.msra.mxu0 %v4865
      %4879 = vmatprep.subr.bf16.mxu0 0
      %4880 = vmatpush1.bf16.msra.mxu0 %v4864
      %4881 = vmatprep.subr.bf16.mxu0 0
      %4882 = vmatpush1.bf16.msra.mxu0 %v4863
      %4883 = vmatprep.subr.bf16.mxu0 0
      %4884 = vmatpush1.bf16.msra.mxu0 %v4862
      %4885 = vmatprep.subr.bf16.mxu0 0
      %4886 = vmatpush1.bf16.msra.mxu0 %v4861
      %4887 = vmatprep.subr.bf16.mxu0 0
      %4888 = vmatpush1.bf16.msra.mxu0 %v4860
      %4889 = vmatprep.subr.bf16.mxu0 0
      %4890 = vmatpush1.bf16.msra.mxu0 %v4859
      %4891 = vmatprep.subr.bf16.mxu0 0
      %4892 = vmatpush2.bf16.msra.mxu0 0
      %4893 = vmatprep.subr.bf16.mxu0 0
      %4894 = vmatpush2.bf16.msra.mxu0 0
      %4895 = vmatprep.subr.bf16.mxu0 0
      %4896 = vmatpush2.bf16.msra.mxu0 0
      %4897 = vmatprep.subr.bf16.mxu0 0
      %4898 = vmatpush2.bf16.msra.mxu0 0
      %4899 = vmatprep.subr.bf16.mxu0 0
      %4900 = vmatpush2.bf16.msra.mxu0 0
      %4901 = vmatprep.subr.bf16.mxu0 0
      %4902 = vmatpush2.bf16.msra.mxu0 0
      %4903 = vmatprep.subr.bf16.mxu0 0
      %4904 = vmatpush2.bf16.msra.mxu0 0
      %4905 = vmatprep.subr.bf16.mxu0 0
      %4906 = vmatpush2.bf16.msra.mxu0 0
      %4907 = vmatprep.mubr.bf16.mxu0 0
      %4908 = vmatmul.mubr.bf16.gmra.mxu0 %v4825
      %v4909 = vpop.f32.mrf.mxu0
      %v4910 = vadd.f32 0.0, %v4909
      %v4911 = vpop.f32.mrf.mxu0
      %v4912 = vpop.f32.mrf.mxu0
      %v4913 = vpop.f32.mrf.mxu0
      %4914 = vdwg.mxu0
      %v4915 = vadd.f32 %v4806, %v4910
      %s4916 = scalar_lea.vmem %s2, 2048
      %v4917 = vld [vmem:[%s4916] sm:$0xf]
      %v4918 = vld [vmem:[%s4916 + $0x4] sm:$0xf]
      %v4919 = vld [vmem:[%s4916 + $0x8] sm:$0xf]
      %v4920 = vld [vmem:[%s4916 + $0xc] sm:$0xf]
      %v4921 = vld [vmem:[%s4916 + $0x10] sm:$0xf]
      %v4922 = vld [vmem:[%s4916 + $0x14] sm:$0xf]
      %v4923 = vld [vmem:[%s4916 + $0x18] sm:$0xf]
      %v4924 = vld [vmem:[%s4916 + $0x1c] sm:$0xf]
      %v4925 = vld [vmem:[%s4916 + $0x20] sm:$0xf]
      %v4926 = vld [vmem:[%s4916 + $0x24] sm:$0xf]
      %v4927 = vld [vmem:[%s4916 + $0x28] sm:$0xf]
      %v4928 = vld [vmem:[%s4916 + $0x2c] sm:$0xf]
      %v4929 = vld [vmem:[%s4916 + $0x30] sm:$0xf]
      %v4930 = vld [vmem:[%s4916 + $0x34] sm:$0xf]
      %v4931 = vld [vmem:[%s4916 + $0x38] sm:$0xf]
      %v4932 = vld [vmem:[%s4916 + $0x3c] sm:$0xf]
      %v4949 = vunpack.c.l.b16 %v4917
      %v4950 = vunpack.c.l.b16 %v4918
      %v4951 = vunpack.c.l.b16 %v4919
      %v4952 = vunpack.c.l.b16 %v4920
      %v4953 = vunpack.c.l.b16 %v4921
      %v4954 = vunpack.c.l.b16 %v4922
      %v4955 = vunpack.c.l.b16 %v4923
      %v4956 = vunpack.c.l.b16 %v4924
      %v4957 = vunpack.c.l.b16 %v4925
      %v4958 = vunpack.c.l.b16 %v4926
      %v4959 = vunpack.c.l.b16 %v4927
      %v4960 = vunpack.c.l.b16 %v4928
      %v4961 = vunpack.c.l.b16 %v4929
      %v4962 = vunpack.c.l.b16 %v4930
      %v4963 = vunpack.c.l.b16 %v4931
      %v4964 = vunpack.c.l.b16 %v4932
      %v4965 = vpack.c.b16 %v4950, %v4949
      %v4966 = vpack.c.b16 %v4952, %v4951
      %v4967 = vpack.c.b16 %v4954, %v4953
      %v4968 = vpack.c.b16 %v4956, %v4955
      %v4969 = vpack.c.b16 %v4958, %v4957
      %v4970 = vpack.c.b16 %v4960, %v4959
      %v4971 = vpack.c.b16 %v4962, %v4961
      %v4972 = vpack.c.b16 %v4964, %v4963
      %4981 = vmatprep.subr.bf16.mxu0 0
      %4982 = vmatpush1.bf16.msra.mxu0 %v4972
      %4983 = vmatprep.subr.bf16.mxu0 0
      %4984 = vmatpush1.bf16.msra.mxu0 %v4971
      %4985 = vmatprep.subr.bf16.mxu0 0
      %4986 = vmatpush1.bf16.msra.mxu0 %v4970
      %4987 = vmatprep.subr.bf16.mxu0 0
      %4988 = vmatpush1.bf16.msra.mxu0 %v4969
      %4989 = vmatprep.subr.bf16.mxu0 0
      %4990 = vmatpush1.bf16.msra.mxu0 %v4968
      %4991 = vmatprep.subr.bf16.mxu0 0
      %4992 = vmatpush1.bf16.msra.mxu0 %v4967
      %4993 = vmatprep.subr.bf16.mxu0 0
      %4994 = vmatpush1.bf16.msra.mxu0 %v4966
      %4995 = vmatprep.subr.bf16.mxu0 0
      %4996 = vmatpush1.bf16.msra.mxu0 %v4965
      %4997 = vmatprep.subr.bf16.mxu0 0
      %4998 = vmatpush2.bf16.msra.mxu0 0
      %4999 = vmatprep.subr.bf16.mxu0 0
      %5000 = vmatpush2.bf16.msra.mxu0 0
      %5001 = vmatprep.subr.bf16.mxu0 0
      %5002 = vmatpush2.bf16.msra.mxu0 0
      %5003 = vmatprep.subr.bf16.mxu0 0
      %5004 = vmatpush2.bf16.msra.mxu0 0
      %5005 = vmatprep.subr.bf16.mxu0 0
      %5006 = vmatpush2.bf16.msra.mxu0 0
      %5007 = vmatprep.subr.bf16.mxu0 0
      %5008 = vmatpush2.bf16.msra.mxu0 0
      %5009 = vmatprep.subr.bf16.mxu0 0
      %5010 = vmatpush2.bf16.msra.mxu0 0
      %5011 = vmatprep.subr.bf16.mxu0 0
      %5012 = vmatpush2.bf16.msra.mxu0 0
      %5013 = vmatprep.mubr.bf16.mxu0 0
      %5014 = vmatmul.mubr.bf16.gmra.mxu0 %v4485
      %v5015 = vpop.f32.mrf.mxu0
      %v5016 = vadd.f32 0.0, %v5015
      %v5017 = vpop.f32.mrf.mxu0
      %v5018 = vpop.f32.mrf.mxu0
      %v5019 = vpop.f32.mrf.mxu0
      %5020 = vdwg.mxu0
      %v5021 = vadd.f32 %v4915, %v5016
      %s5022 = scalar_lea.vmem %s2, 2112
      %v5023 = vld [vmem:[%s5022] sm:$0xf]
      %v5024 = vld [vmem:[%s5022 + $0x4] sm:$0xf]
      %v5025 = vld [vmem:[%s5022 + $0x8] sm:$0xf]
      %v5026 = vld [vmem:[%s5022 + $0xc] sm:$0xf]
      %v5027 = vld [vmem:[%s5022 + $0x10] sm:$0xf]
      %v5028 = vld [vmem:[%s5022 + $0x14] sm:$0xf]
      %v5029 = vld [vmem:[%s5022 + $0x18] sm:$0xf]
      %v5030 = vld [vmem:[%s5022 + $0x1c] sm:$0xf]
      %v5031 = vld [vmem:[%s5022 + $0x20] sm:$0xf]
      %v5032 = vld [vmem:[%s5022 + $0x24] sm:$0xf]
      %v5033 = vld [vmem:[%s5022 + $0x28] sm:$0xf]
      %v5034 = vld [vmem:[%s5022 + $0x2c] sm:$0xf]
      %v5035 = vld [vmem:[%s5022 + $0x30] sm:$0xf]
      %v5036 = vld [vmem:[%s5022 + $0x34] sm:$0xf]
      %v5037 = vld [vmem:[%s5022 + $0x38] sm:$0xf]
      %v5038 = vld [vmem:[%s5022 + $0x3c] sm:$0xf]
      %v5040 = vrot.slane %v4485, 4
      %v5058 = vunpack.c.l.b16 %v5023
      %v5059 = vunpack.c.l.b16 %v5024
      %v5060 = vunpack.c.l.b16 %v5025
      %v5061 = vunpack.c.l.b16 %v5026
      %v5062 = vunpack.c.l.b16 %v5027
      %v5063 = vunpack.c.l.b16 %v5028
      %v5064 = vunpack.c.l.b16 %v5029
      %v5065 = vunpack.c.l.b16 %v5030
      %v5066 = vunpack.c.l.b16 %v5031
      %v5067 = vunpack.c.l.b16 %v5032
      %v5068 = vunpack.c.l.b16 %v5033
      %v5069 = vunpack.c.l.b16 %v5034
      %v5070 = vunpack.c.l.b16 %v5035
      %v5071 = vunpack.c.l.b16 %v5036
      %v5072 = vunpack.c.l.b16 %v5037
      %v5073 = vunpack.c.l.b16 %v5038
      %v5074 = vpack.c.b16 %v5059, %v5058
      %v5075 = vpack.c.b16 %v5061, %v5060
      %v5076 = vpack.c.b16 %v5063, %v5062
      %v5077 = vpack.c.b16 %v5065, %v5064
      %v5078 = vpack.c.b16 %v5067, %v5066
      %v5079 = vpack.c.b16 %v5069, %v5068
      %v5080 = vpack.c.b16 %v5071, %v5070
      %v5081 = vpack.c.b16 %v5073, %v5072
      %5090 = vmatprep.subr.bf16.mxu0 0
      %5091 = vmatpush1.bf16.msra.mxu0 %v5081
      %5092 = vmatprep.subr.bf16.mxu0 0
      %5093 = vmatpush1.bf16.msra.mxu0 %v5080
      %5094 = vmatprep.subr.bf16.mxu0 0
      %5095 = vmatpush1.bf16.msra.mxu0 %v5079
      %5096 = vmatprep.subr.bf16.mxu0 0
      %5097 = vmatpush1.bf16.msra.mxu0 %v5078
      %5098 = vmatprep.subr.bf16.mxu0 0
      %5099 = vmatpush1.bf16.msra.mxu0 %v5077
      %5100 = vmatprep.subr.bf16.mxu0 0
      %5101 = vmatpush1.bf16.msra.mxu0 %v5076
      %5102 = vmatprep.subr.bf16.mxu0 0
      %5103 = vmatpush1.bf16.msra.mxu0 %v5075
      %5104 = vmatprep.subr.bf16.mxu0 0
      %5105 = vmatpush1.bf16.msra.mxu0 %v5074
      %5106 = vmatprep.subr.bf16.mxu0 0
      %5107 = vmatpush2.bf16.msra.mxu0 0
      %5108 = vmatprep.subr.bf16.mxu0 0
      %5109 = vmatpush2.bf16.msra.mxu0 0
      %5110 = vmatprep.subr.bf16.mxu0 0
      %5111 = vmatpush2.bf16.msra.mxu0 0
      %5112 = vmatprep.subr.bf16.mxu0 0
      %5113 = vmatpush2.bf16.msra.mxu0 0
      %5114 = vmatprep.subr.bf16.mxu0 0
      %5115 = vmatpush2.bf16.msra.mxu0 0
      %5116 = vmatprep.subr.bf16.mxu0 0
      %5117 = vmatpush2.bf16.msra.mxu0 0
      %5118 = vmatprep.subr.bf16.mxu0 0
      %5119 = vmatpush2.bf16.msra.mxu0 0
      %5120 = vmatprep.subr.bf16.mxu0 0
      %5121 = vmatpush2.bf16.msra.mxu0 0
      %5122 = vmatprep.mubr.bf16.mxu0 0
      %5123 = vmatmul.mubr.bf16.gmra.mxu0 %v5040
      %v5124 = vpop.f32.mrf.mxu0
      %v5125 = vadd.f32 0.0, %v5124
      %v5126 = vpop.f32.mrf.mxu0
      %v5127 = vpop.f32.mrf.mxu0
      %v5128 = vpop.f32.mrf.mxu0
      %5129 = vdwg.mxu0
      %v5130 = vadd.f32 %v5021, %v5125
      %s5131 = scalar_lea.vmem %s2, 2176
      %v5132 = vld [vmem:[%s5131] sm:$0xf]
      %v5133 = vld [vmem:[%s5131 + $0x4] sm:$0xf]
      %v5134 = vld [vmem:[%s5131 + $0x8] sm:$0xf]
      %v5135 = vld [vmem:[%s5131 + $0xc] sm:$0xf]
      %v5136 = vld [vmem:[%s5131 + $0x10] sm:$0xf]
      %v5137 = vld [vmem:[%s5131 + $0x14] sm:$0xf]
      %v5138 = vld [vmem:[%s5131 + $0x18] sm:$0xf]
      %v5139 = vld [vmem:[%s5131 + $0x1c] sm:$0xf]
      %v5140 = vld [vmem:[%s5131 + $0x20] sm:$0xf]
      %v5141 = vld [vmem:[%s5131 + $0x24] sm:$0xf]
      %v5142 = vld [vmem:[%s5131 + $0x28] sm:$0xf]
      %v5143 = vld [vmem:[%s5131 + $0x2c] sm:$0xf]
      %v5144 = vld [vmem:[%s5131 + $0x30] sm:$0xf]
      %v5145 = vld [vmem:[%s5131 + $0x34] sm:$0xf]
      %v5146 = vld [vmem:[%s5131 + $0x38] sm:$0xf]
      %v5147 = vld [vmem:[%s5131 + $0x3c] sm:$0xf]
      %v5164 = vunpack.c.l.b16 %v5132
      %v5165 = vunpack.c.l.b16 %v5133
      %v5166 = vunpack.c.l.b16 %v5134
      %v5167 = vunpack.c.l.b16 %v5135
      %v5168 = vunpack.c.l.b16 %v5136
      %v5169 = vunpack.c.l.b16 %v5137
      %v5170 = vunpack.c.l.b16 %v5138
      %v5171 = vunpack.c.l.b16 %v5139
      %v5172 = vunpack.c.l.b16 %v5140
      %v5173 = vunpack.c.l.b16 %v5141
      %v5174 = vunpack.c.l.b16 %v5142
      %v5175 = vunpack.c.l.b16 %v5143
      %v5176 = vunpack.c.l.b16 %v5144
      %v5177 = vunpack.c.l.b16 %v5145
      %v5178 = vunpack.c.l.b16 %v5146
      %v5179 = vunpack.c.l.b16 %v5147
      %v5180 = vpack.c.b16 %v5165, %v5164
      %v5181 = vpack.c.b16 %v5167, %v5166
      %v5182 = vpack.c.b16 %v5169, %v5168
      %v5183 = vpack.c.b16 %v5171, %v5170
      %v5184 = vpack.c.b16 %v5173, %v5172
      %v5185 = vpack.c.b16 %v5175, %v5174
      %v5186 = vpack.c.b16 %v5177, %v5176
      %v5187 = vpack.c.b16 %v5179, %v5178
      %5196 = vmatprep.subr.bf16.mxu0 0
      %5197 = vmatpush1.bf16.msra.mxu0 %v5187
      %5198 = vmatprep.subr.bf16.mxu0 0
      %5199 = vmatpush1.bf16.msra.mxu0 %v5186
      %5200 = vmatprep.subr.bf16.mxu0 0
      %5201 = vmatpush1.bf16.msra.mxu0 %v5185
      %5202 = vmatprep.subr.bf16.mxu0 0
      %5203 = vmatpush1.bf16.msra.mxu0 %v5184
      %5204 = vmatprep.subr.bf16.mxu0 0
      %5205 = vmatpush1.bf16.msra.mxu0 %v5183
      %5206 = vmatprep.subr.bf16.mxu0 0
      %5207 = vmatpush1.bf16.msra.mxu0 %v5182
      %5208 = vmatprep.subr.bf16.mxu0 0
      %5209 = vmatpush1.bf16.msra.mxu0 %v5181
      %5210 = vmatprep.subr.bf16.mxu0 0
      %5211 = vmatpush1.bf16.msra.mxu0 %v5180
      %5212 = vmatprep.subr.bf16.mxu0 0
      %5213 = vmatpush2.bf16.msra.mxu0 0
      %5214 = vmatprep.subr.bf16.mxu0 0
      %5215 = vmatpush2.bf16.msra.mxu0 0
      %5216 = vmatprep.subr.bf16.mxu0 0
      %5217 = vmatpush2.bf16.msra.mxu0 0
      %5218 = vmatprep.subr.bf16.mxu0 0
      %5219 = vmatpush2.bf16.msra.mxu0 0
      %5220 = vmatprep.subr.bf16.mxu0 0
      %5221 = vmatpush2.bf16.msra.mxu0 0
      %5222 = vmatprep.subr.bf16.mxu0 0
      %5223 = vmatpush2.bf16.msra.mxu0 0
      %5224 = vmatprep.subr.bf16.mxu0 0
      %5225 = vmatpush2.bf16.msra.mxu0 0
      %5226 = vmatprep.subr.bf16.mxu0 0
      %5227 = vmatpush2.bf16.msra.mxu0 0
      %5228 = vmatprep.mubr.bf16.mxu0 0
      %5229 = vmatmul.mubr.bf16.gmra.mxu0 %v4486
      %v5230 = vpop.f32.mrf.mxu0
      %v5231 = vadd.f32 0.0, %v5230
      %v5232 = vpop.f32.mrf.mxu0
      %v5233 = vpop.f32.mrf.mxu0
      %v5234 = vpop.f32.mrf.mxu0
      %5235 = vdwg.mxu0
      %v5236 = vadd.f32 %v5130, %v5231
      %s5237 = scalar_lea.vmem %s2, 2240
      %v5238 = vld [vmem:[%s5237] sm:$0xf]
      %v5239 = vld [vmem:[%s5237 + $0x4] sm:$0xf]
      %v5240 = vld [vmem:[%s5237 + $0x8] sm:$0xf]
      %v5241 = vld [vmem:[%s5237 + $0xc] sm:$0xf]
      %v5242 = vld [vmem:[%s5237 + $0x10] sm:$0xf]
      %v5243 = vld [vmem:[%s5237 + $0x14] sm:$0xf]
      %v5244 = vld [vmem:[%s5237 + $0x18] sm:$0xf]
      %v5245 = vld [vmem:[%s5237 + $0x1c] sm:$0xf]
      %v5246 = vld [vmem:[%s5237 + $0x20] sm:$0xf]
      %v5247 = vld [vmem:[%s5237 + $0x24] sm:$0xf]
      %v5248 = vld [vmem:[%s5237 + $0x28] sm:$0xf]
      %v5249 = vld [vmem:[%s5237 + $0x2c] sm:$0xf]
      %v5250 = vld [vmem:[%s5237 + $0x30] sm:$0xf]
      %v5251 = vld [vmem:[%s5237 + $0x34] sm:$0xf]
      %v5252 = vld [vmem:[%s5237 + $0x38] sm:$0xf]
      %v5253 = vld [vmem:[%s5237 + $0x3c] sm:$0xf]
      %v5255 = vrot.slane %v4486, 4
      %v5273 = vunpack.c.l.b16 %v5238
      %v5274 = vunpack.c.l.b16 %v5239
      %v5275 = vunpack.c.l.b16 %v5240
      %v5276 = vunpack.c.l.b16 %v5241
      %v5277 = vunpack.c.l.b16 %v5242
      %v5278 = vunpack.c.l.b16 %v5243
      %v5279 = vunpack.c.l.b16 %v5244
      %v5280 = vunpack.c.l.b16 %v5245
      %v5281 = vunpack.c.l.b16 %v5246
      %v5282 = vunpack.c.l.b16 %v5247
      %v5283 = vunpack.c.l.b16 %v5248
      %v5284 = vunpack.c.l.b16 %v5249
      %v5285 = vunpack.c.l.b16 %v5250
      %v5286 = vunpack.c.l.b16 %v5251
      %v5287 = vunpack.c.l.b16 %v5252
      %v5288 = vunpack.c.l.b16 %v5253
      %v5289 = vpack.c.b16 %v5274, %v5273
      %v5290 = vpack.c.b16 %v5276, %v5275
      %v5291 = vpack.c.b16 %v5278, %v5277
      %v5292 = vpack.c.b16 %v5280, %v5279
      %v5293 = vpack.c.b16 %v5282, %v5281
      %v5294 = vpack.c.b16 %v5284, %v5283
      %v5295 = vpack.c.b16 %v5286, %v5285
      %v5296 = vpack.c.b16 %v5288, %v5287
      %5305 = vmatprep.subr.bf16.mxu0 0
      %5306 = vmatpush1.bf16.msra.mxu0 %v5296
      %5307 = vmatprep.subr.bf16.mxu0 0
      %5308 = vmatpush1.bf16.msra.mxu0 %v5295
      %5309 = vmatprep.subr.bf16.mxu0 0
      %5310 = vmatpush1.bf16.msra.mxu0 %v5294
      %5311 = vmatprep.subr.bf16.mxu0 0
      %5312 = vmatpush1.bf16.msra.mxu0 %v5293
      %5313 = vmatprep.subr.bf16.mxu0 0
      %5314 = vmatpush1.bf16.msra.mxu0 %v5292
      %5315 = vmatprep.subr.bf16.mxu0 0
      %5316 = vmatpush1.bf16.msra.mxu0 %v5291
      %5317 = vmatprep.subr.bf16.mxu0 0
      %5318 = vmatpush1.bf16.msra.mxu0 %v5290
      %5319 = vmatprep.subr.bf16.mxu0 0
      %5320 = vmatpush1.bf16.msra.mxu0 %v5289
      %5321 = vmatprep.subr.bf16.mxu0 0
      %5322 = vmatpush2.bf16.msra.mxu0 0
      %5323 = vmatprep.subr.bf16.mxu0 0
      %5324 = vmatpush2.bf16.msra.mxu0 0
      %5325 = vmatprep.subr.bf16.mxu0 0
      %5326 = vmatpush2.bf16.msra.mxu0 0
      %5327 = vmatprep.subr.bf16.mxu0 0
      %5328 = vmatpush2.bf16.msra.mxu0 0
      %5329 = vmatprep.subr.bf16.mxu0 0
      %5330 = vmatpush2.bf16.msra.mxu0 0
      %5331 = vmatprep.subr.bf16.mxu0 0
      %5332 = vmatpush2.bf16.msra.mxu0 0
      %5333 = vmatprep.subr.bf16.mxu0 0
      %5334 = vmatpush2.bf16.msra.mxu0 0
      %5335 = vmatprep.subr.bf16.mxu0 0
      %5336 = vmatpush2.bf16.msra.mxu0 0
      %5337 = vmatprep.mubr.bf16.mxu0 0
      %5338 = vmatmul.mubr.bf16.gmra.mxu0 %v5255
      %v5339 = vpop.f32.mrf.mxu0
      %v5340 = vadd.f32 0.0, %v5339
      %v5341 = vpop.f32.mrf.mxu0
      %v5342 = vpop.f32.mrf.mxu0
      %v5343 = vpop.f32.mrf.mxu0
      %5344 = vdwg.mxu0
      %v5345 = vadd.f32 %v5236, %v5340
      %s5346 = scalar_lea.vmem %s2, 2304
      %v5347 = vld [vmem:[%s5346] sm:$0xf]
      %v5348 = vld [vmem:[%s5346 + $0x4] sm:$0xf]
      %v5349 = vld [vmem:[%s5346 + $0x8] sm:$0xf]
      %v5350 = vld [vmem:[%s5346 + $0xc] sm:$0xf]
      %v5351 = vld [vmem:[%s5346 + $0x10] sm:$0xf]
      %v5352 = vld [vmem:[%s5346 + $0x14] sm:$0xf]
      %v5353 = vld [vmem:[%s5346 + $0x18] sm:$0xf]
      %v5354 = vld [vmem:[%s5346 + $0x1c] sm:$0xf]
      %v5355 = vld [vmem:[%s5346 + $0x20] sm:$0xf]
      %v5356 = vld [vmem:[%s5346 + $0x24] sm:$0xf]
      %v5357 = vld [vmem:[%s5346 + $0x28] sm:$0xf]
      %v5358 = vld [vmem:[%s5346 + $0x2c] sm:$0xf]
      %v5359 = vld [vmem:[%s5346 + $0x30] sm:$0xf]
      %v5360 = vld [vmem:[%s5346 + $0x34] sm:$0xf]
      %v5361 = vld [vmem:[%s5346 + $0x38] sm:$0xf]
      %v5362 = vld [vmem:[%s5346 + $0x3c] sm:$0xf]
      %v5379 = vunpack.c.l.b16 %v5347
      %v5380 = vunpack.c.l.b16 %v5348
      %v5381 = vunpack.c.l.b16 %v5349
      %v5382 = vunpack.c.l.b16 %v5350
      %v5383 = vunpack.c.l.b16 %v5351
      %v5384 = vunpack.c.l.b16 %v5352
      %v5385 = vunpack.c.l.b16 %v5353
      %v5386 = vunpack.c.l.b16 %v5354
      %v5387 = vunpack.c.l.b16 %v5355
      %v5388 = vunpack.c.l.b16 %v5356
      %v5389 = vunpack.c.l.b16 %v5357
      %v5390 = vunpack.c.l.b16 %v5358
      %v5391 = vunpack.c.l.b16 %v5359
      %v5392 = vunpack.c.l.b16 %v5360
      %v5393 = vunpack.c.l.b16 %v5361
      %v5394 = vunpack.c.l.b16 %v5362
      %v5395 = vpack.c.b16 %v5380, %v5379
      %v5396 = vpack.c.b16 %v5382, %v5381
      %v5397 = vpack.c.b16 %v5384, %v5383
      %v5398 = vpack.c.b16 %v5386, %v5385
      %v5399 = vpack.c.b16 %v5388, %v5387
      %v5400 = vpack.c.b16 %v5390, %v5389
      %v5401 = vpack.c.b16 %v5392, %v5391
      %v5402 = vpack.c.b16 %v5394, %v5393
      %5411 = vmatprep.subr.bf16.mxu0 0
      %5412 = vmatpush1.bf16.msra.mxu0 %v5402
      %5413 = vmatprep.subr.bf16.mxu0 0
      %5414 = vmatpush1.bf16.msra.mxu0 %v5401
      %5415 = vmatprep.subr.bf16.mxu0 0
      %5416 = vmatpush1.bf16.msra.mxu0 %v5400
      %5417 = vmatprep.subr.bf16.mxu0 0
      %5418 = vmatpush1.bf16.msra.mxu0 %v5399
      %5419 = vmatprep.subr.bf16.mxu0 0
      %5420 = vmatpush1.bf16.msra.mxu0 %v5398
      %5421 = vmatprep.subr.bf16.mxu0 0
      %5422 = vmatpush1.bf16.msra.mxu0 %v5397
      %5423 = vmatprep.subr.bf16.mxu0 0
      %5424 = vmatpush1.bf16.msra.mxu0 %v5396
      %5425 = vmatprep.subr.bf16.mxu0 0
      %5426 = vmatpush1.bf16.msra.mxu0 %v5395
      %5427 = vmatprep.subr.bf16.mxu0 0
      %5428 = vmatpush2.bf16.msra.mxu0 0
      %5429 = vmatprep.subr.bf16.mxu0 0
      %5430 = vmatpush2.bf16.msra.mxu0 0
      %5431 = vmatprep.subr.bf16.mxu0 0
      %5432 = vmatpush2.bf16.msra.mxu0 0
      %5433 = vmatprep.subr.bf16.mxu0 0
      %5434 = vmatpush2.bf16.msra.mxu0 0
      %5435 = vmatprep.subr.bf16.mxu0 0
      %5436 = vmatpush2.bf16.msra.mxu0 0
      %5437 = vmatprep.subr.bf16.mxu0 0
      %5438 = vmatpush2.bf16.msra.mxu0 0
      %5439 = vmatprep.subr.bf16.mxu0 0
      %5440 = vmatpush2.bf16.msra.mxu0 0
      %5441 = vmatprep.subr.bf16.mxu0 0
      %5442 = vmatpush2.bf16.msra.mxu0 0
      %5443 = vmatprep.mubr.bf16.mxu0 0
      %5444 = vmatmul.mubr.bf16.gmra.mxu0 %v4487
      %v5445 = vpop.f32.mrf.mxu0
      %v5446 = vadd.f32 0.0, %v5445
      %v5447 = vpop.f32.mrf.mxu0
      %v5448 = vpop.f32.mrf.mxu0
      %v5449 = vpop.f32.mrf.mxu0
      %5450 = vdwg.mxu0
      %v5451 = vadd.f32 %v5345, %v5446
      %v5452 = vld [vmem:[%s3 + $0x5] sm:$0x1]
      %v5453 = vlaneseq
      %v5454 = vshrl.u32 %v5453, 7
      %v5455 = vsub.s32 0, %v5454
      %v5456 = vrot.slane %v5452, %v5455
      %v5457 = vadd.f32 %v5451, %v5456
      %v5458 = vadd.f32 %v5457, %v3258
      %v5459 = vmax.f32 %v5458, 0.0
      %v5460 = vsel %vm4407, %v5459, 0.0
      %v5461 = vrot.slane %v5460, 4
      %v5462 = vadd.f32 %v5460, %v5461
      %v5463 = vrot.slane %v5462, 2
      %v5464 = vadd.f32 %v5462, %v5463
      %v5465 = vrot.slane %v5464, 1
      %v5466 = vadd.f32 %v5464, %v5465
      %v5467 = vmul.f32 %v5466, 0.25
      %v5468 = vld [vmem:[%s9] sm:$0xff]
      %v5469 = vld [vmem:[%s9 + $0x8] sm:$0xff]
      %v5470 = vld [vmem:[%s9 + $0x10] sm:$0xff]
      %v5471 = vld [vmem:[%s9 + $0x18] sm:$0xff]
      %v5472 = vld [vmem:[%s9 + $0x20] sm:$0xff]
      %v5473 = vld [vmem:[%s9 + $0x28] sm:$0xff]
      %v5474 = vld [vmem:[%s9 + $0x30] sm:$0xff]
      %v5475 = vld [vmem:[%s9 + $0x38] sm:$0xff]
      %v5476 = vld [vmem:[%s9 + $0x40] sm:$0xff]
      %v5477 = vld [vmem:[%s9 + $0x48] sm:$0xff]
      %v5478 = vld [vmem:[%s9 + $0x50] sm:$0xff]
      %v5479 = vld [vmem:[%s9 + $0x58] sm:$0xff]
      %v5480 = vld [vmem:[%s9 + $0x60] sm:$0xff]
      %v5481 = vld [vmem:[%s9 + $0x68] sm:$0xff]
      %v5482 = vld [vmem:[%s9 + $0x70] sm:$0xff]
      %v5483 = vld [vmem:[%s9 + $0x78] sm:$0xff]
      %v5484 = vld [vmem:[%s3 + $0x6] sm:$0x1]
      %5485 = vmatprep.subr.mxu0 0.0
      %5486 = vmatpush1.msra.mxu0 %v5483
      %5487 = vmatprep.subr.mxu0 0.0
      %5488 = vmatpush1.msra.mxu0 %v5482
      %5489 = vmatprep.subr.mxu0 0.0
      %5490 = vmatpush1.msra.mxu0 %v5481
      %5491 = vmatprep.subr.mxu0 0.0
      %5492 = vmatpush1.msra.mxu0 %v5480
      %5493 = vmatprep.subr.mxu0 0.0
      %5494 = vmatpush1.msra.mxu0 %v5479
      %5495 = vmatprep.subr.mxu0 0.0
      %5496 = vmatpush1.msra.mxu0 %v5478
      %5497 = vmatprep.subr.mxu0 0.0
      %5498 = vmatpush1.msra.mxu0 %v5477
      %5499 = vmatprep.subr.mxu0 0.0
      %5500 = vmatpush1.msra.mxu0 %v5476
      %5501 = vmatprep.subr.mxu0 0.0
      %5502 = vmatpush1.msra.mxu0 %v5475
      %5503 = vmatprep.subr.mxu0 0.0
      %5504 = vmatpush1.msra.mxu0 %v5474
      %5505 = vmatprep.subr.mxu0 0.0
      %5506 = vmatpush1.msra.mxu0 %v5473
      %5507 = vmatprep.subr.mxu0 0.0
      %5508 = vmatpush1.msra.mxu0 %v5472
      %5509 = vmatprep.subr.mxu0 0.0
      %5510 = vmatpush1.msra.mxu0 %v5471
      %5511 = vmatprep.subr.mxu0 0.0
      %5512 = vmatpush1.msra.mxu0 %v5470
      %5513 = vmatprep.subr.mxu0 0.0
      %5514 = vmatpush1.msra.mxu0 %v5469
      %5515 = vmatprep.subr.mxu0 0.0
      %5516 = vmatpush1.msra.mxu0 %v5468
      %5517 = vmatprep.subr.mxu0 0.0
      %5518 = vmatpush2.msra.mxu0 0.0
      %5519 = vmatprep.subr.mxu0 0.0
      %5520 = vmatpush2.msra.mxu0 0.0
      %5521 = vmatprep.subr.mxu0 0.0
      %5522 = vmatpush2.msra.mxu0 0.0
      %5523 = vmatprep.subr.mxu0 0.0
      %5524 = vmatpush2.msra.mxu0 0.0
      %5525 = vmatprep.subr.mxu0 0.0
      %5526 = vmatpush2.msra.mxu0 0.0
      %5527 = vmatprep.subr.mxu0 0.0
      %5528 = vmatpush2.msra.mxu0 0.0
      %5529 = vmatprep.subr.mxu0 0.0
      %5530 = vmatpush2.msra.mxu0 0.0
      %5531 = vmatprep.subr.mxu0 0.0
      %5532 = vmatpush2.msra.mxu0 0.0
      %5533 = vmatprep.subr.mxu0 0.0
      %5534 = vmatpush2.msra.mxu0 0.0
      %5535 = vmatprep.subr.mxu0 0.0
      %5536 = vmatpush2.msra.mxu0 0.0
      %5537 = vmatprep.subr.mxu0 0.0
      %5538 = vmatpush2.msra.mxu0 0.0
      %5539 = vmatprep.subr.mxu0 0.0
      %5540 = vmatpush2.msra.mxu0 0.0
      %5541 = vmatprep.subr.mxu0 0.0
      %5542 = vmatpush2.msra.mxu0 0.0
      %5543 = vmatprep.subr.mxu0 0.0
      %5544 = vmatpush2.msra.mxu0 0.0
      %5545 = vmatprep.subr.mxu0 0.0
      %5546 = vmatpush2.msra.mxu0 0.0
      %5547 = vmatprep.subr.mxu0 0.0
      %5548 = vmatpush2.msra.mxu0 0.0
      %5549 = vmatprep.mubr.f32.mxu0 0.0
      %5550 = vmatmul.mubr.f32.gmra.mxu0 %v5467
      %v5551 = vpop.f32.mrf.mxu0
      %v5552 = vadd.f32 %v5484, %v5551
      %v5553 = vpop.f32.mrf.mxu0
      %5554 = vdwg.mxu0
      %v5555 = vlaneseq
      %v5556 = vshrl.u32 %v5555, 7
      %v5557 = vsub.s32 0, %v5556
      %v5558 = vrot.slane %v5552, %v5557
      %5559 = vst [vmem:[%s357] sm:$0xff] %v5558
      %p5560 = scmp.lt.s32.totalorder %s21, 1
      %s5561 = scalar_select %p5560, %s21, 1
      %s5562 = smul.addr %s5561, 8
      %s5563 = scalar_lea.vmem %s10, %s5562
      // Predicated region
      $region61: #{classifier_forward.1} parent=59 // pred_check
        %p5564 = pneg %p254
      $region62: #{classifier_forward.1} parent=59 // pred_check_branch
        %5566 = sbr.rel (%p5564) target = $region64
      $region63: #{classifier_forward.1} parent=59 // pred_region
        _
      $region64: #{classifier_forward.1} parent=59 // pred_fallthru
        _
    $region60: #{classifier_forward.1} parent=5 // pred_fallthru
      _
    %p5567 = scmp.le.s32.totalorder 2, %s16
    // Predicated region
    $region65: #{classifier_forward.1} parent=5 // pred_check
      %p5568 = pneg %p5567
    $region66: #{classifier_forward.1} parent=5 // pred_check_branch
      %5570 = sbr.rel (%p5568) target = $region68
    $region67: #{classifier_forward.1} parent=5 // pred_region
      %s5571 = ssub.s32 %s16, 2
      // Predicated region
      $region69: #{classifier_forward.1} parent=67 // pred_check
        %p5572 = pneg %p260
      $region70: #{classifier_forward.1} parent=67 // pred_check_branch
        %5574 = sbr.rel (%p5572) target = $region72
      $region71: #{classifier_forward.1} parent=67 // pred_region
        %p5575 = scmp.lt.s32.totalorder %s22, 1
        %s5576 = scalar_select %p5575, %s22, 1
        %s5577 = smul.addr %s5576, 8
        %s5578 = scalar_lea.vmem %s10, %s5577
      $region72: #{classifier_forward.1} parent=67 // pred_fallthru
        _
    $region68: #{classifier_forward.1} parent=5 // pred_fallthru
      _
  $region6: #{classifier_forward.1} parent=0 // loop_footer
    %s20 = sadd.s32 1, %s16
  $region7: #{classifier_forward.1} parent=0 // loop_footer_branch
    %15 = sbr.rel target = $region3
  $region8: #{classifier_forward.1} parent=0 // loop_exit
    _

</llo_original>
